<compile_context>
chip_gen: v7x
topology: tpu7x:2x2x1
jax: 0.10.0
libtpu: 0.0.40
codegen_flags: <defaults>
</compile_context>

<pallas_src>
from functools import partial

import jax
import jax.numpy as jnp
from jax import lax
from jax.experimental import pallas as pl
from jax.experimental.pallas import tpu as pltpu
from jax.scipy.linalg import solve_triangular

_HI = lax.Precision.HIGHEST
_VMEM_LIMIT = 32 * 1024 * 1024  # explicit scoped-VMEM budget (covers v5e's 16 MiB default)


def _round_up(x, r):
    return -(-x // r) * r


def _sigmoid(z):
    # expit(z) == 0.5 * (tanh(z/2) + 1): transcendental rides the EUP slot.
    return 0.5 * (jnp.tanh(0.5 * z) + 1.0)


# ---------------------------------------------------------------------------
# Kernel 1: batch-masked candidate statistics, N-tiled + row-sharded.
#   h    = sigmoid(X_tile @ W_random + b_random)        (bf16 inputs, f32 acc)
#   num += ek^T h   with ek = mask * (Y - y_prev)        (m, c_pad) per shard
#   den += sum(mask * h * h, rows)                       (1, c_pad) per shard
# The (square / divide / mean / argmax) finalisation is a handful of tiny ops
# done in plain JAX on the (n_shards, m, c_pad) partials.
# ---------------------------------------------------------------------------
def _score_partial_kernel(x_ref, wr_ref, br_ref, y_ref, yp_ref, mask_ref,
                          num_ref, den_ref, num_acc, den_acc):
    t = pl.program_id(1)

    @pl.when(t == 0)
    def _():
        num_acc[...] = jnp.zeros_like(num_acc)
        den_acc[...] = jnp.zeros_like(den_acc)

    z = jnp.dot(x_ref[...], wr_ref[...], preferred_element_type=jnp.float32)
    h = _sigmoid(z + br_ref[...])                      # (tile_n, c_pad) f32
    mask = mask_ref[...]                               # (tile_n, 1)
    ek = mask * (y_ref[...] - yp_ref[...])             # (tile_n, m)
    num_acc[...] += lax.dot_general(ek, h, (((0,), (0,)), ((), ())),
                                    preferred_element_type=jnp.float32)
    den_acc[...] += jnp.sum((mask * h) * h, axis=0, keepdims=True)

    @pl.when(t == pl.num_programs(1) - 1)
    def _():
        num_ref[0] = num_acc[...]
        den_ref[0] = den_acc[...]


def candidate_partials(x_bf16, wr_bf16, br, y, y_prev, mask, *, tile_n, n_shards):
    n_pad, d = x_bf16.shape
    c_pad = wr_bf16.shape[1]
    m = y.shape[1]
    tiles_per_shard = n_pad // (tile_n * n_shards)
    row_map = lambda s, t: (s * tiles_per_shard + t, 0)
    full_map = lambda s, t: (0, 0)
    return pl.pallas_call(
        _score_partial_kernel,
        out_shape=(jax.ShapeDtypeStruct((n_shards, m, c_pad), jnp.float32),
                   jax.ShapeDtypeStruct((n_shards, 1, c_pad), jnp.float32)),
        grid_spec=pltpu.PrefetchScalarGridSpec(
            num_scalar_prefetch=0,
            grid=(n_shards, tiles_per_shard),
            in_specs=[pl.BlockSpec((tile_n, d), row_map),
                      pl.BlockSpec((d, c_pad), full_map),
                      pl.BlockSpec((1, c_pad), full_map),
                      pl.BlockSpec((tile_n, m), row_map),
                      pl.BlockSpec((tile_n, m), row_map),
                      pl.BlockSpec((tile_n, 1), row_map)],
            out_specs=(pl.BlockSpec((1, m, c_pad), lambda s, t: (s, 0, 0)),
                       pl.BlockSpec((1, 1, c_pad), lambda s, t: (s, 0, 0))),
            scratch_shapes=[pltpu.VMEM((m, c_pad), jnp.float32),
                            pltpu.VMEM((1, c_pad), jnp.float32)]),
        compiler_params=pltpu.CompilerParams(
            dimension_semantics=("parallel", "arbitrary"),
            vmem_limit_bytes=_VMEM_LIMIT),
    )(x_bf16, wr_bf16, br, y, y_prev, mask)


# ---------------------------------------------------------------------------
# Kernel 2: prediction y = H_live @ beta_live, N-tiled, lane-narrow (m) output.
# Only used for the first Ns+1 iterations; afterwards y is a rank-1 update.
# ---------------------------------------------------------------------------
def _predict_kernel(h_ref, beta_ref, y_ref):
    y_ref[...] = jnp.dot(h_ref[...], beta_ref[...],
                         preferred_element_type=jnp.float32)


def predict(h_live, beta_live, *, tile_n):
    n_pad, kc = h_live.shape
    m = beta_live.shape[1]
    return pl.pallas_call(
        _predict_kernel,
        out_shape=jax.ShapeDtypeStruct((n_pad, m), jnp.float32),
        grid_spec=pltpu.PrefetchScalarGridSpec(
            num_scalar_prefetch=0,
            grid=(n_pad // tile_n,),
            in_specs=[pl.BlockSpec((tile_n, kc), lambda i: (i, 0)),
                      pl.BlockSpec((kc, m), lambda i: (0, 0))],
            out_specs=pl.BlockSpec((tile_n, m), lambda i: (i, 0))),
        compiler_params=pltpu.CompilerParams(
            dimension_semantics=("parallel",),
            vmem_limit_bytes=_VMEM_LIMIT),
    )(h_live, beta_live)


# ---------------------------------------------------------------------------
# BSCNUTrain.forward — single jit, static shapes, lax.fori_loop over neurons.
# ---------------------------------------------------------------------------
@partial(jax.jit, static_argnames=("lambdas", "max_neurons", "reconfig_number",
                                   "init_batch_size", "batch_increment"))
def bscnu_train(X, Y, lambdas, max_neurons, reconfig_number,
                init_batch_size, batch_increment, key):
    N, d = X.shape
    m = Y.shape[1]
    Ns = 2
    n_lam = len(lambdas)
    c_real = n_lam * reconfig_number
    c_pad = _round_up(max(c_real, 128), 128)

    tile_n = min(512, _round_up(N, 8))
    n_shards = 2 if N >= 2 * tile_n else 1
    n_pad = _round_up(N, tile_n * n_shards)

    # N padded to a tile multiple; padded rows carry mask=0 / Y=0 / h_c=0 so the
    # padded reductions, QR and normal equations equal the unpadded ones.
    valid = (jnp.arange(n_pad) < N).astype(jnp.float32)[:, None]
    X_pad = jnp.zeros((n_pad, d), jnp.float32).at[:N].set(X.astype(jnp.float32))
    Y_pad = jnp.zeros((n_pad, m), jnp.float32).at[:N].set(Y.astype(jnp.float32))
    X_bf16 = X_pad.astype(jnp.bfloat16)

    # --- beta / QR branches (tiny dense linear algebra; plain JAX).  Carried
    # arrays are max_neurons-wide with zero dead slots; R keeps 1 on the dead
    # diagonal and QT keeps 0 in dead rows so the padded triangular solve equals
    # the exact (k+1)-sized solve. ---
    def beta_lt(H, h_col, Q, R, QT, y_prev, k):      # k < Ns: normal equations
        Hs = H[:, :Ns]
        live = (jnp.arange(Ns) < k + 1).astype(jnp.float32)
        G = jnp.dot(Hs.T, Hs, precision=_HI) + jnp.diag(1.0 - live)
        rhs = jnp.dot(Hs.T, Y_pad, precision=_HI)
        bs = jnp.linalg.solve(G, rhs)                                    # (Ns, m)
        beta = jnp.zeros((max_neurons, m), jnp.float32).at[:Ns, :].set(bs)
        y = predict(Hs, bs, tile_n=tile_n)
        return beta, Q, R, QT, y

    def beta_eq(H, h_col, Q, R, QT, y_prev, k):      # k == Ns: QR of first Ns+1 cols
        Hk = H[:, :Ns + 1]
        Qk, Rk = jnp.linalg.qr(Hk)
        QTk = jnp.dot(Qk.T, Y_pad, precision=_HI)
        bk = solve_triangular(Rk, QTk, lower=False)
        Qp = jnp.zeros((n_pad, max_neurons), jnp.float32).at[:, :Ns + 1].set(Qk)
        Rp = jnp.eye(max_neurons, dtype=jnp.float32).at[:Ns + 1, :Ns + 1].set(Rk)
        QTp = jnp.zeros((max_neurons, m), jnp.float32).at[:Ns + 1, :].set(QTk)
        beta = jnp.zeros((max_neurons, m), jnp.float32).at[:Ns + 1, :].set(bk)
        y = predict(Hk, bk, tile_n=tile_n)
        return beta, Qp, Rp, QTp, y

    def beta_gt(H, h_col, Q, R, QT, y_prev, k):      # k > Ns: Gram-Schmidt + rank-1 y
        # TODO(synk): at production N, fuse the two Q matvecs into one Pallas pass over Q.
        h_c = h_col[:, 0]
        r1 = jnp.dot(Q.T, h_c, precision=_HI)        # dead columns of Q are 0 -> dead r1 = 0
        t = h_c - jnp.dot(Q, r1, precision=_HI)
        r2 = jnp.linalg.norm(t)
        q = t / jnp.maximum(r2, 1e-30)               # classical GS, as in the reference
        Qn = lax.dynamic_update_slice(Q, q[:, None], (0, k))
        col = jnp.where(jnp.arange(max_neurons) == k, r2, r1)
        Rn = lax.dynamic_update_slice(R, col[:, None], (0, k))
        qty = jnp.dot(q, Y_pad, precision=_HI)       # (m,)
        QTn = lax.dynamic_update_slice(QT, qty[None, :], (k, 0))
        beta = solve_triangular(Rn, QTn, lower=False)
        # H = Q R by construction -> H @ beta = Q @ QT = y_prev + q (q^T Y).
        y = y_prev + q[:, None] * qty[None, :]
        return beta, Qn, Rn, QTn, y

    def body(k, carry):
        key, H, W, b, beta, Q, R, QT, y_prev, batch_size = carry
        key, kperm, kw, kb = jax.random.split(key, 4)

        # batch selection as a row mask over the real N rows (same row SET as
        # perm[:batch_size]; candidate scores are order-independent sums).
        perm = jax.random.permutation(kperm, N)
        sel = (jnp.arange(N) < batch_size).astype(jnp.float32)
        mask = jnp.zeros((n_pad,), jnp.float32).at[perm].set(sel)[:, None]

        # random candidate weights/biases in [-L, L], padded to c_pad columns
        kws = jax.random.split(kw, n_lam)
        kbs = jax.random.split(kb, n_lam)
        wr = jnp.concatenate(
            [L * (2.0 * jax.random.uniform(kk, (d, reconfig_number), jnp.float32) - 1.0)
             for L, kk in zip(lambdas, kws)], axis=1)
        br = jnp.concatenate(
            [L * (2.0 * jax.random.uniform(kk, (1, reconfig_number), jnp.float32) - 1.0)
             for L, kk in zip(lambdas, kbs)], axis=1)
        wr_pad = jnp.zeros((d, c_pad), jnp.float32).at[:, :c_real].set(wr)
        br_pad = jnp.zeros((1, c_pad), jnp.float32).at[:, :c_real].set(br)

        # --- Pallas kernel 1: tiled, row-sharded candidate statistics ---
        num_p, den_p = candidate_partials(X_bf16, wr_pad.astype(jnp.bfloat16),
                                          br_pad, Y_pad, y_prev, mask,
                                          tile_n=tile_n, n_shards=n_shards)
        num = jnp.sum(num_p, axis=0)                 # (m, c_pad)
        den = jnp.sum(den_p, axis=0) + 1e-12         # (1, c_pad)
        v = jnp.mean((num * num) / den, axis=0)      # (c_pad,)
        v = jnp.where(jnp.arange(c_pad) < c_real, v, -jnp.inf)
        best_idx = jnp.argmax(v).astype(jnp.int32)

        # winning neuron: one d-wide matvec over the (padded) dataset, f32
        w_c = lax.dynamic_slice(wr_pad, (0, best_idx), (d, 1))
        b_c = lax.dynamic_slice(br_pad, (0, best_idx), (1, 1))
        h_col = valid * _sigmoid(jnp.dot(X_pad, w_c, precision=_HI) + b_c)

        H = lax.dynamic_update_slice(H, h_col, (0, k))
        W = lax.dynamic_update_slice(W, w_c, (0, k))
        b = lax.dynamic_update_slice(b, b_c[0], (k,))

        branch = jnp.clip(k - Ns + 1, 0, 2)
        beta, Q, R, QT, y = lax.switch(branch, (beta_lt, beta_eq, beta_gt),
                                       H, h_col, Q, R, QT, y_prev, k)
        # TODO(synk): reference prints per-iteration RMSE; dropped as dead compute.

        return (key, H, W, b, beta, Q, R, QT, y, batch_size + batch_increment)

    carry0 = (key,
              jnp.zeros((n_pad, max_neurons), jnp.float32),   # H
              jnp.zeros((d, max_neurons), jnp.float32),       # W
              jnp.zeros((max_neurons,), jnp.float32),         # b
              jnp.zeros((max_neurons, m), jnp.float32),       # beta (zero dead rows)
              jnp.zeros((n_pad, max_neurons), jnp.float32),   # Q   (zero dead cols)
              jnp.eye(max_neurons, dtype=jnp.float32),        # R   (1 on dead diag)
              jnp.zeros((max_neurons, m), jnp.float32),       # QT  (zero dead rows)
              jnp.zeros((n_pad, m), jnp.float32),             # y_prev (0 -> ek = Tk at k=0)
              jnp.int32(init_batch_size))

    carry = lax.fori_loop(0, max_neurons, body, carry0)
    _, _, W, b, beta, _, _, _, _, _ = carry
    return W, b, beta


if __name__ == "__main__":
    key = jax.random.PRNGKey(0)
    kx, ky, ktrain = jax.random.split(key, 3)

    # small, module-consistent shapes
    N, d, m = 64, 16, 4
    max_neurons = 6
    reconfig_number = 8
    lambdas = (0.5, 1.0)
    init_batch_size = 32
    batch_increment = (N - init_batch_size) // max_neurons

    X = jax.random.normal(kx, (N, d), jnp.float32)
    labels = jax.random.randint(ky, (N,), 0, m)
    Y = jax.nn.one_hot(labels, m, dtype=jnp.float32)   # (N, m) targets

    W, b, beta = bscnu_train(X, Y, lambdas, max_neurons, reconfig_number,
                             init_batch_size, batch_increment, ktrain)
    jax.block_until_ready((W, b, beta))

    assert W.shape == (d, max_neurons)
    assert b.shape == (max_neurons,)
    assert beta.shape == (max_neurons, m)
    assert bool(jnp.all(jnp.isfinite(W))) and bool(jnp.all(jnp.isfinite(beta)))
    print("KERNEL_OK")
</pallas_src>

<mosaic_0001>
module attributes {stable_mosaic.version = 11 : i64} {
  func.func @_score_partial_kernel(%arg0: i32, %arg1: i32, %arg2: memref<64x16xbf16, #tpu.memory_space<vmem>>, %arg3: memref<16x128xbf16, #tpu.memory_space<vmem>>, %arg4: memref<1x128xf32, #tpu.memory_space<vmem>>, %arg5: memref<64x4xf32, #tpu.memory_space<vmem>>, %arg6: memref<64x4xf32, #tpu.memory_space<vmem>>, %arg7: memref<64x1xf32, #tpu.memory_space<vmem>>, %arg8: memref<1x4x128xf32, #tpu.memory_space<vmem>>, %arg9: memref<1x1x128xf32, #tpu.memory_space<vmem>>, %arg10: memref<4x128xf32, #tpu.memory_space<vmem>>, %arg11: memref<1x128xf32, #tpu.memory_space<vmem>>) attributes {dimension_semantics = [#tpu.dimension_semantics<parallel>, #tpu.dimension_semantics<arbitrary>], iteration_bounds = array<i64: 1, 1>, scalar_prefetch = 0 : i64, scratch_operands = 2 : i64, tpu.core_type = #tpu.core_type<tc>, window_params = [{transform_indices = @transform_0, window_bounds = array<i64: 64, 16>}, {pipeline_mode = #tpu.pipeline_mode<synchronous>, transform_indices = @transform_1, window_bounds = array<i64: 16, 128>}, {pipeline_mode = #tpu.pipeline_mode<synchronous>, transform_indices = @transform_2, window_bounds = array<i64: 1, 128>}, {transform_indices = @transform_3, window_bounds = array<i64: 64, 4>}, {transform_indices = @transform_4, window_bounds = array<i64: 64, 4>}, {transform_indices = @transform_5, window_bounds = array<i64: 64, 1>}, {transform_indices = @transform_6, window_bounds = array<i64: 1, 4, 128>}, {transform_indices = @transform_7, window_bounds = array<i64: 1, 1, 128>}]} {
    %c0_i32 = arith.constant 0 : i32
    %0 = arith.cmpi eq, %arg1, %c0_i32 : i32
    %1 = arith.extui %0 : i1 to i32
    %c0_i32_0 = arith.constant 0 : i32
    %2 = arith.cmpi ne, %1, %c0_i32_0 : i32
    scf.if %2 {
      %cst_27 = arith.constant 0.000000e+00 : f32
      %37 = vector.broadcast %cst_27 : f32 to vector<4x128xf32>
      %c0_28 = arith.constant 0 : index
      %c0_29 = arith.constant 0 : index
      %38 = vector.load %arg10[%c0_28, %c0_29] : memref<4x128xf32, #tpu.memory_space<vmem>>, vector<4x128xf32>
      tpu.vector_store %arg10[%c0_28, %c0_29], %37 {strides = array<i32>} : memref<4x128xf32, #tpu.memory_space<vmem>>, vector<4x128xf32>,
      %cst_30 = arith.constant 0.000000e+00 : f32
      %39 = vector.broadcast %cst_30 : f32 to vector<1x128xf32>
      %c0_31 = arith.constant 0 : index
      %c0_32 = arith.constant 0 : index
      %40 = vector.load %arg11[%c0_31, %c0_32] : memref<1x128xf32, #tpu.memory_space<vmem>>, vector<1x128xf32>
      tpu.vector_store %arg11[%c0_31, %c0_32], %39 {strides = array<i32>} : memref<1x128xf32, #tpu.memory_space<vmem>>, vector<1x128xf32>,
    } else {
    }
    %c0 = arith.constant 0 : index
    %c0_1 = arith.constant 0 : index
    %3 = vector.load %arg2[%c0, %c0_1] : memref<64x16xbf16, #tpu.memory_space<vmem>>, vector<64x16xbf16>
    %c0_2 = arith.constant 0 : index
    %c0_3 = arith.constant 0 : index
    %4 = vector.load %arg3[%c0_2, %c0_3] : memref<16x128xbf16, #tpu.memory_space<vmem>>, vector<16x128xbf16>
    %cst = arith.constant dense<0.000000e+00> : vector<64x128xf32>
    %5 = tpu.matmul %3, %4, %cst {dimension_numbers = #tpu.dot_dimension_numbers<[1], [0], [0], [1], [0, 0, 1, 1], [], []>} : vector<64x16xbf16>, vector<16x128xbf16>, vector<64x128xf32> -> vector<64x128xf32>
    %c0_4 = arith.constant 0 : index
    %c0_5 = arith.constant 0 : index
    %6 = vector.load %arg4[%c0_4, %c0_5] : memref<1x128xf32, #tpu.memory_space<vmem>>, vector<1x128xf32>
    %7 = vector.broadcast %6 : vector<1x128xf32> to vector<64x128xf32>
    %8 = arith.addf %5, %7 : vector<64x128xf32>
    %cst_6 = arith.constant 5.000000e-01 : f32
    %9 = vector.broadcast %cst_6 : f32 to vector<64x128xf32>
    %10 = arith.mulf %9, %8 : vector<64x128xf32>
    %11 = math.tanh %10 : vector<64x128xf32>
    %cst_7 = arith.constant 1.000000e+00 : f32
    %12 = vector.broadcast %cst_7 : f32 to vector<64x128xf32>
    %13 = arith.addf %11, %12 : vector<64x128xf32>
    %cst_8 = arith.constant 5.000000e-01 : f32
    %14 = vector.broadcast %cst_8 : f32 to vector<64x128xf32>
    %15 = arith.mulf %14, %13 : vector<64x128xf32>
    %c0_9 = arith.constant 0 : index
    %c0_10 = arith.constant 0 : index
    %16 = vector.load %arg7[%c0_9, %c0_10] : memref<64x1xf32, #tpu.memory_space<vmem>>, vector<64x1xf32>
    %c0_11 = arith.constant 0 : index
    %c0_12 = arith.constant 0 : index
    %17 = vector.load %arg5[%c0_11, %c0_12] : memref<64x4xf32, #tpu.memory_space<vmem>>, vector<64x4xf32>
    %c0_13 = arith.constant 0 : index
    %c0_14 = arith.constant 0 : index
    %18 = vector.load %arg6[%c0_13, %c0_14] : memref<64x4xf32, #tpu.memory_space<vmem>>, vector<64x4xf32>
    %19 = arith.subf %17, %18 : vector<64x4xf32>
    %20 = vector.broadcast %16 : vector<64x1xf32> to vector<64x4xf32>
    %21 = arith.mulf %20, %19 : vector<64x4xf32>
    %c0_15 = arith.constant 0 : index
    %c0_16 = arith.constant 0 : index
    %22 = vector.load %arg10[%c0_15, %c0_16] : memref<4x128xf32, #tpu.memory_space<vmem>>, vector<4x128xf32>
    %cst_17 = arith.constant dense<0.000000e+00> : vector<4x128xf32>
    %23 = tpu.matmul %21, %15, %cst_17 {dimension_numbers = #tpu.dot_dimension_numbers<[0], [0], [1], [1], [0, 1, 1, 1], [], []>} : vector<64x4xf32>, vector<64x128xf32>, vector<4x128xf32> -> vector<4x128xf32>
    %24 = arith.addf %22, %23 : vector<4x128xf32>
    %c0_18 = arith.constant 0 : index
    %c0_19 = arith.constant 0 : index
    %25 = vector.load %arg10[%c0_18, %c0_19] : memref<4x128xf32, #tpu.memory_space<vmem>>, vector<4x128xf32>
    tpu.vector_store %arg10[%c0_18, %c0_19], %24 {strides = array<i32>} : memref<4x128xf32, #tpu.memory_space<vmem>>, vector<4x128xf32>,
    %c0_20 = arith.constant 0 : index
    %c0_21 = arith.constant 0 : index
    %26 = vector.load %arg11[%c0_20, %c0_21] : memref<1x128xf32, #tpu.memory_space<vmem>>, vector<1x128xf32>
    %27 = vector.broadcast %16 : vector<64x1xf32> to vector<64x128xf32>
    %28 = arith.mulf %27, %15 : vector<64x128xf32>
    %29 = arith.mulf %28, %15 : vector<64x128xf32>
    %cst_22 = arith.constant dense<0.000000e+00> : vector<128xf32>
    %30 = vector.multi_reduction <add>, %29, %cst_22 [0] : vector<64x128xf32> to vector<128xf32>
    %31 = vector.shape_cast %30 : vector<128xf32> to vector<1x128xf32>
    %32 = arith.addf %26, %31 : vector<1x128xf32>
    %c0_23 = arith.constant 0 : index
    %c0_24 = arith.constant 0 : index
    %33 = vector.load %arg11[%c0_23, %c0_24] : memref<1x128xf32, #tpu.memory_space<vmem>>, vector<1x128xf32>
    tpu.vector_store %arg11[%c0_23, %c0_24], %32 {strides = array<i32>} : memref<1x128xf32, #tpu.memory_space<vmem>>, vector<1x128xf32>,
    %c0_i32_25 = arith.constant 0 : i32
    %34 = arith.cmpi eq, %arg1, %c0_i32_25 : i32
    %35 = arith.extui %34 : i1 to i32
    %c0_i32_26 = arith.constant 0 : i32
    %36 = arith.cmpi ne, %35, %c0_i32_26 : i32
    scf.if %36 {
      %c0_27 = arith.constant 0 : index
      %c0_28 = arith.constant 0 : index
      %37 = vector.load %arg10[%c0_27, %c0_28] : memref<4x128xf32, #tpu.memory_space<vmem>>, vector<4x128xf32>
      %c0_29 = arith.constant 0 : index
      %c0_30 = arith.constant 0 : index
      %c0_31 = arith.constant 0 : index
      %38 = vector.load %arg8[%c0_29, %c0_30, %c0_31] : memref<1x4x128xf32, #tpu.memory_space<vmem>>, vector<1x4x128xf32>
      %39 = vector.shape_cast %38 : vector<1x4x128xf32> to vector<4x128xf32>
      %40 = vector.shape_cast %37 : vector<4x128xf32> to vector<1x4x128xf32>
      tpu.vector_store %arg8[%c0_29, %c0_30, %c0_31], %40 {strides = array<i32>} : memref<1x4x128xf32, #tpu.memory_space<vmem>>, vector<1x4x128xf32>,
      %c0_32 = arith.constant 0 : index
      %c0_33 = arith.constant 0 : index
      %41 = vector.load %arg11[%c0_32, %c0_33] : memref<1x128xf32, #tpu.memory_space<vmem>>, vector<1x128xf32>
      %c0_34 = arith.constant 0 : index
      %c0_35 = arith.constant 0 : index
      %c0_36 = arith.constant 0 : index
      %42 = vector.load %arg9[%c0_34, %c0_35, %c0_36] : memref<1x1x128xf32, #tpu.memory_space<vmem>>, vector<1x1x128xf32>
      %43 = vector.shape_cast %42 : vector<1x1x128xf32> to vector<1x128xf32>
      %44 = vector.shape_cast %41 : vector<1x128xf32> to vector<1x1x128xf32>
      tpu.vector_store %arg9[%c0_34, %c0_35, %c0_36], %44 {strides = array<i32>} : memref<1x1x128xf32, #tpu.memory_space<vmem>>, vector<1x1x128xf32>,
    } else {
    }
    return
  }
  func.func @transform_0(%arg0: i32, %arg1: i32) -> (i32, i32) {
    %c1_i32 = arith.constant 1 : i32
    %0 = arith.muli %arg0, %c1_i32 : i32
    %1 = arith.addi %0, %arg1 : i32
    %c0_i32 = arith.constant 0 : i32
    %c0_i32_0 = arith.constant 0 : i32
    return %1, %c0_i32 : i32, i32
  }
  func.func @transform_1(%arg0: i32, %arg1: i32) -> (i32, i32) {
    %c0_i32 = arith.constant 0 : i32
    %c0_i32_0 = arith.constant 0 : i32
    %c0_i32_1 = arith.constant 0 : i32
    return %c0_i32, %c0_i32_0 : i32, i32
  }
  func.func @transform_2(%arg0: i32, %arg1: i32) -> (i32, i32) {
    %c0_i32 = arith.constant 0 : i32
    %c0_i32_0 = arith.constant 0 : i32
    %c0_i32_1 = arith.constant 0 : i32
    return %c0_i32, %c0_i32_0 : i32, i32
  }
  func.func @transform_3(%arg0: i32, %arg1: i32) -> (i32, i32) {
    %c1_i32 = arith.constant 1 : i32
    %0 = arith.muli %arg0, %c1_i32 : i32
    %1 = arith.addi %0, %arg1 : i32
    %c0_i32 = arith.constant 0 : i32
    %c0_i32_0 = arith.constant 0 : i32
    return %1, %c0_i32 : i32, i32
  }
  func.func @transform_4(%arg0: i32, %arg1: i32) -> (i32, i32) {
    %c1_i32 = arith.constant 1 : i32
    %0 = arith.muli %arg0, %c1_i32 : i32
    %1 = arith.addi %0, %arg1 : i32
    %c0_i32 = arith.constant 0 : i32
    %c0_i32_0 = arith.constant 0 : i32
    return %1, %c0_i32 : i32, i32
  }
  func.func @transform_5(%arg0: i32, %arg1: i32) -> (i32, i32) {
    %c1_i32 = arith.constant 1 : i32
    %0 = arith.muli %arg0, %c1_i32 : i32
    %1 = arith.addi %0, %arg1 : i32
    %c0_i32 = arith.constant 0 : i32
    %c0_i32_0 = arith.constant 0 : i32
    return %1, %c0_i32 : i32, i32
  }
  func.func @transform_6(%arg0: i32, %arg1: i32) -> (i32, i32, i32) {
    %c0_i32 = arith.constant 0 : i32
    %c0_i32_0 = arith.constant 0 : i32
    %c0_i32_1 = arith.constant 0 : i32
    return %arg0, %c0_i32, %c0_i32_0 : i32, i32, i32
  }
  func.func @transform_7(%arg0: i32, %arg1: i32) -> (i32, i32, i32) {
    %c0_i32 = arith.constant 0 : i32
    %c0_i32_0 = arith.constant 0 : i32
    %c0_i32_1 = arith.constant 0 : i32
    return %arg0, %c0_i32, %c0_i32_0 : i32, i32, i32
  }
}

module attributes {stable_mosaic.version = 11 : i64} {
  func.func @_predict_kernel(%arg0: i32, %arg1: memref<64x2xf32, #tpu.memory_space<vmem>>, %arg2: memref<2x4xf32, #tpu.memory_space<vmem>>, %arg3: memref<64x4xf32, #tpu.memory_space<vmem>>) attributes {dimension_semantics = [#tpu.dimension_semantics<parallel>], iteration_bounds = array<i64: 1>, scalar_prefetch = 0 : i64, scratch_operands = 0 : i64, tpu.core_type = #tpu.core_type<tc>, window_params = [{transform_indices = @transform_0, window_bounds = array<i64: 64, 2>}, {pipeline_mode = #tpu.pipeline_mode<synchronous>, transform_indices = @transform_1, window_bounds = array<i64: 2, 4>}, {transform_indices = @transform_2, window_bounds = array<i64: 64, 4>}]} {
    %c0 = arith.constant 0 : index
    %c0_0 = arith.constant 0 : index
    %0 = vector.load %arg1[%c0, %c0_0] : memref<64x2xf32, #tpu.memory_space<vmem>>, vector<64x2xf32>
    %c0_1 = arith.constant 0 : index
    %c0_2 = arith.constant 0 : index
    %1 = vector.load %arg2[%c0_1, %c0_2] : memref<2x4xf32, #tpu.memory_space<vmem>>, vector<2x4xf32>
    %cst = arith.constant dense<0.000000e+00> : vector<64x4xf32>
    %2 = tpu.matmul %0, %1, %cst {dimension_numbers = #tpu.dot_dimension_numbers<[1], [0], [0], [1], [0, 0, 1, 1], [], []>} : vector<64x2xf32>, vector<2x4xf32>, vector<64x4xf32> -> vector<64x4xf32>
    %c0_3 = arith.constant 0 : index
    %c0_4 = arith.constant 0 : index
    %3 = vector.load %arg3[%c0_3, %c0_4] : memref<64x4xf32, #tpu.memory_space<vmem>>, vector<64x4xf32>
    tpu.vector_store %arg3[%c0_3, %c0_4], %2 {strides = array<i32>} : memref<64x4xf32, #tpu.memory_space<vmem>>, vector<64x4xf32>,
    return
  }
  func.func @transform_0(%arg0: i32) -> (i32, i32) {
    %c0_i32 = arith.constant 0 : i32
    %c0_i32_0 = arith.constant 0 : i32
    return %arg0, %c0_i32 : i32, i32
  }
  func.func @transform_1(%arg0: i32) -> (i32, i32) {
    %c0_i32 = arith.constant 0 : i32
    %c0_i32_0 = arith.constant 0 : i32
    %c0_i32_1 = arith.constant 0 : i32
    return %c0_i32, %c0_i32_0 : i32, i32
  }
  func.func @transform_2(%arg0: i32) -> (i32, i32) {
    %c0_i32 = arith.constant 0 : i32
    %c0_i32_0 = arith.constant 0 : i32
    return %arg0, %c0_i32 : i32, i32
  }
}

module attributes {stable_mosaic.version = 11 : i64} {
  func.func @_predict_kernel(%arg0: i32, %arg1: memref<64x3xf32, #tpu.memory_space<vmem>>, %arg2: memref<3x4xf32, #tpu.memory_space<vmem>>, %arg3: memref<64x4xf32, #tpu.memory_space<vmem>>) attributes {dimension_semantics = [#tpu.dimension_semantics<parallel>], iteration_bounds = array<i64: 1>, scalar_prefetch = 0 : i64, scratch_operands = 0 : i64, tpu.core_type = #tpu.core_type<tc>, window_params = [{transform_indices = @transform_0, window_bounds = array<i64: 64, 3>}, {pipeline_mode = #tpu.pipeline_mode<synchronous>, transform_indices = @transform_1, window_bounds = array<i64: 3, 4>}, {transform_indices = @transform_2, window_bounds = array<i64: 64, 4>}]} {
    %c0 = arith.constant 0 : index
    %c0_0 = arith.constant 0 : index
    %0 = vector.load %arg1[%c0, %c0_0] : memref<64x3xf32, #tpu.memory_space<vmem>>, vector<64x3xf32>
    %c0_1 = arith.constant 0 : index
    %c0_2 = arith.constant 0 : index
    %1 = vector.load %arg2[%c0_1, %c0_2] : memref<3x4xf32, #tpu.memory_space<vmem>>, vector<3x4xf32>
    %cst = arith.constant dense<0.000000e+00> : vector<64x4xf32>
    %2 = tpu.matmul %0, %1, %cst {dimension_numbers = #tpu.dot_dimension_numbers<[1], [0], [0], [1], [0, 0, 1, 1], [], []>} : vector<64x3xf32>, vector<3x4xf32>, vector<64x4xf32> -> vector<64x4xf32>
    %c0_3 = arith.constant 0 : index
    %c0_4 = arith.constant 0 : index
    %3 = vector.load %arg3[%c0_3, %c0_4] : memref<64x4xf32, #tpu.memory_space<vmem>>, vector<64x4xf32>
    tpu.vector_store %arg3[%c0_3, %c0_4], %2 {strides = array<i32>} : memref<64x4xf32, #tpu.memory_space<vmem>>, vector<64x4xf32>,
    return
  }
  func.func @transform_0(%arg0: i32) -> (i32, i32) {
    %c0_i32 = arith.constant 0 : i32
    %c0_i32_0 = arith.constant 0 : i32
    return %arg0, %c0_i32 : i32, i32
  }
  func.func @transform_1(%arg0: i32) -> (i32, i32) {
    %c0_i32 = arith.constant 0 : i32
    %c0_i32_0 = arith.constant 0 : i32
    %c0_i32_1 = arith.constant 0 : i32
    return %c0_i32, %c0_i32_0 : i32, i32
  }
  func.func @transform_2(%arg0: i32) -> (i32, i32) {
    %c0_i32 = arith.constant 0 : i32
    %c0_i32_0 = arith.constant 0 : i32
    return %arg0, %c0_i32 : i32, i32
  }
}

</mosaic_0001>

<llo_original>
// kernel: custom-call.6
$region0: #{custom-call.6}
  %s0 = inlined_call_operand.vmem [shape: f32[6], index: 0, kind: output, shape index: {}]

// kernel: custom-call.5
$region0: #{custom-call.5}
  %s0 = inlined_call_operand.hbm [shape: f32[16,6], index: 0, kind: output, shape index: {}]

// kernel: custom-call.7
$region0: #{custom-call.7}
  %s0 = inlined_call_operand.hbm [shape: f32[6,4], index: 0, kind: output, shape index: {}]

// kernel: custom-call.4
$region0: #{custom-call.4}
  %s0 = inlined_call_operand.hbm [shape: f32[64,6], index: 0, kind: output, shape index: {}]

// kernel: custom-call.13
$region0: #{custom-call.13}
  %s0 = inlined_call_operand.vmem [shape: f32[2,2], index: 0, kind: input, shape index: {}]
  %s1 = inlined_call_operand.vmem [shape: f32[2,2], index: 1, kind: output, shape index: {0}]
  %s2 = inlined_call_operand.hbm [shape: s32[2], index: 2, kind: output, shape index: {1}]
  %s3 = inlined_call_operand.vmem [shape: s32[2], index: 3, kind: output, shape index: {2}]
  %4 = xla_tuple %s1, %s2, %s3
  $region1: #{custom-call.13} parent=0
    #allocation0 [shape = 'u8[4096]{0}', space=vmem, size = 0x1000, scoped, tag = 'operand span for operand 0']
    #allocation1 [shape = 'u8[1024]{0}', space=vmem, size = 0x400, scoped, tag = 'packed  for operand 0']
    #allocation2 [shape = 'u8[4096]{0}', space=vmem, size = 0x1000, scoped, tag = 'operand span for operand 1']
    #allocation3 [shape = 'u8[1024]{0}', space=vmem, size = 0x400, scoped, tag = 'packed  for operand 1']
    #allocation4 [shape = 'u8[4096]{0}', space=vmem, size = 0x1000, scoped, tag = 'operand span for operand 2']
    #allocation5 [shape = 'u8[512]{0}', space=vmem, size = 0x400, scoped, tag = 'packed  for operand 2']
    #allocation6 [shape = 's32[1]{0}', space=sflag, size = 0x4, scoped, tag = 'scoped memory for custom-call.13']
    #allocation7 [shape = 'u8[4096]{0}', space=vmem, size = 0x1000, scoped, tag = 'operand span for operand 3']
    #allocation8 [shape = 'u8[512]{0}', space=vmem, size = 0x400, scoped, tag = 'packed  for operand 3']
    #allocation9 [shape = 's32[2,128]{1,0}', space=vmem, size = 0x1000, scoped, tag = 'scratch for permutations']
    %5 = vsyncpa [#allocation6], 0
    %p7 = scmp.gt.s32.totalorder 2, 0
    // Predicated region
    $region2: #{custom-call.13} parent=1 // pred_check
      %p8 = pneg %p7
    $region3: #{custom-call.13} parent=1 // pred_check_branch
      %10 = sbr.rel (%p8) target = $region5
    $region4: #{custom-call.13} parent=1 // pred_region
      %s11 = sshra.s32 2, 3
      %p12 = scmp.gt.s32.totalorder %s11, 0
      // Predicated region
      $region6: #{custom-call.13} parent=4 // pred_check
        %p13 = pneg %p12
      $region7: #{custom-call.13} parent=4 // pred_check_branch
        %15 = sbr.rel (%p13) target = $region9
      $region8: #{custom-call.13} parent=4 // pred_region
        %s16 = ssub.s32 %s11, 1
        %s17 = smul.u32 %s16, 128
        %s18 = sshra.s32 %s17, 4
        %s19 = scalar_lea.vmem %s0, %s18
        %v20 = vld [vmem:[%s0] sm:$0xff]
        // While loop
        $region10: #{custom-call.13} parent=8 // loop_pre_header
          _
        $region11: #{custom-call.13} parent=8 // loop_header
          %s21 = sphi %s0, %s43
          %s22 = sphi [#allocation1], %s44
          %v23 = vphi %v20, %v45
          %s24 = ssub.s32 %s19, 64
          %p25 = scmp.gt.s32.totalorder %s21, %s24
        $region12: #{custom-call.13} parent=8 // loop_header_branch
          %27 = sbr.rel (%p25) target = $region16
        $region13: #{custom-call.13} parent=8 // loop_body
          %28 = vst [vmem:[%s22] sm:$0xff] %v23
          %v29 = vld [vmem:[%s21 + $0x8] sm:$0xff]
          %30 = vst [vmem:[%s22 + $0x8] sm:$0xff] %v29
          %v31 = vld [vmem:[%s21 + $0x10] sm:$0xff]
          %32 = vst [vmem:[%s22 + $0x10] sm:$0xff] %v31
          %v33 = vld [vmem:[%s21 + $0x18] sm:$0xff]
          %34 = vst [vmem:[%s22 + $0x18] sm:$0xff] %v33
          %v35 = vld [vmem:[%s21 + $0x20] sm:$0xff]
          %36 = vst [vmem:[%s22 + $0x20] sm:$0xff] %v35
          %v37 = vld [vmem:[%s21 + $0x28] sm:$0xff]
          %38 = vst [vmem:[%s22 + $0x28] sm:$0xff] %v37
          %v39 = vld [vmem:[%s21 + $0x30] sm:$0xff]
          %40 = vst [vmem:[%s22 + $0x30] sm:$0xff] %v39
          %v41 = vld [vmem:[%s21 + $0x38] sm:$0xff]
          %42 = vst [vmem:[%s22 + $0x38] sm:$0xff] %v41
        $region14: #{custom-call.13} parent=8 // loop_footer
          %s43 = scalar_lea.vmem %s21, 64
          %s44 = scalar_lea.vmem %s22, 64
          %v45 = vld [vmem:[%s21 + $0x40] sm:$0xff]
        $region15: #{custom-call.13} parent=8 // loop_footer_branch
          %46 = sbr.rel target = $region11
        $region16: #{custom-call.13} parent=8 // loop_exit
          _
        // While loop
        $region17: #{custom-call.13} parent=8 // loop_pre_header
          _
        $region18: #{custom-call.13} parent=8 // loop_header
          %s47 = sphi %s21, %s55
          %s48 = sphi %s22, %s56
          %v49 = vphi %v23, %v49
          %p50 = scmp.gt.s32.totalorder %s47, %s19
        $region19: #{custom-call.13} parent=8 // loop_header_branch
          %52 = sbr.rel (%p50) target = $region23
        $region20: #{custom-call.13} parent=8 // loop_body
          %v53 = vld [vmem:[%s47] sm:$0xff]
          %54 = vst [vmem:[%s48] sm:$0xff] %v53
        $region21: #{custom-call.13} parent=8 // loop_footer
          %s55 = scalar_lea.vmem %s47, 8
          %s56 = scalar_lea.vmem %s48, 8
        $region22: #{custom-call.13} parent=8 // loop_footer_branch
          %57 = sbr.rel target = $region18
        $region23: #{custom-call.13} parent=8 // loop_exit
          _
      $region9: #{custom-call.13} parent=4 // pred_fallthru
        _
      %s58 = sand.u32 2, 7
      %s59 = sshllo.u32 0, %s58
      %s60 = smul.u32 %s11, 128
      %s61 = sshra.s32 %s60, 4
      %s62 = scalar_lea.vmem [#allocation1], %s61
      %s63 = smul.u32 %s11, 128
      %s64 = sshra.s32 %s63, 4
      %s65 = scalar_lea.vmem %s0, %s64
      %v66 = vld [vmem:[%s65] sm:%s59]
      %67 = vst [vmem:[%s62] sm:%s59] %v66
    $region5: #{custom-call.13} parent=1 // pred_fallthru
      _
    %s69 = sshllo.u32 0, 2
    %v70 = vld [vmem:[#allocation1] sm:%s69]
    %71 = vst [vmem:[#allocation0] sm:%s69] %v70
    %v72 = vld [vmem:[#allocation0] sm:$0xff]
    %73 = vst [vmem:[#allocation2] sm:$0xff] %v72
    %74 = vst [vmem:[#allocation4] sm:$0x1] 0
    %v75 = vlaneseq
    %v76 = vshrl.u32 %v75, 7
    %v77 = vmov %v76
    %79 = vst [vmem:[#allocation9] sm:$0xff] %v77
    loop: start=0, step=1, limit=2
    $region25: #{custom-call.13} parent=1 // loop_pre_header
      _
    $region26: #{custom-call.13} parent=1 // loop_header
      %s81 = sphi 0, %s85
      %p82 = scmp.ge.s32.totalorder %s81, 2
    $region27: #{custom-call.13} parent=1 // loop_header_branch
      %84 = sbr.rel (%p82) target = $region31
    $region28: #{custom-call.13} parent=1 // loop_body
      %v86 = vstv %s81
      %v87 = vlaneseq
      %v88 = vshrl.u32 %v87, 7
      %v89 = vmov %v88
      %v90 = vld [vmem:[#allocation2] sm:$0xff]
      %v91 = vand.u32 2147483647, %v90
      %v93 = vstv %s81
      %vm94 = vcmp.ge.s32.totalorder %v89, %v93
      %vm95 = vcmp.lt.s32.totalorder %v89, 2
      %vm96 = vmand %vm94, %vm95
      %vm97 = vcmp.lt.f32.partialorder -inf, %v91
      %vm98 = vmand %vm96, %vm97
      %v99 = vsel %vm98, %v89, %v86
      %v100 = vsel %vm98, %v91, -inf
      %v101 = vrot.slane %v100, 1
      %v102 = vrot.slane %v99, 1
      %vm103 = vcmp.ge.f32.partialorder %v101, %v100
      %v104 = vsel %vm103, %v101, %v100
      %v105 = vsel %vm103, %v102, %v99
      %v106 = vrot.slane %v101, 1
      %v107 = vrot.slane %v102, 1
      %vm108 = vcmp.ge.f32.partialorder %v106, %v104
      %v109 = vsel %vm108, %v106, %v104
      %v110 = vsel %vm108, %v107, %v105
      %v111 = vrot.slane %v106, 1
      %v112 = vrot.slane %v107, 1
      %vm113 = vcmp.ge.f32.partialorder %v111, %v109
      %v114 = vsel %vm113, %v111, %v109
      %v115 = vsel %vm113, %v112, %v110
      %v116 = vrot.slane %v111, 1
      %v117 = vrot.slane %v112, 1
      %vm118 = vcmp.ge.f32.partialorder %v116, %v114
      %v119 = vsel %vm118, %v116, %v114
      %v120 = vsel %vm118, %v117, %v115
      %v121 = vrot.slane %v116, 1
      %v122 = vrot.slane %v117, 1
      %vm123 = vcmp.ge.f32.partialorder %v121, %v119
      %v124 = vsel %vm123, %v121, %v119
      %v125 = vsel %vm123, %v122, %v120
      %v126 = vrot.slane %v121, 1
      %v127 = vrot.slane %v122, 1
      %vm128 = vcmp.ge.f32.partialorder %v126, %v124
      %v129 = vsel %vm128, %v126, %v124
      %v130 = vsel %vm128, %v127, %v125
      %v131 = vrot.slane %v126, 1
      %v132 = vrot.slane %v127, 1
      %vm133 = vcmp.ge.f32.partialorder %v131, %v129
      %v134 = vsel %vm133, %v131, %v129
      %v135 = vsel %vm133, %v132, %v130
      %s136 = ssub.s32 128, %s81
      %137 = vrot.lane.b32.xlu0 %v135, %s136
      %v138 = vpop.permute.xlu0 %137
      %s139 = vtos %v138
      %v140 = vstv %s81
      %v141 = vlaneseq
      %v142 = vand.u32 %v141, 127
      %vm143 = vcmp.eq.s32.totalorder %v142, %v140
      %v144 = vstv %s139
      %v145 = vld [vmem:[#allocation4] ss:$0 sm:$0xff]
      %v146 = vsel %vm143, %v144, %v145
      %147 = vst [vmem:[#allocation4] sm:$0x1] %v146
      %s148 = scalar_lea.vmem [#allocation2], %s81
      %s149 = scalar_lea.vmem [#allocation2], %s139
      %v150 = vld [vmem:[%s148] ss:$0 sm:$0xff]
      %v151 = vld [vmem:[%s149] ss:$0 sm:$0xff]
      %152 = vst [vmem:[%s149] sm:$0x1] %v150
      %153 = vst [vmem:[%s148] sm:$0x1] %v151
      %s154 = scalar_lea.vmem [#allocation9], %s81
      %s155 = scalar_lea.vmem [#allocation9], %s139
      %v156 = vld [vmem:[%s154] ss:$0 sm:$0xff]
      %v157 = vld [vmem:[%s155] ss:$0 sm:$0xff]
      %158 = vst [vmem:[%s155] sm:$0x1] %v156
      %159 = vst [vmem:[%s154] sm:$0x1] %v157
      %vm160 = vcmp.ne.f32.partialorder %v151, 0.0
      %vm161 = vmand %vm143, %vm160
      %v162 = vsel %vm161, %v151, 1.0
      %v163 = vlaneseq
      %v164 = vand.u32 %v163, 127
      %v165 = vstv %s81
      %vm166 = vcmp.gt.s32.totalorder %v164, %v165
      %v167 = vsel %vm166, %v151, 0.0
      %v168 = vlaneseq
      %v169 = vshrl.u32 %v168, 7
      %v170 = vmov %v169
      %v171 = vld [vmem:[#allocation2] sm:$0xff]
      %v173 = vstv %s81
      %vm174 = vcmp.gt.s32.totalorder %v170, %v173
      %v175 = vsel %vm174, %v162, 1.0
      %v176 = vrcp.pop %v175
      %v177 = vmul.f32 %v171, %v176
      %vm178 = vmand %vm174, %vm143
      %v179 = vsel %vm178, %v177, 0.0
      %180 = vadd.xlane.f32.xlu0 %v179
      %v181 = vpop.xlane.xlu0 %180
      %v182 = vmul.f32 %v181, %v167
      %v183 = vsub.f32 %v177, %v182
      %184 = vst [vmem:[#allocation2] sm:$0xff] %v183
    $region29: #{custom-call.13} parent=1 // loop_footer
      %s85 = sadd.s32 1, %s81
    $region30: #{custom-call.13} parent=1 // loop_footer_branch
      %80 = sbr.rel target = $region26
    $region31: #{custom-call.13} parent=1 // loop_exit
      _
    %v185 = vld [vmem:[#allocation9] sm:$0xff]
    %s186 = scalar_lea.vmem [#allocation9], 8
    %s187 = scalar_lea.vmem [#allocation9], 16
    %s188 = scalar_lea.vmem [#allocation9], 24
    %s189 = scalar_lea.vmem [#allocation9], 32
    %s190 = scalar_lea.vmem [#allocation9], 40
    %s191 = scalar_lea.vmem [#allocation9], 48
    %s192 = scalar_lea.vmem [#allocation9], 56
    %s193 = scalar_lea.vmem [#allocation9], 64
    %s194 = scalar_lea.vmem [#allocation9], 72
    %s195 = scalar_lea.vmem [#allocation9], 80
    %s196 = scalar_lea.vmem [#allocation9], 88
    %s197 = scalar_lea.vmem [#allocation9], 96
    %s198 = scalar_lea.vmem [#allocation9], 104
    %s199 = scalar_lea.vmem [#allocation9], 112
    %s200 = scalar_lea.vmem [#allocation9], 120
    %201 = vxpose.xlu0.b32.start [1/16] %v185, 128
    %202 = vxpose.xlu0.b32.cont [2/16] 0, 128
    %203 = vxpose.xlu0.b32.cont [3/16] 0, 128
    %204 = vxpose.xlu0.b32.cont [4/16] 0, 128
    %205 = vxpose.xlu0.b32.cont [5/16] 0, 128
    %206 = vxpose.xlu0.b32.cont [6/16] 0, 128
    %207 = vxpose.xlu0.b32.cont [7/16] 0, 128
    %208 = vxpose.xlu0.b32.cont [8/16] 0, 128
    %209 = vxpose.xlu0.b32.cont [9/16] 0, 128
    %210 = vxpose.xlu0.b32.cont [10/16] 0, 128
    %211 = vxpose.xlu0.b32.cont [11/16] 0, 128
    %212 = vxpose.xlu0.b32.cont [12/16] 0, 128
    %213 = vxpose.xlu0.b32.cont [13/16] 0, 128
    %214 = vxpose.xlu0.b32.cont [14/16] 0, 128
    %215 = vxpose.xlu0.b32.cont [15/16] 0, 128
    %216 = vxpose.xlu0.b32.end [16/16] 0, 128
    %v217 = vpop.trf.xlu0
    %v218 = vpop.trf.xlu0
    %v219 = vpop.trf.xlu0
    %v220 = vpop.trf.xlu0
    %v221 = vpop.trf.xlu0
    %v222 = vpop.trf.xlu0
    %v223 = vpop.trf.xlu0
    %v224 = vpop.trf.xlu0
    %v225 = vpop.trf.xlu0
    %v226 = vpop.trf.xlu0
    %v227 = vpop.trf.xlu0
    %v228 = vpop.trf.xlu0
    %v229 = vpop.trf.xlu0
    %v230 = vpop.trf.xlu0
    %v231 = vpop.trf.xlu0
    %v232 = vpop.trf.xlu0
    %233 = vst [vmem:[#allocation7] sm:$0x1] %v217
    %s235 = sshllo.u32 0, 2
    %v237 = vld [vmem:[#allocation2] sm:%s235]
    %s238 = sshllo.u32 0, 2
    %239 = vst [vmem:[#allocation3] sm:%s238] %v237
    %s241 = sshllo.u32 0, 1
    %v243 = vld [vmem:[#allocation4] sm:%s241]
    %s244 = sshllo.u32 0, 1
    %245 = vst [vmem:[#allocation5] sm:%s244] %v243
    %s247 = sshllo.u32 0, 1
    %v249 = vld [vmem:[#allocation7] sm:%s247]
    %s250 = sshllo.u32 0, 1
    %251 = vst [vmem:[#allocation8] sm:%s250] %v249
    %p253 = scmp.gt.s32.totalorder 2, 0
    // Predicated region
    $region32: #{custom-call.13} parent=1 // pred_check
      %p254 = pneg %p253
    $region33: #{custom-call.13} parent=1 // pred_check_branch
      %256 = sbr.rel (%p254) target = $region35
    $region34: #{custom-call.13} parent=1 // pred_region
      %s257 = sshra.s32 2, 3
      %p258 = scmp.gt.s32.totalorder %s257, 0
      // Predicated region
      $region36: #{custom-call.13} parent=34 // pred_check
        %p259 = pneg %p258
      $region37: #{custom-call.13} parent=34 // pred_check_branch
        %261 = sbr.rel (%p259) target = $region39
      $region38: #{custom-call.13} parent=34 // pred_region
        %s262 = ssub.s32 %s257, 1
        %s263 = smul.u32 %s262, 128
        %s264 = sshra.s32 %s263, 4
        %s265 = scalar_lea.vmem [#allocation3], %s264
        %v266 = vld [vmem:[#allocation3] sm:$0xff]
        // While loop
        $region40: #{custom-call.13} parent=38 // loop_pre_header
          _
        $region41: #{custom-call.13} parent=38 // loop_header
          %s267 = sphi [#allocation3], %s289
          %s268 = sphi %s1, %s290
          %v269 = vphi %v266, %v291
          %s270 = ssub.s32 %s265, 64
          %p271 = scmp.gt.s32.totalorder %s267, %s270
        $region42: #{custom-call.13} parent=38 // loop_header_branch
          %273 = sbr.rel (%p271) target = $region46
        $region43: #{custom-call.13} parent=38 // loop_body
          %274 = vst [vmem:[%s268] sm:$0xff] %v269
          %v275 = vld [vmem:[%s267 + $0x8] sm:$0xff]
          %276 = vst [vmem:[%s268 + $0x8] sm:$0xff] %v275
          %v277 = vld [vmem:[%s267 + $0x10] sm:$0xff]
          %278 = vst [vmem:[%s268 + $0x10] sm:$0xff] %v277
          %v279 = vld [vmem:[%s267 + $0x18] sm:$0xff]
          %280 = vst [vmem:[%s268 + $0x18] sm:$0xff] %v279
          %v281 = vld [vmem:[%s267 + $0x20] sm:$0xff]
          %282 = vst [vmem:[%s268 + $0x20] sm:$0xff] %v281
          %v283 = vld [vmem:[%s267 + $0x28] sm:$0xff]
          %284 = vst [vmem:[%s268 + $0x28] sm:$0xff] %v283
          %v285 = vld [vmem:[%s267 + $0x30] sm:$0xff]
          %286 = vst [vmem:[%s268 + $0x30] sm:$0xff] %v285
          %v287 = vld [vmem:[%s267 + $0x38] sm:$0xff]
          %288 = vst [vmem:[%s268 + $0x38] sm:$0xff] %v287
        $region44: #{custom-call.13} parent=38 // loop_footer
          %s289 = scalar_lea.vmem %s267, 64
          %s290 = scalar_lea.vmem %s268, 64
          %v291 = vld [vmem:[%s267 + $0x40] sm:$0xff]
        $region45: #{custom-call.13} parent=38 // loop_footer_branch
          %292 = sbr.rel target = $region41
        $region46: #{custom-call.13} parent=38 // loop_exit
          _
        // While loop
        $region47: #{custom-call.13} parent=38 // loop_pre_header
          _
        $region48: #{custom-call.13} parent=38 // loop_header
          %s293 = sphi %s267, %s301
          %s294 = sphi %s268, %s302
          %v295 = vphi %v269, %v295
          %p296 = scmp.gt.s32.totalorder %s293, %s265
        $region49: #{custom-call.13} parent=38 // loop_header_branch
          %298 = sbr.rel (%p296) target = $region53
        $region50: #{custom-call.13} parent=38 // loop_body
          %v299 = vld [vmem:[%s293] sm:$0xff]
          %300 = vst [vmem:[%s294] sm:$0xff] %v299
        $region51: #{custom-call.13} parent=38 // loop_footer
          %s301 = scalar_lea.vmem %s293, 8
          %s302 = scalar_lea.vmem %s294, 8
        $region52: #{custom-call.13} parent=38 // loop_footer_branch
          %303 = sbr.rel target = $region48
        $region53: #{custom-call.13} parent=38 // loop_exit
          _
      $region39: #{custom-call.13} parent=34 // pred_fallthru
        _
      %s304 = sand.u32 2, 7
      %s305 = sshllo.u32 0, %s304
      %s306 = smul.u32 %s257, 128
      %s307 = sshra.s32 %s306, 4
      %s308 = scalar_lea.vmem %s1, %s307
      %s309 = smul.u32 %s257, 128
      %s310 = sshra.s32 %s309, 4
      %s311 = scalar_lea.vmem [#allocation3], %s310
      %v312 = vld [vmem:[%s311] sm:%s305]
      %313 = vst [vmem:[%s308] sm:%s305] %v312
    $region35: #{custom-call.13} parent=1 // pred_fallthru
      _
    // Predicated region
    $region54: #{custom-call.13} parent=1 // pred_check
      _
    $region55: #{custom-call.13} parent=1 // pred_check_branch
      %315 = sbr.rel (0) target = $region57
    $region56: #{custom-call.13} parent=1 // pred_region
      %s317 = ssub.s32 16, 16
      %318 = vsyncadd [#allocation6], %s317
      %s319 = sshll.u32 [#allocation5], 4
      %s320 = int_to_ptr.vmem [resolvable:$true] %s319
      %322 = dma.vmem_to_hbm [thread:$0]  %s320, 16, %s2, [#allocation6]
    $region57: #{custom-call.13} parent=1 // pred_fallthru
      _
    // Predicated region
    $region58: #{custom-call.13} parent=1 // pred_check
      _
    $region59: #{custom-call.13} parent=1 // pred_check_branch
      %324 = sbr.rel (0) target = $region61
    $region60: #{custom-call.13} parent=1 // pred_region
      %p326 = scmp.gt.s32.totalorder 1, 0
      // Predicated region
      $region62: #{custom-call.13} parent=60 // pred_check
        %p327 = pneg %p326
      $region63: #{custom-call.13} parent=60 // pred_check_branch
        %329 = sbr.rel (%p327) target = $region65
      $region64: #{custom-call.13} parent=60 // pred_region
        %s330 = sshra.s32 1, 3
        %p331 = scmp.gt.s32.totalorder %s330, 0
        // Predicated region
        $region66: #{custom-call.13} parent=64 // pred_check
          %p332 = pneg %p331
        $region67: #{custom-call.13} parent=64 // pred_check_branch
          %334 = sbr.rel (%p332) target = $region69
        $region68: #{custom-call.13} parent=64 // pred_region
          %s335 = ssub.s32 %s330, 1
          %s336 = smul.u32 %s335, 128
          %s337 = sshra.s32 %s336, 4
          %s338 = scalar_lea.vmem [#allocation8], %s337
          %v339 = vld [vmem:[#allocation8] sm:$0xff]
          // While loop
          $region70: #{custom-call.13} parent=68 // loop_pre_header
            _
          $region71: #{custom-call.13} parent=68 // loop_header
            %s340 = sphi [#allocation8], %s362
            %s341 = sphi %s3, %s363
            %v342 = vphi %v339, %v364
            %s343 = ssub.s32 %s338, 64
            %p344 = scmp.gt.s32.totalorder %s340, %s343
          $region72: #{custom-call.13} parent=68 // loop_header_branch
            %346 = sbr.rel (%p344) target = $region76
          $region73: #{custom-call.13} parent=68 // loop_body
            %347 = vst [vmem:[%s341] sm:$0xff] %v342
            %v348 = vld [vmem:[%s340 + $0x8] sm:$0xff]
            %349 = vst [vmem:[%s341 + $0x8] sm:$0xff] %v348
            %v350 = vld [vmem:[%s340 + $0x10] sm:$0xff]
            %351 = vst [vmem:[%s341 + $0x10] sm:$0xff] %v350
            %v352 = vld [vmem:[%s340 + $0x18] sm:$0xff]
            %353 = vst [vmem:[%s341 + $0x18] sm:$0xff] %v352
            %v354 = vld [vmem:[%s340 + $0x20] sm:$0xff]
            %355 = vst [vmem:[%s341 + $0x20] sm:$0xff] %v354
            %v356 = vld [vmem:[%s340 + $0x28] sm:$0xff]
            %357 = vst [vmem:[%s341 + $0x28] sm:$0xff] %v356
            %v358 = vld [vmem:[%s340 + $0x30] sm:$0xff]
            %359 = vst [vmem:[%s341 + $0x30] sm:$0xff] %v358
            %v360 = vld [vmem:[%s340 + $0x38] sm:$0xff]
            %361 = vst [vmem:[%s341 + $0x38] sm:$0xff] %v360
          $region74: #{custom-call.13} parent=68 // loop_footer
            %s362 = scalar_lea.vmem %s340, 64
            %s363 = scalar_lea.vmem %s341, 64
            %v364 = vld [vmem:[%s340 + $0x40] sm:$0xff]
          $region75: #{custom-call.13} parent=68 // loop_footer_branch
            %365 = sbr.rel target = $region71
          $region76: #{custom-call.13} parent=68 // loop_exit
            _
          // While loop
          $region77: #{custom-call.13} parent=68 // loop_pre_header
            _
          $region78: #{custom-call.13} parent=68 // loop_header
            %s366 = sphi %s340, %s374
            %s367 = sphi %s341, %s375
            %v368 = vphi %v342, %v368
            %p369 = scmp.gt.s32.totalorder %s366, %s338
          $region79: #{custom-call.13} parent=68 // loop_header_branch
            %371 = sbr.rel (%p369) target = $region83
          $region80: #{custom-call.13} parent=68 // loop_body
            %v372 = vld [vmem:[%s366] sm:$0xff]
            %373 = vst [vmem:[%s367] sm:$0xff] %v372
          $region81: #{custom-call.13} parent=68 // loop_footer
            %s374 = scalar_lea.vmem %s366, 8
            %s375 = scalar_lea.vmem %s367, 8
          $region82: #{custom-call.13} parent=68 // loop_footer_branch
            %376 = sbr.rel target = $region78
          $region83: #{custom-call.13} parent=68 // loop_exit
            _
        $region69: #{custom-call.13} parent=64 // pred_fallthru
          _
        %s377 = sand.u32 1, 7
        %s378 = sshllo.u32 0, %s377
        %s379 = smul.u32 %s330, 128
        %s380 = sshra.s32 %s379, 4
        %s381 = scalar_lea.vmem %s3, %s380
        %s382 = smul.u32 %s330, 128
        %s383 = sshra.s32 %s382, 4
        %s384 = scalar_lea.vmem [#allocation8], %s383
        %v385 = vld [vmem:[%s384] sm:%s378]
        %386 = vst [vmem:[%s381] sm:%s378] %v385
      $region65: #{custom-call.13} parent=60 // pred_fallthru
        _
    $region61: #{custom-call.13} parent=1 // pred_fallthru
      _
    // Predicated region
    $region84: #{custom-call.13} parent=1 // pred_check
      _
    $region85: #{custom-call.13} parent=1 // pred_check_branch
      %388 = sbr.rel (0) target = $region87
    $region86: #{custom-call.13} parent=1 // pred_region
      %389 = dma.done [#allocation6], 16
    $region87: #{custom-call.13} parent=1 // pred_fallthru
      _
    // Predicated region
    $region88: #{custom-call.13} parent=1 // pred_check
      _
    $region89: #{custom-call.13} parent=1 // pred_check_branch
      %391 = sbr.rel (0) target = $region91
    $region90: #{custom-call.13} parent=1 // pred_region
      _
    $region91: #{custom-call.13} parent=1 // pred_fallthru
      _
    %392 = vsyncpa [#allocation6], 1

// kernel: custom-call.14
$region0: #{custom-call.14}
  %s0 = inlined_call_operand.vmem [shape: f32[1,2,2], index: 0, kind: input, shape index: {}]
  %s1 = inlined_call_operand.vmem [shape: f32[1,2,2], index: 1, kind: output, shape index: {}]
  $region1: #{custom-call.14} parent=0
    #allocation0 [shape = 'u8[4096]{0}', space=vmem, size = 0x1000, scoped, tag = 'operand span for operand 0']
    #allocation1 [shape = 'u8[1024]{0}', space=vmem, size = 0x400, scoped, tag = 'packed  for operand 0']
    #allocation2 [shape = 'u8[4096]{0}', space=vmem, size = 0x1000, scoped, tag = 'operand span for operand 1']
    #allocation3 [shape = 'u8[1024]{0}', space=vmem, size = 0x400, scoped, tag = 'packed  for operand 1']
    #allocation4 [shape = 'f32[2,2]{1,0}', space=vmem, size = 0x1000, scoped, tag = 'rescaled input a']
    // Predicated region
    $region2: #{custom-call.14} parent=1 // pred_check
      _
    $region3: #{custom-call.14} parent=1 // pred_check_branch
      %3 = sbr.rel (0) target = $region5
    $region4: #{custom-call.14} parent=1 // pred_region
      // Predicated region
      $region6: #{custom-call.14} parent=4 // pred_check
        _
      $region7: #{custom-call.14} parent=4 // pred_check_branch
        %5 = sbr.rel target = $region9
      $region8: #{custom-call.14} parent=4 // pred_region
        // Predicated region
        $region21: #{custom-call.14} parent=8 // pred_check
          _
        $region22: #{custom-call.14} parent=8 // pred_check_branch
          %20 = sbr.rel (0) target = $region24
        $region23: #{custom-call.14} parent=8 // pred_region
          loop: start=0, step=1, limit=1
          $region25: #{custom-call.14} parent=23 // loop_pre_header
            _
          $region26: #{custom-call.14} parent=23 // loop_header
            %s23 = sphi 0, %s27
            %p24 = scmp.ge.s32.totalorder %s23, 1
            %s28 = sphi %s0, %s0
            %s29 = sphi [#allocation1], [#allocation1]
          $region27: #{custom-call.14} parent=23 // loop_header_branch
            %26 = sbr.rel (%p24) target = $region31
          $region28: #{custom-call.14} parent=23 // loop_body
            %v30 = vld [vmem:[%s28] sm:$0x3]
            %31 = vst [vmem:[%s29] sm:$0x3] %v30
          $region29: #{custom-call.14} parent=23 // loop_footer
            %s27 = sadd.s32 1, %s23
          $region30: #{custom-call.14} parent=23 // loop_footer_branch
            %22 = sbr.rel target = $region26
          $region31: #{custom-call.14} parent=23 // loop_exit
            _
        $region24: #{custom-call.14} parent=8 // pred_fallthru
          _
      $region9: #{custom-call.14} parent=4 // pred_fallthru
        _
      // Predicated region
      $region10: #{custom-call.14} parent=4 // pred_check
        _
      $region11: #{custom-call.14} parent=4 // pred_check_branch
        %7 = sbr.rel (0) target = $region13
      $region12: #{custom-call.14} parent=4 // pred_region
        loop: start=0, step=1, limit=1
        $region14: #{custom-call.14} parent=12 // loop_pre_header
          _
        $region15: #{custom-call.14} parent=12 // loop_header
          %s10 = sphi 0, %s14
          %p11 = scmp.ge.s32.totalorder %s10, 1
          %s15 = sphi %s0, %s0
          %s16 = sphi [#allocation1], [#allocation1]
        $region16: #{custom-call.14} parent=12 // loop_header_branch
          %13 = sbr.rel (%p11) target = $region20
        $region17: #{custom-call.14} parent=12 // loop_body
          %v17 = vld [vmem:[%s15] sm:$0x3]
          %18 = vst [vmem:[%s16] sm:$0x3] %v17
        $region18: #{custom-call.14} parent=12 // loop_footer
          %s14 = sadd.s32 1, %s10
        $region19: #{custom-call.14} parent=12 // loop_footer_branch
          %9 = sbr.rel target = $region15
        $region20: #{custom-call.14} parent=12 // loop_exit
          _
      $region13: #{custom-call.14} parent=4 // pred_fallthru
        _
    $region5: #{custom-call.14} parent=1 // pred_fallthru
      _
    %32 = vnop
    %s34 = sshllo.u32 0, 2
    %v35 = vld [vmem:[#allocation1] sm:%s34]
    %36 = vst [vmem:[#allocation0] sm:%s34] %v35
    %v37 = vlaneseq
    %v38 = vand.u32 %v37, 127
    %vm39 = vcmp.lt.s32.totalorder %v38, 2
    %v40 = vlaneseq
    %v41 = vshrl.u32 %v40, 7
    %vm43 = vcmp.eq.s32.totalorder %v41, %v38
    %v44 = vld [vmem:[#allocation0] sm:$0xff]
    %v45 = vsel %vm43, %v44, 0.0
    %46 = vadd.xlane.f32.xlu0 %v45
    %v47 = vpop.xlane.xlu0 %46
    %vm48 = vcmp.le.s32.totalorder %v41, %v38
    %vm49 = vmand %vm48, %vm39
    %v50 = vsel %vm49, %v44, 0.0
    %v51 = vrcp.pop %v47
    %v52 = vmul.f32 %v50, %v51
    %53 = vst [vmem:[#allocation4] sm:$0xff] %v52
    %v54 = vlaneseq
    %v55 = vand.u32 %v54, 127
    %v56 = vlaneseq
    %v57 = vshrl.u32 %v56, 7
    %vm59 = vcmp.eq.s32.totalorder %v55, %v57
    %v60 = vlaneseq
    %v61 = vand.u32 %v60, 127
    %vm62 = vcmp.eq.s32.totalorder %v61, 1
    %v63 = vsel %vm62, 1.0, -1.0
    %v64 = vsel %vm59, %v63, 0.0
    %v65 = vld [vmem:[#allocation4] ss:$0 sm:$0xff]
    %v66 = vxor.u32 %v65, 2147483648
    %v67 = vlaneseq
    %v68 = vand.u32 %v67, 127
    %vm69 = vcmp.eq.s32.totalorder %v68, 0
    %v70 = vmul.f32 %v66, %v64
    %71 = vadd.xlane.f32.xlu0 %v70
    %v72 = vpop.xlane.xlu0 %71
    %v73 = vsel %vm69, %v72, %v64
    %v74 = vrcp.pop %v47
    %v75 = vmul.f32 %v73, %v74
    %vm76 = vweird.f32 %v47
    %v77 = vsel %vm76, %v73, %v75
    %78 = vst [vmem:[#allocation2] sm:$0xff] %v77
    %s80 = sshllo.u32 0, 2
    %v82 = vld [vmem:[#allocation2] sm:%s80]
    %s83 = sshllo.u32 0, 2
    %84 = vst [vmem:[#allocation3] sm:%s83] %v82
    // Predicated region
    $region32: #{custom-call.14} parent=1 // pred_check
      _
    $region33: #{custom-call.14} parent=1 // pred_check_branch
      %86 = sbr.rel (0) target = $region35
    $region34: #{custom-call.14} parent=1 // pred_region
      // Predicated region
      $region36: #{custom-call.14} parent=34 // pred_check
        _
      $region37: #{custom-call.14} parent=34 // pred_check_branch
        %88 = sbr.rel target = $region39
      $region38: #{custom-call.14} parent=34 // pred_region
        // Predicated region
        $region51: #{custom-call.14} parent=38 // pred_check
          _
        $region52: #{custom-call.14} parent=38 // pred_check_branch
          %103 = sbr.rel (0) target = $region54
        $region53: #{custom-call.14} parent=38 // pred_region
          loop: start=0, step=1, limit=1
          $region55: #{custom-call.14} parent=53 // loop_pre_header
            _
          $region56: #{custom-call.14} parent=53 // loop_header
            %s106 = sphi 0, %s110
            %p107 = scmp.ge.s32.totalorder %s106, 1
            %s111 = sphi [#allocation3], [#allocation3]
            %s112 = sphi %s1, %s1
          $region57: #{custom-call.14} parent=53 // loop_header_branch
            %109 = sbr.rel (%p107) target = $region61
          $region58: #{custom-call.14} parent=53 // loop_body
            %v113 = vld [vmem:[%s111] sm:$0x3]
            %114 = vst [vmem:[%s112] sm:$0x3] %v113
          $region59: #{custom-call.14} parent=53 // loop_footer
            %s110 = sadd.s32 1, %s106
          $region60: #{custom-call.14} parent=53 // loop_footer_branch
            %105 = sbr.rel target = $region56
          $region61: #{custom-call.14} parent=53 // loop_exit
            _
        $region54: #{custom-call.14} parent=38 // pred_fallthru
          _
      $region39: #{custom-call.14} parent=34 // pred_fallthru
        _
      // Predicated region
      $region40: #{custom-call.14} parent=34 // pred_check
        _
      $region41: #{custom-call.14} parent=34 // pred_check_branch
        %90 = sbr.rel (0) target = $region43
      $region42: #{custom-call.14} parent=34 // pred_region
        loop: start=0, step=1, limit=1
        $region44: #{custom-call.14} parent=42 // loop_pre_header
          _
        $region45: #{custom-call.14} parent=42 // loop_header
          %s93 = sphi 0, %s97
          %p94 = scmp.ge.s32.totalorder %s93, 1
          %s98 = sphi [#allocation3], [#allocation3]
          %s99 = sphi %s1, %s1
        $region46: #{custom-call.14} parent=42 // loop_header_branch
          %96 = sbr.rel (%p94) target = $region50
        $region47: #{custom-call.14} parent=42 // loop_body
          %v100 = vld [vmem:[%s98] sm:$0x3]
          %101 = vst [vmem:[%s99] sm:$0x3] %v100
        $region48: #{custom-call.14} parent=42 // loop_footer
          %s97 = sadd.s32 1, %s93
        $region49: #{custom-call.14} parent=42 // loop_footer_branch
          %92 = sbr.rel target = $region45
        $region50: #{custom-call.14} parent=42 // loop_exit
          _
      $region43: #{custom-call.14} parent=34 // pred_fallthru
        _
    $region35: #{custom-call.14} parent=1 // pred_fallthru
      _
    %115 = vnop

// kernel: custom-call.15
$region0: #{custom-call.15}
  %s0 = inlined_call_operand.vmem [shape: f32[1,2,2], index: 0, kind: input, shape index: {}]
  %s1 = inlined_call_operand.vmem [shape: f32[1,2,2], index: 1, kind: output, shape index: {}]
  $region1: #{custom-call.15} parent=0
    #allocation0 [shape = 'u8[4096]{0}', space=vmem, size = 0x1000, scoped, tag = 'operand span for operand 0']
    #allocation1 [shape = 'u8[1024]{0}', space=vmem, size = 0x400, scoped, tag = 'packed  for operand 0']
    #allocation2 [shape = 'u8[4096]{0}', space=vmem, size = 0x1000, scoped, tag = 'operand span for operand 1']
    #allocation3 [shape = 'u8[1024]{0}', space=vmem, size = 0x400, scoped, tag = 'packed  for operand 1']
    #allocation4 [shape = 'f32[2,2]{1,0}', space=vmem, size = 0x1000, scoped, tag = 'rescaled input a']
    // Predicated region
    $region2: #{custom-call.15} parent=1 // pred_check
      _
    $region3: #{custom-call.15} parent=1 // pred_check_branch
      %3 = sbr.rel (0) target = $region5
    $region4: #{custom-call.15} parent=1 // pred_region
      // Predicated region
      $region6: #{custom-call.15} parent=4 // pred_check
        _
      $region7: #{custom-call.15} parent=4 // pred_check_branch
        %5 = sbr.rel target = $region9
      $region8: #{custom-call.15} parent=4 // pred_region
        // Predicated region
        $region21: #{custom-call.15} parent=8 // pred_check
          _
        $region22: #{custom-call.15} parent=8 // pred_check_branch
          %20 = sbr.rel (0) target = $region24
        $region23: #{custom-call.15} parent=8 // pred_region
          loop: start=0, step=1, limit=1
          $region25: #{custom-call.15} parent=23 // loop_pre_header
            _
          $region26: #{custom-call.15} parent=23 // loop_header
            %s23 = sphi 0, %s27
            %p24 = scmp.ge.s32.totalorder %s23, 1
            %s28 = sphi %s0, %s0
            %s29 = sphi [#allocation1], [#allocation1]
          $region27: #{custom-call.15} parent=23 // loop_header_branch
            %26 = sbr.rel (%p24) target = $region31
          $region28: #{custom-call.15} parent=23 // loop_body
            %v30 = vld [vmem:[%s28] sm:$0x3]
            %31 = vst [vmem:[%s29] sm:$0x3] %v30
          $region29: #{custom-call.15} parent=23 // loop_footer
            %s27 = sadd.s32 1, %s23
          $region30: #{custom-call.15} parent=23 // loop_footer_branch
            %22 = sbr.rel target = $region26
          $region31: #{custom-call.15} parent=23 // loop_exit
            _
        $region24: #{custom-call.15} parent=8 // pred_fallthru
          _
      $region9: #{custom-call.15} parent=4 // pred_fallthru
        _
      // Predicated region
      $region10: #{custom-call.15} parent=4 // pred_check
        _
      $region11: #{custom-call.15} parent=4 // pred_check_branch
        %7 = sbr.rel (0) target = $region13
      $region12: #{custom-call.15} parent=4 // pred_region
        loop: start=0, step=1, limit=1
        $region14: #{custom-call.15} parent=12 // loop_pre_header
          _
        $region15: #{custom-call.15} parent=12 // loop_header
          %s10 = sphi 0, %s14
          %p11 = scmp.ge.s32.totalorder %s10, 1
          %s15 = sphi %s0, %s0
          %s16 = sphi [#allocation1], [#allocation1]
        $region16: #{custom-call.15} parent=12 // loop_header_branch
          %13 = sbr.rel (%p11) target = $region20
        $region17: #{custom-call.15} parent=12 // loop_body
          %v17 = vld [vmem:[%s15] sm:$0x3]
          %18 = vst [vmem:[%s16] sm:$0x3] %v17
        $region18: #{custom-call.15} parent=12 // loop_footer
          %s14 = sadd.s32 1, %s10
        $region19: #{custom-call.15} parent=12 // loop_footer_branch
          %9 = sbr.rel target = $region15
        $region20: #{custom-call.15} parent=12 // loop_exit
          _
      $region13: #{custom-call.15} parent=4 // pred_fallthru
        _
    $region5: #{custom-call.15} parent=1 // pred_fallthru
      _
    %32 = vnop
    %s34 = sshllo.u32 0, 2
    %v35 = vld [vmem:[#allocation1] sm:%s34]
    %36 = vst [vmem:[#allocation0] sm:%s34] %v35
    %v37 = vlaneseq
    %v38 = vand.u32 %v37, 127
    %vm39 = vcmp.lt.s32.totalorder %v38, 2
    %v40 = vlaneseq
    %v41 = vshrl.u32 %v40, 7
    %vm43 = vcmp.eq.s32.totalorder %v41, %v38
    %v44 = vld [vmem:[#allocation0] sm:$0xff]
    %v45 = vsel %vm43, %v44, 0.0
    %46 = vadd.xlane.f32.xlu0 %v45
    %v47 = vpop.xlane.xlu0 %46
    %vm48 = vcmp.ge.s32.totalorder %v41, %v38
    %vm49 = vmand %vm48, %vm39
    %v50 = vsel %vm49, %v44, 0.0
    %v51 = vrcp.pop %v47
    %v52 = vmul.f32 %v50, %v51
    %53 = vst [vmem:[#allocation4] sm:$0xff] %v52
    %v54 = vlaneseq
    %v55 = vand.u32 %v54, 127
    %v56 = vlaneseq
    %v57 = vshrl.u32 %v56, 7
    %vm59 = vcmp.eq.s32.totalorder %v55, %v57
    %v60 = vlaneseq
    %v61 = vand.u32 %v60, 127
    %vm62 = vcmp.eq.s32.totalorder %v61, 0
    %v63 = vsel %vm62, 1.0, -1.0
    %v64 = vsel %vm59, %v63, 0.0
    %s65 = scalar_lea.vmem [#allocation4], 1
    %v66 = vld [vmem:[%s65] ss:$0 sm:$0xff]
    %v67 = vxor.u32 %v66, 2147483648
    %v68 = vlaneseq
    %v69 = vand.u32 %v68, 127
    %vm70 = vcmp.eq.s32.totalorder %v69, 1
    %v71 = vmul.f32 %v67, %v64
    %72 = vadd.xlane.f32.xlu0 %v71
    %v73 = vpop.xlane.xlu0 %72
    %v74 = vsel %vm70, %v73, %v64
    %v75 = vrcp.pop %v47
    %v76 = vmul.f32 %v74, %v75
    %vm77 = vweird.f32 %v47
    %v78 = vsel %vm77, %v74, %v76
    %79 = vst [vmem:[#allocation2] sm:$0xff] %v78
    %s81 = sshllo.u32 0, 2
    %v83 = vld [vmem:[#allocation2] sm:%s81]
    %s84 = sshllo.u32 0, 2
    %85 = vst [vmem:[#allocation3] sm:%s84] %v83
    // Predicated region
    $region32: #{custom-call.15} parent=1 // pred_check
      _
    $region33: #{custom-call.15} parent=1 // pred_check_branch
      %87 = sbr.rel (0) target = $region35
    $region34: #{custom-call.15} parent=1 // pred_region
      // Predicated region
      $region36: #{custom-call.15} parent=34 // pred_check
        _
      $region37: #{custom-call.15} parent=34 // pred_check_branch
        %89 = sbr.rel target = $region39
      $region38: #{custom-call.15} parent=34 // pred_region
        // Predicated region
        $region51: #{custom-call.15} parent=38 // pred_check
          _
        $region52: #{custom-call.15} parent=38 // pred_check_branch
          %104 = sbr.rel (0) target = $region54
        $region53: #{custom-call.15} parent=38 // pred_region
          loop: start=0, step=1, limit=1
          $region55: #{custom-call.15} parent=53 // loop_pre_header
            _
          $region56: #{custom-call.15} parent=53 // loop_header
            %s107 = sphi 0, %s111
            %p108 = scmp.ge.s32.totalorder %s107, 1
            %s112 = sphi [#allocation3], [#allocation3]
            %s113 = sphi %s1, %s1
          $region57: #{custom-call.15} parent=53 // loop_header_branch
            %110 = sbr.rel (%p108) target = $region61
          $region58: #{custom-call.15} parent=53 // loop_body
            %v114 = vld [vmem:[%s112] sm:$0x3]
            %115 = vst [vmem:[%s113] sm:$0x3] %v114
          $region59: #{custom-call.15} parent=53 // loop_footer
            %s111 = sadd.s32 1, %s107
          $region60: #{custom-call.15} parent=53 // loop_footer_branch
            %106 = sbr.rel target = $region56
          $region61: #{custom-call.15} parent=53 // loop_exit
            _
        $region54: #{custom-call.15} parent=38 // pred_fallthru
          _
      $region39: #{custom-call.15} parent=34 // pred_fallthru
        _
      // Predicated region
      $region40: #{custom-call.15} parent=34 // pred_check
        _
      $region41: #{custom-call.15} parent=34 // pred_check_branch
        %91 = sbr.rel (0) target = $region43
      $region42: #{custom-call.15} parent=34 // pred_region
        loop: start=0, step=1, limit=1
        $region44: #{custom-call.15} parent=42 // loop_pre_header
          _
        $region45: #{custom-call.15} parent=42 // loop_header
          %s94 = sphi 0, %s98
          %p95 = scmp.ge.s32.totalorder %s94, 1
          %s99 = sphi [#allocation3], [#allocation3]
          %s100 = sphi %s1, %s1
        $region46: #{custom-call.15} parent=42 // loop_header_branch
          %97 = sbr.rel (%p95) target = $region50
        $region47: #{custom-call.15} parent=42 // loop_body
          %v101 = vld [vmem:[%s99] sm:$0x3]
          %102 = vst [vmem:[%s100] sm:$0x3] %v101
        $region48: #{custom-call.15} parent=42 // loop_footer
          %s98 = sadd.s32 1, %s94
        $region49: #{custom-call.15} parent=42 // loop_footer_branch
          %93 = sbr.rel target = $region45
        $region50: #{custom-call.15} parent=42 // loop_exit
          _
      $region43: #{custom-call.15} parent=34 // pred_fallthru
        _
    $region35: #{custom-call.15} parent=1 // pred_fallthru
      _
    %116 = vnop

// kernel: custom-call.20
$region0: #{custom-call.20}
  %s0 = inlined_call_operand.hbm [shape: f32[64,3], index: 0, kind: input, shape index: {}]
  %s1 = inlined_call_operand.vmem [shape: f32[64,3], index: 1, kind: output, shape index: {0}]
  %s2 = inlined_call_operand.vmem [shape: f32[3], index: 2, kind: output, shape index: {1}]
  %3 = xla_tuple %s1, %s2
  $region1: #{custom-call.20} parent=0
    #allocation0 [shape = 'u8[32768]{0}', space=vmem, size = 0x8000, scoped, tag = 'operand span for operand 0']
    #allocation1 [shape = 's32[1]{0}', space=sflag, size = 0x4, scoped, tag = 'scoped memory for custom-call.20']
    #allocation2 [shape = 'u8[32768]{0}', space=vmem, size = 0x8000, scoped, tag = 'operand span for operand 1']
    #allocation3 [shape = 'u8[4096]{0}', space=vmem, size = 0x1000, scoped, tag = 'operand span for operand 2']
    #allocation4 [shape = 'u8[512]{0}', space=vmem, size = 0x400, scoped, tag = 'packed  for operand 2']
    #allocation5 [shape = 'f32[64,128]{1,0}', space=vmem, size = 0x8000, scoped, tag = 'scratch for Householder reflectors']
    %4 = vsyncpa [#allocation1], 0
    %s6 = ssub.s32 1024, 1024
    %7 = vsyncadd [#allocation1], %s6
    %s8 = sshll.u32 [#allocation0], 4
    %s9 = int_to_ptr.vmem [resolvable:$true] %s8
    %14 = dma.hbm_to_vmem [thread:$0]  %s0, 1024, %s9, [#allocation1], 128, 128, 8
    %15 = dma.done [#allocation1], 1024
    %v16 = vld [vmem:[#allocation0] sm:$0xff]
    %17 = vst [vmem:[#allocation2] sm:$0xff] %v16
    %s18 = scalar_lea.vmem [#allocation2], 8
    %s19 = scalar_lea.vmem [#allocation0], 8
    %v20 = vld [vmem:[%s19] sm:$0xff]
    %21 = vst [vmem:[%s18] sm:$0xff] %v20
    %s22 = scalar_lea.vmem [#allocation2], 16
    %s23 = scalar_lea.vmem [#allocation0], 16
    %v24 = vld [vmem:[%s23] sm:$0xff]
    %25 = vst [vmem:[%s22] sm:$0xff] %v24
    %s26 = scalar_lea.vmem [#allocation2], 24
    %s27 = scalar_lea.vmem [#allocation0], 24
    %v28 = vld [vmem:[%s27] sm:$0xff]
    %29 = vst [vmem:[%s26] sm:$0xff] %v28
    %s30 = scalar_lea.vmem [#allocation2], 32
    %s31 = scalar_lea.vmem [#allocation0], 32
    %v32 = vld [vmem:[%s31] sm:$0xff]
    %33 = vst [vmem:[%s30] sm:$0xff] %v32
    %s34 = scalar_lea.vmem [#allocation2], 40
    %s35 = scalar_lea.vmem [#allocation0], 40
    %v36 = vld [vmem:[%s35] sm:$0xff]
    %37 = vst [vmem:[%s34] sm:$0xff] %v36
    %s38 = scalar_lea.vmem [#allocation2], 48
    %s39 = scalar_lea.vmem [#allocation0], 48
    %v40 = vld [vmem:[%s39] sm:$0xff]
    %41 = vst [vmem:[%s38] sm:$0xff] %v40
    %s42 = scalar_lea.vmem [#allocation2], 56
    %s43 = scalar_lea.vmem [#allocation0], 56
    %v44 = vld [vmem:[%s43] sm:$0xff]
    %45 = vst [vmem:[%s42] sm:$0xff] %v44
    %46 = vst [vmem:[#allocation3] sm:$0x1] 0.0
    loop: start=0, step=1, limit=3
    $region2: #{custom-call.20} parent=1 // loop_pre_header
      _
    $region3: #{custom-call.20} parent=1 // loop_header
      %s48 = sphi 0, %s52
      %p49 = scmp.ge.s32.totalorder %s48, 3
    $region4: #{custom-call.20} parent=1 // loop_header_branch
      %51 = sbr.rel (%p49) target = $region8
    $region5: #{custom-call.20} parent=1 // loop_body
      %v53 = vld [vmem:[#allocation2] sm:$0xff]
      %v54 = vlaneseq
      %v55 = vshrl.u32 %v54, 7
      %v57 = vstv %s48
      %vm58 = vcmp.gt.s32.totalorder %v55, %v57
      %v59 = vsel %vm58, %v53, 0.0
      %v60 = vmul.f32 %v59, %v59
      %s61 = scalar_lea.vmem [#allocation2], 8
      %v62 = vld [vmem:[%s61] sm:$0xff]
      %v63 = vlaneseq
      %v64 = vshrl.u32 %v63, 7
      %v65 = vadd.s32 %v64, 8
      %v66 = vstv %s48
      %vm67 = vcmp.gt.s32.totalorder %v65, %v66
      %v68 = vsel %vm67, %v62, 0.0
      %v69 = vmul.f32 %v68, %v68
      %v70 = vadd.f32 %v60, %v69
      %s71 = scalar_lea.vmem [#allocation2], 16
      %v72 = vld [vmem:[%s71] sm:$0xff]
      %v73 = vlaneseq
      %v74 = vshrl.u32 %v73, 7
      %v75 = vadd.s32 %v74, 16
      %v76 = vstv %s48
      %vm77 = vcmp.gt.s32.totalorder %v75, %v76
      %v78 = vsel %vm77, %v72, 0.0
      %v79 = vmul.f32 %v78, %v78
      %v80 = vadd.f32 %v70, %v79
      %s81 = scalar_lea.vmem [#allocation2], 24
      %v82 = vld [vmem:[%s81] sm:$0xff]
      %v83 = vlaneseq
      %v84 = vshrl.u32 %v83, 7
      %v85 = vadd.s32 %v84, 24
      %v86 = vstv %s48
      %vm87 = vcmp.gt.s32.totalorder %v85, %v86
      %v88 = vsel %vm87, %v82, 0.0
      %v89 = vmul.f32 %v88, %v88
      %v90 = vadd.f32 %v80, %v89
      %s91 = scalar_lea.vmem [#allocation2], 32
      %v92 = vld [vmem:[%s91] sm:$0xff]
      %v93 = vlaneseq
      %v94 = vshrl.u32 %v93, 7
      %v95 = vadd.s32 %v94, 32
      %v96 = vstv %s48
      %vm97 = vcmp.gt.s32.totalorder %v95, %v96
      %v98 = vsel %vm97, %v92, 0.0
      %v99 = vmul.f32 %v98, %v98
      %v100 = vadd.f32 %v90, %v99
      %s101 = scalar_lea.vmem [#allocation2], 40
      %v102 = vld [vmem:[%s101] sm:$0xff]
      %v103 = vlaneseq
      %v104 = vshrl.u32 %v103, 7
      %v105 = vadd.s32 %v104, 40
      %v106 = vstv %s48
      %vm107 = vcmp.gt.s32.totalorder %v105, %v106
      %v108 = vsel %vm107, %v102, 0.0
      %v109 = vmul.f32 %v108, %v108
      %v110 = vadd.f32 %v100, %v109
      %s111 = scalar_lea.vmem [#allocation2], 48
      %v112 = vld [vmem:[%s111] sm:$0xff]
      %v113 = vlaneseq
      %v114 = vshrl.u32 %v113, 7
      %v115 = vadd.s32 %v114, 48
      %v116 = vstv %s48
      %vm117 = vcmp.gt.s32.totalorder %v115, %v116
      %v118 = vsel %vm117, %v112, 0.0
      %v119 = vmul.f32 %v118, %v118
      %v120 = vadd.f32 %v110, %v119
      %s121 = scalar_lea.vmem [#allocation2], 56
      %v122 = vld [vmem:[%s121] sm:$0xff]
      %v123 = vlaneseq
      %v124 = vshrl.u32 %v123, 7
      %v125 = vadd.s32 %v124, 56
      %v126 = vstv %s48
      %vm127 = vcmp.gt.s32.totalorder %v125, %v126
      %vm128 = vcmp.lt.s32.totalorder %v125, 64
      %vm129 = vmand %vm127, %vm128
      %v130 = vsel %vm129, %v122, 0.0
      %v131 = vmul.f32 %v130, %v130
      %v132 = vadd.f32 %v120, %v131
      %v133 = vrot.slane %v132, 4
      %v134 = vadd.f32 %v132, %v133
      %v135 = vrot.slane %v134, 2
      %v136 = vadd.f32 %v134, %v135
      %v137 = vrot.slane %v136, 1
      %v138 = vadd.f32 %v136, %v137
      %v139 = vrsqrt.pop %v138
      %v140 = vmul.f32 %v138, %v139
      %vm141 = vcmp.eq.f32.partialorder %v138, inf
      %v142 = vsel %vm141, %v138, %v140
      %vm143 = vcmp.eq.f32.partialorder %v138, 0.0
      %v144 = vand.u32 %v138, 2147483648
      %v145 = vsel %vm143, %v144, %v142
      %vm146 = vcmp.eq.f32.partialorder %v138, 0.0
      %s147 = sshrl.u32 %s48, 3
      %s148 = sand.u32 %s48, 7
      %s149 = smul.addr %s147, 8
      %s150 = sadd.s32 %s148, %s149
      %s151 = scalar_lea.vmem [#allocation2], %s150
      %v152 = vld [vmem:[%s151] ss:$0 sm:$0xff]
      %v153 = vand.u32 2147483647, %v152
      %v154 = vmax.f32 %v153, 0.0
      %v155 = vand.u32 2147483647, %v145
      %v156 = vmax.f32 %v154, %v155
      %v157 = vrcp.pop %v156
      %v158 = vmul.f32 %v153, %v157
      %v159 = vmul.f32 %v158, %v158
      %v160 = vrcp.pop %v156
      %v161 = vmul.f32 0.0, %v160
      %v162 = vmul.f32 %v161, %v161
      %v163 = vadd.f32 %v159, %v162
      %v164 = vrcp.pop %v156
      %v165 = vmul.f32 %v155, %v164
      %v166 = vmul.f32 %v165, %v165
      %v167 = vadd.f32 %v163, %v166
      %vm168 = vcmp.eq.f32.partialorder %v156, 0.0
      %v169 = vrsqrt.pop %v167
      %v170 = vmul.f32 %v167, %v169
      %vm171 = vcmp.eq.f32.partialorder %v167, inf
      %v172 = vsel %vm171, %v167, %v170
      %vm173 = vcmp.eq.f32.partialorder %v167, 0.0
      %v174 = vand.u32 %v167, 2147483648
      %v175 = vsel %vm173, %v174, %v172
      %v176 = vmul.f32 %v156, %v175
      %v177 = vsel %vm168, 0.0, %v176
      %vm178 = vcmp.lt.f32.partialorder %v152, 0.0
      %v179 = vxor.u32 %v177, 2147483648
      %v180 = vsel %vm178, %v177, %v179
      %v181 = vsub.f32 %v180, %v152
      %v182 = vrcp.pop %v180
      %v183 = vmul.f32 %v181, %v182
      %v184 = vsel %vm146, %v152, %v180
      %v185 = vsel %vm146, 0.0, %v183
      %v186 = vsub.f32 %v152, %v184
      %s187 = smov [#allocation2]
      %v188 = vlaneseq
      %v189 = vshrl.u32 %v188, 7
      %v190 = vmov %v189
      %v191 = vld [vmem:[%s187] sm:$0xff]
      %v193 = vstv %s48
      %vm194 = vcmp.gt.s32.totalorder %v190, %v193
      %v195 = vsel %vm194, %v191, 0.0
      %v196 = vrcp.pop %v186
      %v197 = vmul.f32 %v195, %v196
      %v198 = vsel %vm146, 0.0, %v197
      %v199 = vstv %s48
      %v200 = vlaneseq
      %v201 = vand.u32 %v200, 127
      %vm202 = vcmp.eq.s32.totalorder %v201, %v199
      %v203 = vsel %vm202, %v198, 0.0
      %204 = vadd.xlane.f32.xlu0 %v203
      %v205 = vpop.xlane.xlu0 %204
      %206 = vst [vmem:[#allocation5] sm:$0xff] %v205
      %s207 = scalar_lea.vmem %s187, 8
      %v208 = vld [vmem:[%s207] sm:$0xff]
      %v209 = vadd.s32 %v190, 8
      %v210 = vstv %s48
      %vm211 = vcmp.gt.s32.totalorder %v209, %v210
      %v212 = vsel %vm211, %v208, 0.0
      %v213 = vrcp.pop %v186
      %v214 = vmul.f32 %v212, %v213
      %v215 = vsel %vm146, 0.0, %v214
      %v216 = vstv %s48
      %v217 = vlaneseq
      %v218 = vand.u32 %v217, 127
      %vm219 = vcmp.eq.s32.totalorder %v218, %v216
      %v220 = vsel %vm219, %v215, 0.0
      %221 = vadd.xlane.f32.xlu0 %v220
      %v222 = vpop.xlane.xlu0 %221
      %s223 = scalar_lea.vmem [#allocation5], 8
      %224 = vst [vmem:[%s223] sm:$0xff] %v222
      %s225 = scalar_lea.vmem %s187, 16
      %v226 = vld [vmem:[%s225] sm:$0xff]
      %v227 = vadd.s32 %v190, 16
      %v228 = vstv %s48
      %vm229 = vcmp.gt.s32.totalorder %v227, %v228
      %v230 = vsel %vm229, %v226, 0.0
      %v231 = vrcp.pop %v186
      %v232 = vmul.f32 %v230, %v231
      %v233 = vsel %vm146, 0.0, %v232
      %v234 = vstv %s48
      %v235 = vlaneseq
      %v236 = vand.u32 %v235, 127
      %vm237 = vcmp.eq.s32.totalorder %v236, %v234
      %v238 = vsel %vm237, %v233, 0.0
      %239 = vadd.xlane.f32.xlu0 %v238
      %v240 = vpop.xlane.xlu0 %239
      %s241 = scalar_lea.vmem [#allocation5], 16
      %242 = vst [vmem:[%s241] sm:$0xff] %v240
      %s243 = scalar_lea.vmem %s187, 24
      %v244 = vld [vmem:[%s243] sm:$0xff]
      %v245 = vadd.s32 %v190, 24
      %v246 = vstv %s48
      %vm247 = vcmp.gt.s32.totalorder %v245, %v246
      %v248 = vsel %vm247, %v244, 0.0
      %v249 = vrcp.pop %v186
      %v250 = vmul.f32 %v248, %v249
      %v251 = vsel %vm146, 0.0, %v250
      %v252 = vstv %s48
      %v253 = vlaneseq
      %v254 = vand.u32 %v253, 127
      %vm255 = vcmp.eq.s32.totalorder %v254, %v252
      %v256 = vsel %vm255, %v251, 0.0
      %257 = vadd.xlane.f32.xlu0 %v256
      %v258 = vpop.xlane.xlu0 %257
      %s259 = scalar_lea.vmem [#allocation5], 24
      %260 = vst [vmem:[%s259] sm:$0xff] %v258
      %s261 = scalar_lea.vmem %s187, 32
      %v262 = vld [vmem:[%s261] sm:$0xff]
      %v263 = vadd.s32 %v190, 32
      %v264 = vstv %s48
      %vm265 = vcmp.gt.s32.totalorder %v263, %v264
      %v266 = vsel %vm265, %v262, 0.0
      %v267 = vrcp.pop %v186
      %v268 = vmul.f32 %v266, %v267
      %v269 = vsel %vm146, 0.0, %v268
      %v270 = vstv %s48
      %v271 = vlaneseq
      %v272 = vand.u32 %v271, 127
      %vm273 = vcmp.eq.s32.totalorder %v272, %v270
      %v274 = vsel %vm273, %v269, 0.0
      %275 = vadd.xlane.f32.xlu0 %v274
      %v276 = vpop.xlane.xlu0 %275
      %s277 = scalar_lea.vmem [#allocation5], 32
      %278 = vst [vmem:[%s277] sm:$0xff] %v276
      %s279 = scalar_lea.vmem %s187, 40
      %v280 = vld [vmem:[%s279] sm:$0xff]
      %v281 = vadd.s32 %v190, 40
      %v282 = vstv %s48
      %vm283 = vcmp.gt.s32.totalorder %v281, %v282
      %v284 = vsel %vm283, %v280, 0.0
      %v285 = vrcp.pop %v186
      %v286 = vmul.f32 %v284, %v285
      %v287 = vsel %vm146, 0.0, %v286
      %v288 = vstv %s48
      %v289 = vlaneseq
      %v290 = vand.u32 %v289, 127
      %vm291 = vcmp.eq.s32.totalorder %v290, %v288
      %v292 = vsel %vm291, %v287, 0.0
      %293 = vadd.xlane.f32.xlu0 %v292
      %v294 = vpop.xlane.xlu0 %293
      %s295 = scalar_lea.vmem [#allocation5], 40
      %296 = vst [vmem:[%s295] sm:$0xff] %v294
      %s297 = scalar_lea.vmem %s187, 48
      %v298 = vld [vmem:[%s297] sm:$0xff]
      %v299 = vadd.s32 %v190, 48
      %v300 = vstv %s48
      %vm301 = vcmp.gt.s32.totalorder %v299, %v300
      %v302 = vsel %vm301, %v298, 0.0
      %v303 = vrcp.pop %v186
      %v304 = vmul.f32 %v302, %v303
      %v305 = vsel %vm146, 0.0, %v304
      %v306 = vstv %s48
      %v307 = vlaneseq
      %v308 = vand.u32 %v307, 127
      %vm309 = vcmp.eq.s32.totalorder %v308, %v306
      %v310 = vsel %vm309, %v305, 0.0
      %311 = vadd.xlane.f32.xlu0 %v310
      %v312 = vpop.xlane.xlu0 %311
      %s313 = scalar_lea.vmem [#allocation5], 48
      %314 = vst [vmem:[%s313] sm:$0xff] %v312
      %s315 = scalar_lea.vmem %s187, 56
      %v316 = vld [vmem:[%s315] sm:$0xff]
      %v317 = vadd.s32 %v190, 56
      %v318 = vstv %s48
      %vm319 = vcmp.gt.s32.totalorder %v317, %v318
      %vm320 = vcmp.lt.s32.totalorder %v317, 64
      %vm321 = vmand %vm319, %vm320
      %v322 = vsel %vm321, %v316, 0.0
      %v323 = vrcp.pop %v186
      %v324 = vmul.f32 %v322, %v323
      %v325 = vsel %vm146, 0.0, %v324
      %v326 = vstv %s48
      %v327 = vlaneseq
      %v328 = vand.u32 %v327, 127
      %vm329 = vcmp.eq.s32.totalorder %v328, %v326
      %v330 = vsel %vm329, %v325, 0.0
      %331 = vadd.xlane.f32.xlu0 %v330
      %v332 = vpop.xlane.xlu0 %331
      %s333 = scalar_lea.vmem [#allocation5], 56
      %334 = vst [vmem:[%s333] sm:$0xff] %v332
      %s335 = scalar_lea.vmem [#allocation5], %s48
      %336 = vst [vmem:[%s335] sm:$0x1] 1.0
      %v337 = vstv %s48
      %v338 = vlaneseq
      %v339 = vand.u32 %v338, 127
      %vm340 = vcmp.eq.s32.totalorder %v339, %v337
      %v341 = vsel %vm340, %v185, 0.0
      %342 = vadd.xlane.f32.xlu0 %v341
      %v343 = vpop.xlane.xlu0 %342
      %v344 = vstv %s48
      %v345 = vlaneseq
      %v346 = vand.u32 %v345, 127
      %vm347 = vcmp.eq.s32.totalorder %v346, %v344
      %v348 = vld [vmem:[#allocation3] ss:$0 sm:$0xff]
      %v349 = vsel %vm347, %v343, %v348
      %350 = vst [vmem:[#allocation3] sm:$0x1] %v349
      %s351 = smov [#allocation2]
      %s352 = smov [#allocation5]
      %v353 = vlaneseq
      %v354 = vshrl.u32 %v353, 7
      %v355 = vmov %v354
      %v357 = vld [vmem:[%s352] sm:$0xff]
      %v358 = vld [vmem:[%s351] sm:$0xff]
      %v359 = vmul.f32 %v357, %v358
      %v360 = vadd.s32 %v355, 8
      %s361 = scalar_lea.vmem %s352, 8
      %v362 = vld [vmem:[%s361] sm:$0xff]
      %s363 = scalar_lea.vmem %s351, 8
      %v364 = vld [vmem:[%s363] sm:$0xff]
      %v365 = vmul.f32 %v362, %v364
      %v366 = vadd.f32 %v359, %v365
      %v367 = vadd.s32 %v355, 16
      %s368 = scalar_lea.vmem %s352, 16
      %v369 = vld [vmem:[%s368] sm:$0xff]
      %s370 = scalar_lea.vmem %s351, 16
      %v371 = vld [vmem:[%s370] sm:$0xff]
      %v372 = vmul.f32 %v369, %v371
      %v373 = vadd.f32 %v366, %v372
      %v374 = vadd.s32 %v355, 24
      %s375 = scalar_lea.vmem %s352, 24
      %v376 = vld [vmem:[%s375] sm:$0xff]
      %s377 = scalar_lea.vmem %s351, 24
      %v378 = vld [vmem:[%s377] sm:$0xff]
      %v379 = vmul.f32 %v376, %v378
      %v380 = vadd.f32 %v373, %v379
      %v381 = vadd.s32 %v355, 32
      %s382 = scalar_lea.vmem %s352, 32
      %v383 = vld [vmem:[%s382] sm:$0xff]
      %s384 = scalar_lea.vmem %s351, 32
      %v385 = vld [vmem:[%s384] sm:$0xff]
      %v386 = vmul.f32 %v383, %v385
      %v387 = vadd.f32 %v380, %v386
      %v388 = vadd.s32 %v355, 40
      %s389 = scalar_lea.vmem %s352, 40
      %v390 = vld [vmem:[%s389] sm:$0xff]
      %s391 = scalar_lea.vmem %s351, 40
      %v392 = vld [vmem:[%s391] sm:$0xff]
      %v393 = vmul.f32 %v390, %v392
      %v394 = vadd.f32 %v387, %v393
      %v395 = vadd.s32 %v355, 48
      %s396 = scalar_lea.vmem %s352, 48
      %v397 = vld [vmem:[%s396] sm:$0xff]
      %s398 = scalar_lea.vmem %s351, 48
      %v399 = vld [vmem:[%s398] sm:$0xff]
      %v400 = vmul.f32 %v397, %v399
      %v401 = vadd.f32 %v394, %v400
      %v402 = vadd.s32 %v355, 56
      %s403 = scalar_lea.vmem %s352, 56
      %v404 = vld [vmem:[%s403] sm:$0xff]
      %s405 = scalar_lea.vmem %s351, 56
      %v406 = vld [vmem:[%s405] sm:$0xff]
      %v407 = vmul.f32 %v404, %v406
      %vm408 = vcmp.lt.s32.totalorder %v402, 64
      %v409 = vsel %vm408, %v407, 0.0
      %v410 = vadd.f32 %v401, %v409
      %v411 = vrot.slane %v410, 4
      %v412 = vadd.f32 %v410, %v411
      %v413 = vrot.slane %v412, 2
      %v414 = vadd.f32 %v412, %v413
      %v415 = vrot.slane %v414, 1
      %v416 = vadd.f32 %v414, %v415
      %s417 = smov %s351
      %s418 = smov %s352
      %v419 = vlaneseq
      %v420 = vshrl.u32 %v419, 7
      %v421 = vmov %v420
      %v422 = vmul.f32 %v416, %v343
      %v424 = vlaneseq
      %v425 = vand.u32 %v424, 127
      %v426 = vld [vmem:[%s418] sm:$0xff]
      %v427 = vmul.f32 %v426, %v422
      %v428 = vld [vmem:[%s417] sm:$0xff]
      %v429 = vstv %s48
      %vm430 = vcmp.gt.s32.totalorder %v425, %v429
      %v431 = vsub.f32 %v428, %v427
      %v432 = vsel %vm430, %v431, %v428
      %v433 = vstv %s48
      %v434 = vlaneseq
      %v435 = vand.u32 %v434, 127
      %vm436 = vcmp.eq.s32.totalorder %v435, %v433
      %v437 = vstv %s48
      %vm438 = vcmp.ge.s32.totalorder %v421, %v437
      %vm439 = vmand %vm436, %vm438
      %v440 = vsel %vm439, %v426, %v432
      %441 = vst [vmem:[%s417] sm:$0xff] %v440
      %v442 = vadd.s32 %v421, 8
      %v443 = vlaneseq
      %v444 = vand.u32 %v443, 127
      %s445 = scalar_lea.vmem %s418, 8
      %v446 = vld [vmem:[%s445] sm:$0xff]
      %v447 = vmul.f32 %v446, %v422
      %s448 = scalar_lea.vmem %s417, 8
      %v449 = vld [vmem:[%s448] sm:$0xff]
      %v450 = vstv %s48
      %vm451 = vcmp.gt.s32.totalorder %v444, %v450
      %v452 = vsub.f32 %v449, %v447
      %v453 = vsel %vm451, %v452, %v449
      %v454 = vstv %s48
      %v455 = vlaneseq
      %v456 = vand.u32 %v455, 127
      %vm457 = vcmp.eq.s32.totalorder %v456, %v454
      %v458 = vstv %s48
      %vm459 = vcmp.ge.s32.totalorder %v442, %v458
      %vm460 = vmand %vm457, %vm459
      %v461 = vsel %vm460, %v446, %v453
      %462 = vst [vmem:[%s448] sm:$0xff] %v461
      %v463 = vadd.s32 %v421, 16
      %v464 = vlaneseq
      %v465 = vand.u32 %v464, 127
      %s466 = scalar_lea.vmem %s418, 16
      %v467 = vld [vmem:[%s466] sm:$0xff]
      %v468 = vmul.f32 %v467, %v422
      %s469 = scalar_lea.vmem %s417, 16
      %v470 = vld [vmem:[%s469] sm:$0xff]
      %v471 = vstv %s48
      %vm472 = vcmp.gt.s32.totalorder %v465, %v471
      %v473 = vsub.f32 %v470, %v468
      %v474 = vsel %vm472, %v473, %v470
      %v475 = vstv %s48
      %v476 = vlaneseq
      %v477 = vand.u32 %v476, 127
      %vm478 = vcmp.eq.s32.totalorder %v477, %v475
      %v479 = vstv %s48
      %vm480 = vcmp.ge.s32.totalorder %v463, %v479
      %vm481 = vmand %vm478, %vm480
      %v482 = vsel %vm481, %v467, %v474
      %483 = vst [vmem:[%s469] sm:$0xff] %v482
      %v484 = vadd.s32 %v421, 24
      %v485 = vlaneseq
      %v486 = vand.u32 %v485, 127
      %s487 = scalar_lea.vmem %s418, 24
      %v488 = vld [vmem:[%s487] sm:$0xff]
      %v489 = vmul.f32 %v488, %v422
      %s490 = scalar_lea.vmem %s417, 24
      %v491 = vld [vmem:[%s490] sm:$0xff]
      %v492 = vstv %s48
      %vm493 = vcmp.gt.s32.totalorder %v486, %v492
      %v494 = vsub.f32 %v491, %v489
      %v495 = vsel %vm493, %v494, %v491
      %v496 = vstv %s48
      %v497 = vlaneseq
      %v498 = vand.u32 %v497, 127
      %vm499 = vcmp.eq.s32.totalorder %v498, %v496
      %v500 = vstv %s48
      %vm501 = vcmp.ge.s32.totalorder %v484, %v500
      %vm502 = vmand %vm499, %vm501
      %v503 = vsel %vm502, %v488, %v495
      %504 = vst [vmem:[%s490] sm:$0xff] %v503
      %v505 = vadd.s32 %v421, 32
      %v506 = vlaneseq
      %v507 = vand.u32 %v506, 127
      %s508 = scalar_lea.vmem %s418, 32
      %v509 = vld [vmem:[%s508] sm:$0xff]
      %v510 = vmul.f32 %v509, %v422
      %s511 = scalar_lea.vmem %s417, 32
      %v512 = vld [vmem:[%s511] sm:$0xff]
      %v513 = vstv %s48
      %vm514 = vcmp.gt.s32.totalorder %v507, %v513
      %v515 = vsub.f32 %v512, %v510
      %v516 = vsel %vm514, %v515, %v512
      %v517 = vstv %s48
      %v518 = vlaneseq
      %v519 = vand.u32 %v518, 127
      %vm520 = vcmp.eq.s32.totalorder %v519, %v517
      %v521 = vstv %s48
      %vm522 = vcmp.ge.s32.totalorder %v505, %v521
      %vm523 = vmand %vm520, %vm522
      %v524 = vsel %vm523, %v509, %v516
      %525 = vst [vmem:[%s511] sm:$0xff] %v524
      %v526 = vadd.s32 %v421, 40
      %v527 = vlaneseq
      %v528 = vand.u32 %v527, 127
      %s529 = scalar_lea.vmem %s418, 40
      %v530 = vld [vmem:[%s529] sm:$0xff]
      %v531 = vmul.f32 %v530, %v422
      %s532 = scalar_lea.vmem %s417, 40
      %v533 = vld [vmem:[%s532] sm:$0xff]
      %v534 = vstv %s48
      %vm535 = vcmp.gt.s32.totalorder %v528, %v534
      %v536 = vsub.f32 %v533, %v531
      %v537 = vsel %vm535, %v536, %v533
      %v538 = vstv %s48
      %v539 = vlaneseq
      %v540 = vand.u32 %v539, 127
      %vm541 = vcmp.eq.s32.totalorder %v540, %v538
      %v542 = vstv %s48
      %vm543 = vcmp.ge.s32.totalorder %v526, %v542
      %vm544 = vmand %vm541, %vm543
      %v545 = vsel %vm544, %v530, %v537
      %546 = vst [vmem:[%s532] sm:$0xff] %v545
      %v547 = vadd.s32 %v421, 48
      %v548 = vlaneseq
      %v549 = vand.u32 %v548, 127
      %s550 = scalar_lea.vmem %s418, 48
      %v551 = vld [vmem:[%s550] sm:$0xff]
      %v552 = vmul.f32 %v551, %v422
      %s553 = scalar_lea.vmem %s417, 48
      %v554 = vld [vmem:[%s553] sm:$0xff]
      %v555 = vstv %s48
      %vm556 = vcmp.gt.s32.totalorder %v549, %v555
      %v557 = vsub.f32 %v554, %v552
      %v558 = vsel %vm556, %v557, %v554
      %v559 = vstv %s48
      %v560 = vlaneseq
      %v561 = vand.u32 %v560, 127
      %vm562 = vcmp.eq.s32.totalorder %v561, %v559
      %v563 = vstv %s48
      %vm564 = vcmp.ge.s32.totalorder %v547, %v563
      %vm565 = vmand %vm562, %vm564
      %v566 = vsel %vm565, %v551, %v558
      %567 = vst [vmem:[%s553] sm:$0xff] %v566
      %v568 = vadd.s32 %v421, 56
      %v569 = vlaneseq
      %v570 = vand.u32 %v569, 127
      %s571 = scalar_lea.vmem %s418, 56
      %v572 = vld [vmem:[%s571] sm:$0xff]
      %v573 = vmul.f32 %v572, %v422
      %s574 = scalar_lea.vmem %s417, 56
      %v575 = vld [vmem:[%s574] sm:$0xff]
      %v576 = vstv %s48
      %vm577 = vcmp.gt.s32.totalorder %v570, %v576
      %v578 = vsub.f32 %v575, %v573
      %v579 = vsel %vm577, %v578, %v575
      %v580 = vstv %s48
      %v581 = vlaneseq
      %v582 = vand.u32 %v581, 127
      %vm583 = vcmp.eq.s32.totalorder %v582, %v580
      %v584 = vstv %s48
      %vm585 = vcmp.ge.s32.totalorder %v568, %v584
      %vm586 = vmand %vm583, %vm585
      %v587 = vsel %vm586, %v572, %v579
      %588 = vst [vmem:[%s574] sm:$0xff] %v587
      %s589 = scalar_lea.vmem %s417, %s48
      %v590 = vld [vmem:[%s589] ss:$0 sm:$0xff]
      %v591 = vstv %s48
      %v592 = vlaneseq
      %v593 = vand.u32 %v592, 127
      %vm594 = vcmp.eq.s32.totalorder %v593, %v591
      %v595 = vsel %vm594, %v184, %v590
      %596 = vst [vmem:[%s589] sm:$0x1] %v595
    $region6: #{custom-call.20} parent=1 // loop_footer
      %s52 = sadd.s32 1, %s48
    $region7: #{custom-call.20} parent=1 // loop_footer_branch
      %47 = sbr.rel target = $region3
    $region8: #{custom-call.20} parent=1 // loop_exit
      _
    %s598 = sshllo.u32 0, 1
    %v600 = vld [vmem:[#allocation3] sm:%s598]
    %s601 = sshllo.u32 0, 1
    %602 = vst [vmem:[#allocation4] sm:%s601] %v600
    // Predicated region
    $region9: #{custom-call.20} parent=1 // pred_check
      _
    $region10: #{custom-call.20} parent=1 // pred_check_branch
      %604 = sbr.rel (0) target = $region12
    $region11: #{custom-call.20} parent=1 // pred_region
      // Predicated region
      $region13: #{custom-call.20} parent=11 // pred_check
        _
      $region14: #{custom-call.20} parent=11 // pred_check_branch
        %606 = sbr.rel (0) target = $region16
      $region15: #{custom-call.20} parent=11 // pred_region
        // Predicated region
        $region28: #{custom-call.20} parent=15 // pred_check
          _
        $region29: #{custom-call.20} parent=15 // pred_check_branch
          %635 = sbr.rel (0) target = $region31
        $region30: #{custom-call.20} parent=15 // pred_region
          loop: start=0, step=1, limit=1
          $region32: #{custom-call.20} parent=30 // loop_pre_header
            _
          $region33: #{custom-call.20} parent=30 // loop_header
            %s637 = sphi 0, %s641
            %p638 = scmp.ge.s32.totalorder %s637, 1
            %s642 = sphi [#allocation2], [#allocation2]
            %s643 = sphi %s1, %s1
          $region34: #{custom-call.20} parent=30 // loop_header_branch
            %640 = sbr.rel (%p638) target = $region38
          $region35: #{custom-call.20} parent=30 // loop_body
            %v644 = vld [vmem:[%s642] sm:$0xff]
            %645 = vst [vmem:[%s643] sm:$0xff] %v644
            %v646 = vld [vmem:[%s642 + $0x8] sm:$0xff]
            %647 = vst [vmem:[%s643 + $0x8] sm:$0xff] %v646
            %v648 = vld [vmem:[%s642 + $0x10] sm:$0xff]
            %649 = vst [vmem:[%s643 + $0x10] sm:$0xff] %v648
            %v650 = vld [vmem:[%s642 + $0x18] sm:$0xff]
            %651 = vst [vmem:[%s643 + $0x18] sm:$0xff] %v650
            %v652 = vld [vmem:[%s642 + $0x20] sm:$0xff]
            %653 = vst [vmem:[%s643 + $0x20] sm:$0xff] %v652
            %v654 = vld [vmem:[%s642 + $0x28] sm:$0xff]
            %655 = vst [vmem:[%s643 + $0x28] sm:$0xff] %v654
            %v656 = vld [vmem:[%s642 + $0x30] sm:$0xff]
            %657 = vst [vmem:[%s643 + $0x30] sm:$0xff] %v656
            %v658 = vld [vmem:[%s642 + $0x38] sm:$0xff]
            %659 = vst [vmem:[%s643 + $0x38] sm:$0xff] %v658
          $region36: #{custom-call.20} parent=30 // loop_footer
            %s641 = sadd.s32 1, %s637
          $region37: #{custom-call.20} parent=30 // loop_footer_branch
            %636 = sbr.rel target = $region33
          $region38: #{custom-call.20} parent=30 // loop_exit
            _
        $region31: #{custom-call.20} parent=15 // pred_fallthru
          _
        // Predicated region
        $region39: #{custom-call.20} parent=15 // pred_check
          _
        $region40: #{custom-call.20} parent=15 // pred_check_branch
          %661 = sbr.rel target = $region42
        $region41: #{custom-call.20} parent=15 // pred_region
          _
        $region42: #{custom-call.20} parent=15 // pred_fallthru
          _
      $region16: #{custom-call.20} parent=11 // pred_fallthru
        _
      // Predicated region
      $region17: #{custom-call.20} parent=11 // pred_check
        _
      $region18: #{custom-call.20} parent=11 // pred_check_branch
        %608 = sbr.rel target = $region20
      $region19: #{custom-call.20} parent=11 // pred_region
        loop: start=0, step=1, limit=1
        $region21: #{custom-call.20} parent=19 // loop_pre_header
          _
        $region22: #{custom-call.20} parent=19 // loop_header
          %s611 = sphi 0, %s615
          %p612 = scmp.ge.s32.totalorder %s611, 1
          %s616 = sphi [#allocation2], [#allocation2]
          %s617 = sphi %s1, %s1
        $region23: #{custom-call.20} parent=19 // loop_header_branch
          %614 = sbr.rel (%p612) target = $region27
        $region24: #{custom-call.20} parent=19 // loop_body
          %v618 = vld [vmem:[%s616] sm:$0xff]
          %619 = vst [vmem:[%s617] sm:$0xff] %v618
          %v620 = vld [vmem:[%s616 + $0x8] sm:$0xff]
          %621 = vst [vmem:[%s617 + $0x8] sm:$0xff] %v620
          %v622 = vld [vmem:[%s616 + $0x10] sm:$0xff]
          %623 = vst [vmem:[%s617 + $0x10] sm:$0xff] %v622
          %v624 = vld [vmem:[%s616 + $0x18] sm:$0xff]
          %625 = vst [vmem:[%s617 + $0x18] sm:$0xff] %v624
          %v626 = vld [vmem:[%s616 + $0x20] sm:$0xff]
          %627 = vst [vmem:[%s617 + $0x20] sm:$0xff] %v626
          %v628 = vld [vmem:[%s616 + $0x28] sm:$0xff]
          %629 = vst [vmem:[%s617 + $0x28] sm:$0xff] %v628
          %v630 = vld [vmem:[%s616 + $0x30] sm:$0xff]
          %631 = vst [vmem:[%s617 + $0x30] sm:$0xff] %v630
          %v632 = vld [vmem:[%s616 + $0x38] sm:$0xff]
          %633 = vst [vmem:[%s617 + $0x38] sm:$0xff] %v632
        $region25: #{custom-call.20} parent=19 // loop_footer
          %s615 = sadd.s32 1, %s611
        $region26: #{custom-call.20} parent=19 // loop_footer_branch
          %610 = sbr.rel target = $region22
        $region27: #{custom-call.20} parent=19 // loop_exit
          _
      $region20: #{custom-call.20} parent=11 // pred_fallthru
        _
    $region12: #{custom-call.20} parent=1 // pred_fallthru
      _
    %662 = vnop
    // Predicated region
    $region43: #{custom-call.20} parent=1 // pred_check
      _
    $region44: #{custom-call.20} parent=1 // pred_check_branch
      %664 = sbr.rel (0) target = $region46
    $region45: #{custom-call.20} parent=1 // pred_region
      // Predicated region
      $region47: #{custom-call.20} parent=45 // pred_check
        _
      $region48: #{custom-call.20} parent=45 // pred_check_branch
        %666 = sbr.rel (0) target = $region50
      $region49: #{custom-call.20} parent=45 // pred_region
        // Predicated region
        $region51: #{custom-call.20} parent=49 // pred_check
          _
        $region52: #{custom-call.20} parent=49 // pred_check_branch
          %668 = sbr.rel target = $region54
        $region53: #{custom-call.20} parent=49 // pred_region
          // Predicated region
          $region66: #{custom-call.20} parent=53 // pred_check
            _
          $region67: #{custom-call.20} parent=53 // pred_check_branch
            %683 = sbr.rel (0) target = $region69
          $region68: #{custom-call.20} parent=53 // pred_region
            loop: start=0, step=1, limit=1
            $region70: #{custom-call.20} parent=68 // loop_pre_header
              _
            $region71: #{custom-call.20} parent=68 // loop_header
              %s686 = sphi 0, %s690
              %p687 = scmp.ge.s32.totalorder %s686, 1
              %s691 = sphi [#allocation4], [#allocation4]
              %s692 = sphi %s2, %s2
            $region72: #{custom-call.20} parent=68 // loop_header_branch
              %689 = sbr.rel (%p687) target = $region76
            $region73: #{custom-call.20} parent=68 // loop_body
              %v693 = vld [vmem:[%s691] sm:$0x1]
              %694 = vst [vmem:[%s692] sm:$0x1] %v693
            $region74: #{custom-call.20} parent=68 // loop_footer
              %s690 = sadd.s32 1, %s686
            $region75: #{custom-call.20} parent=68 // loop_footer_branch
              %685 = sbr.rel target = $region71
            $region76: #{custom-call.20} parent=68 // loop_exit
              _
          $region69: #{custom-call.20} parent=53 // pred_fallthru
            _
        $region54: #{custom-call.20} parent=49 // pred_fallthru
          _
        // Predicated region
        $region55: #{custom-call.20} parent=49 // pred_check
          _
        $region56: #{custom-call.20} parent=49 // pred_check_branch
          %670 = sbr.rel (0) target = $region58
        $region57: #{custom-call.20} parent=49 // pred_region
          loop: start=0, step=1, limit=1
          $region59: #{custom-call.20} parent=57 // loop_pre_header
            _
          $region60: #{custom-call.20} parent=57 // loop_header
            %s673 = sphi 0, %s677
            %p674 = scmp.ge.s32.totalorder %s673, 1
            %s678 = sphi [#allocation4], [#allocation4]
            %s679 = sphi %s2, %s2
          $region61: #{custom-call.20} parent=57 // loop_header_branch
            %676 = sbr.rel (%p674) target = $region65
          $region62: #{custom-call.20} parent=57 // loop_body
            %v680 = vld [vmem:[%s678] sm:$0x1]
            %681 = vst [vmem:[%s679] sm:$0x1] %v680
          $region63: #{custom-call.20} parent=57 // loop_footer
            %s677 = sadd.s32 1, %s673
          $region64: #{custom-call.20} parent=57 // loop_footer_branch
            %672 = sbr.rel target = $region60
          $region65: #{custom-call.20} parent=57 // loop_exit
            _
        $region58: #{custom-call.20} parent=49 // pred_fallthru
          _
      $region50: #{custom-call.20} parent=45 // pred_fallthru
        _
      %695 = vnop
    $region46: #{custom-call.20} parent=1 // pred_fallthru
      _
    // Predicated region
    $region77: #{custom-call.20} parent=1 // pred_check
      _
    $region78: #{custom-call.20} parent=1 // pred_check_branch
      %697 = sbr.rel (0) target = $region80
    $region79: #{custom-call.20} parent=1 // pred_region
      _
    $region80: #{custom-call.20} parent=1 // pred_fallthru
      _
    %698 = vsyncpa [#allocation1], 1

// kernel: custom-call.22
$region0: #{custom-call.22}
  %s0 = inlined_call_operand.vmem [shape: f32[3,3], index: 0, kind: input, shape index: {}]
  %s1 = inlined_call_operand.vmem [shape: f32[3,3], index: 1, kind: output, shape index: {}]
  $region1: #{custom-call.22} parent=0
    #allocation0 [shape = 'u8[4096]{0}', space=vmem, size = 0x1000, scoped, tag = 'operand span for operand 0']
    #allocation1 [shape = 'u8[2048]{0}', space=vmem, size = 0x800, scoped, tag = 'packed  for operand 0']
    #allocation2 [shape = 'u8[4096]{0}', space=vmem, size = 0x1000, scoped, tag = 'operand span for operand 1']
    #allocation3 [shape = 'u8[2048]{0}', space=vmem, size = 0x800, scoped, tag = 'packed  for operand 1']
    %p3 = scmp.gt.s32.totalorder 4, 0
    // Predicated region
    $region2: #{custom-call.22} parent=1 // pred_check
      %p4 = pneg %p3
    $region3: #{custom-call.22} parent=1 // pred_check_branch
      %6 = sbr.rel (%p4) target = $region5
    $region4: #{custom-call.22} parent=1 // pred_region
      %s7 = sshra.s32 4, 3
      %p8 = scmp.gt.s32.totalorder %s7, 0
      // Predicated region
      $region6: #{custom-call.22} parent=4 // pred_check
        %p9 = pneg %p8
      $region7: #{custom-call.22} parent=4 // pred_check_branch
        %11 = sbr.rel (%p9) target = $region9
      $region8: #{custom-call.22} parent=4 // pred_region
        %s12 = ssub.s32 %s7, 1
        %s13 = smul.u32 %s12, 128
        %s14 = sshra.s32 %s13, 4
        %s15 = scalar_lea.vmem %s0, %s14
        %v16 = vld [vmem:[%s0] sm:$0xff]
        // While loop
        $region10: #{custom-call.22} parent=8 // loop_pre_header
          _
        $region11: #{custom-call.22} parent=8 // loop_header
          %s17 = sphi %s0, %s39
          %s18 = sphi [#allocation1], %s40
          %v19 = vphi %v16, %v41
          %s20 = ssub.s32 %s15, 64
          %p21 = scmp.gt.s32.totalorder %s17, %s20
        $region12: #{custom-call.22} parent=8 // loop_header_branch
          %23 = sbr.rel (%p21) target = $region16
        $region13: #{custom-call.22} parent=8 // loop_body
          %24 = vst [vmem:[%s18] sm:$0xff] %v19
          %v25 = vld [vmem:[%s17 + $0x8] sm:$0xff]
          %26 = vst [vmem:[%s18 + $0x8] sm:$0xff] %v25
          %v27 = vld [vmem:[%s17 + $0x10] sm:$0xff]
          %28 = vst [vmem:[%s18 + $0x10] sm:$0xff] %v27
          %v29 = vld [vmem:[%s17 + $0x18] sm:$0xff]
          %30 = vst [vmem:[%s18 + $0x18] sm:$0xff] %v29
          %v31 = vld [vmem:[%s17 + $0x20] sm:$0xff]
          %32 = vst [vmem:[%s18 + $0x20] sm:$0xff] %v31
          %v33 = vld [vmem:[%s17 + $0x28] sm:$0xff]
          %34 = vst [vmem:[%s18 + $0x28] sm:$0xff] %v33
          %v35 = vld [vmem:[%s17 + $0x30] sm:$0xff]
          %36 = vst [vmem:[%s18 + $0x30] sm:$0xff] %v35
          %v37 = vld [vmem:[%s17 + $0x38] sm:$0xff]
          %38 = vst [vmem:[%s18 + $0x38] sm:$0xff] %v37
        $region14: #{custom-call.22} parent=8 // loop_footer
          %s39 = scalar_lea.vmem %s17, 64
          %s40 = scalar_lea.vmem %s18, 64
          %v41 = vld [vmem:[%s17 + $0x40] sm:$0xff]
        $region15: #{custom-call.22} parent=8 // loop_footer_branch
          %42 = sbr.rel target = $region11
        $region16: #{custom-call.22} parent=8 // loop_exit
          _
        // While loop
        $region17: #{custom-call.22} parent=8 // loop_pre_header
          _
        $region18: #{custom-call.22} parent=8 // loop_header
          %s43 = sphi %s17, %s51
          %s44 = sphi %s18, %s52
          %v45 = vphi %v19, %v45
          %p46 = scmp.gt.s32.totalorder %s43, %s15
        $region19: #{custom-call.22} parent=8 // loop_header_branch
          %48 = sbr.rel (%p46) target = $region23
        $region20: #{custom-call.22} parent=8 // loop_body
          %v49 = vld [vmem:[%s43] sm:$0xff]
          %50 = vst [vmem:[%s44] sm:$0xff] %v49
        $region21: #{custom-call.22} parent=8 // loop_footer
          %s51 = scalar_lea.vmem %s43, 8
          %s52 = scalar_lea.vmem %s44, 8
        $region22: #{custom-call.22} parent=8 // loop_footer_branch
          %53 = sbr.rel target = $region18
        $region23: #{custom-call.22} parent=8 // loop_exit
          _
      $region9: #{custom-call.22} parent=4 // pred_fallthru
        _
      %s54 = sand.u32 4, 7
      %s55 = sshllo.u32 0, %s54
      %s56 = smul.u32 %s7, 128
      %s57 = sshra.s32 %s56, 4
      %s58 = scalar_lea.vmem [#allocation1], %s57
      %s59 = smul.u32 %s7, 128
      %s60 = sshra.s32 %s59, 4
      %s61 = scalar_lea.vmem %s0, %s60
      %v62 = vld [vmem:[%s61] sm:%s55]
      %63 = vst [vmem:[%s58] sm:%s55] %v62
    $region5: #{custom-call.22} parent=1 // pred_fallthru
      _
    %s65 = sshllo.u32 0, 4
    %v66 = vld [vmem:[#allocation1] sm:%s65]
    %67 = vst [vmem:[#allocation0] sm:%s65] %v66
    %v68 = vlaneseq
    %v69 = vand.u32 %v68, 127
    %v70 = vlaneseq
    %v71 = vshrl.u32 %v70, 7
    %vm73 = vcmp.eq.s32.totalorder %v69, %v71
    %v74 = vld [vmem:[#allocation0] sm:$0xff]
    %v75 = vlaneseq
    %v76 = vand.u32 %v75, 127
    %vm77 = vcmp.eq.s32.totalorder %v76, 0
    %v78 = vsel %vm77, %v74, 1.0
    %v79 = vsel %vm73, %v78, 0.0
    %s80 = scalar_lea.vmem [#allocation0], 1
    %v81 = vld [vmem:[%s80] ss:$0 sm:$0xff]
    %vm82 = vcmask 23552
    %v83 = vsel %vm82, %v81, 0.0
    %v84 = vlaneseq
    %v85 = vand.u32 %v84, 127
    %vm86 = vcmp.eq.s32.totalorder %v85, 1
    %v87 = vmul.f32 %v83, %v79
    %88 = vadd.xlane.f32.xlu0 %v87
    %v89 = vpop.xlane.xlu0 %88
    %v90 = vsel %vm86, %v89, %v79
    %s91 = scalar_lea.vmem [#allocation0], 2
    %v92 = vld [vmem:[%s91] ss:$0 sm:$0xff]
    %vm93 = vcmask 23552
    %v94 = vsel %vm93, %v92, 0.0
    %v95 = vlaneseq
    %v96 = vand.u32 %v95, 127
    %vm97 = vcmp.eq.s32.totalorder %v96, 2
    %v98 = vmul.f32 %v94, %v90
    %99 = vadd.xlane.f32.xlu0 %v98
    %v100 = vpop.xlane.xlu0 %99
    %v101 = vsel %vm97, %v100, %v90
    %102 = vst [vmem:[#allocation2] sm:$0xff] %v101
    %s104 = sshllo.u32 0, 4
    %v106 = vld [vmem:[#allocation2] sm:%s104]
    %s107 = sshllo.u32 0, 4
    %108 = vst [vmem:[#allocation3] sm:%s107] %v106
    %p110 = scmp.gt.s32.totalorder 4, 0
    // Predicated region
    $region24: #{custom-call.22} parent=1 // pred_check
      %p111 = pneg %p110
    $region25: #{custom-call.22} parent=1 // pred_check_branch
      %113 = sbr.rel (%p111) target = $region27
    $region26: #{custom-call.22} parent=1 // pred_region
      %s114 = sshra.s32 4, 3
      %p115 = scmp.gt.s32.totalorder %s114, 0
      // Predicated region
      $region28: #{custom-call.22} parent=26 // pred_check
        %p116 = pneg %p115
      $region29: #{custom-call.22} parent=26 // pred_check_branch
        %118 = sbr.rel (%p116) target = $region31
      $region30: #{custom-call.22} parent=26 // pred_region
        %s119 = ssub.s32 %s114, 1
        %s120 = smul.u32 %s119, 128
        %s121 = sshra.s32 %s120, 4
        %s122 = scalar_lea.vmem [#allocation3], %s121
        %v123 = vld [vmem:[#allocation3] sm:$0xff]
        // While loop
        $region32: #{custom-call.22} parent=30 // loop_pre_header
          _
        $region33: #{custom-call.22} parent=30 // loop_header
          %s124 = sphi [#allocation3], %s146
          %s125 = sphi %s1, %s147
          %v126 = vphi %v123, %v148
          %s127 = ssub.s32 %s122, 64
          %p128 = scmp.gt.s32.totalorder %s124, %s127
        $region34: #{custom-call.22} parent=30 // loop_header_branch
          %130 = sbr.rel (%p128) target = $region38
        $region35: #{custom-call.22} parent=30 // loop_body
          %131 = vst [vmem:[%s125] sm:$0xff] %v126
          %v132 = vld [vmem:[%s124 + $0x8] sm:$0xff]
          %133 = vst [vmem:[%s125 + $0x8] sm:$0xff] %v132
          %v134 = vld [vmem:[%s124 + $0x10] sm:$0xff]
          %135 = vst [vmem:[%s125 + $0x10] sm:$0xff] %v134
          %v136 = vld [vmem:[%s124 + $0x18] sm:$0xff]
          %137 = vst [vmem:[%s125 + $0x18] sm:$0xff] %v136
          %v138 = vld [vmem:[%s124 + $0x20] sm:$0xff]
          %139 = vst [vmem:[%s125 + $0x20] sm:$0xff] %v138
          %v140 = vld [vmem:[%s124 + $0x28] sm:$0xff]
          %141 = vst [vmem:[%s125 + $0x28] sm:$0xff] %v140
          %v142 = vld [vmem:[%s124 + $0x30] sm:$0xff]
          %143 = vst [vmem:[%s125 + $0x30] sm:$0xff] %v142
          %v144 = vld [vmem:[%s124 + $0x38] sm:$0xff]
          %145 = vst [vmem:[%s125 + $0x38] sm:$0xff] %v144
        $region36: #{custom-call.22} parent=30 // loop_footer
          %s146 = scalar_lea.vmem %s124, 64
          %s147 = scalar_lea.vmem %s125, 64
          %v148 = vld [vmem:[%s124 + $0x40] sm:$0xff]
        $region37: #{custom-call.22} parent=30 // loop_footer_branch
          %149 = sbr.rel target = $region33
        $region38: #{custom-call.22} parent=30 // loop_exit
          _
        // While loop
        $region39: #{custom-call.22} parent=30 // loop_pre_header
          _
        $region40: #{custom-call.22} parent=30 // loop_header
          %s150 = sphi %s124, %s158
          %s151 = sphi %s125, %s159
          %v152 = vphi %v126, %v152
          %p153 = scmp.gt.s32.totalorder %s150, %s122
        $region41: #{custom-call.22} parent=30 // loop_header_branch
          %155 = sbr.rel (%p153) target = $region45
        $region42: #{custom-call.22} parent=30 // loop_body
          %v156 = vld [vmem:[%s150] sm:$0xff]
          %157 = vst [vmem:[%s151] sm:$0xff] %v156
        $region43: #{custom-call.22} parent=30 // loop_footer
          %s158 = scalar_lea.vmem %s150, 8
          %s159 = scalar_lea.vmem %s151, 8
        $region44: #{custom-call.22} parent=30 // loop_footer_branch
          %160 = sbr.rel target = $region40
        $region45: #{custom-call.22} parent=30 // loop_exit
          _
      $region31: #{custom-call.22} parent=26 // pred_fallthru
        _
      %s161 = sand.u32 4, 7
      %s162 = sshllo.u32 0, %s161
      %s163 = smul.u32 %s114, 128
      %s164 = sshra.s32 %s163, 4
      %s165 = scalar_lea.vmem %s1, %s164
      %s166 = smul.u32 %s114, 128
      %s167 = sshra.s32 %s166, 4
      %s168 = scalar_lea.vmem [#allocation3], %s167
      %v169 = vld [vmem:[%s168] sm:%s162]
      %170 = vst [vmem:[%s165] sm:%s162] %v169
    $region27: #{custom-call.22} parent=1 // pred_fallthru
      _

// kernel: closed_call.36
$region0: #{closed_call.36}
  #allocation0 [shape = 'u32[]', space=smem, size = 0x4, offset = 0x4, fixed_abs, tag = 'smem constant byte address 0x4 - core index']
  #allocation1 [shape = 'u32[144,128]{1,0:T(1,128)}', space=vmem, size = 0x12000, scoped, tag = 'internal scratch']
  #allocation2 [shape = 'f32[4,128]{1,0:T(4,128)}', space=vmem, size = 0x800, scoped, tag = 'scratch operand']
  #allocation3 [shape = 'f32[1,128]{1,0:T(1,128)}', space=vmem, size = 0x200, scoped, tag = 'scratch operand']
  %s0 = inlined_call_operand.vmem [shape: bf16[64,16], index: 0, kind: input, shape index: {}]
  %s1 = inlined_call_operand.vmem [shape: bf16[16,128], index: 1, kind: input, shape index: {}]
  %s2 = inlined_call_operand.vmem [shape: f32[1,128], index: 2, kind: input, shape index: {}]
  %s3 = inlined_call_operand.vmem [shape: f32[64,4], index: 3, kind: input, shape index: {}]
  %s4 = inlined_call_operand.vmem [shape: f32[64,4], index: 4, kind: input, shape index: {}]
  %s5 = inlined_call_operand.vmem [shape: f32[64,1], index: 5, kind: input, shape index: {}]
  %s6 = inlined_call_operand.vmem [shape: f32[1,4,128], index: 6, kind: output, shape index: {0}]
  %s7 = inlined_call_operand.vmem [shape: f32[1,1,128], index: 7, kind: output, shape index: {1}]
  %8 = xla_tuple %s6, %s7
  %s9 = sld [smem:[#allocation0]]
  $region50: #{closed_call.36} parent=0
    _
  %s11 = ssub.s32 1, %s9
  %s12 = scalar_select 0, %s11, %s9
  // Predicated region
  $region2: #{closed_call.36} parent=0 // pred_check
    _
  $region3: #{closed_call.36} parent=0 // pred_check_branch
    %14 = sbr.rel (0) target = $region5
  $region4: #{closed_call.36} parent=0 // pred_region
    %s15 = sadd.s32 0, 0
    %s16 = smul.u32 8, %s15
    %p17 = scmp.lt.s32.totalorder %s16, 7
    %s18 = scalar_select %p17, %s16, 7
    %s19 = smul.addr %s18, 4
    %s20 = scalar_lea.vmem %s0, %s19
    %s21 = sadd.s32 0, 0
    %s22 = smul.u32 8, %s21
  $region5: #{closed_call.36} parent=0 // pred_fallthru
    _
  // Predicated region
  $region6: #{closed_call.36} parent=0 // pred_check
    _
  $region7: #{closed_call.36} parent=0 // pred_check_branch
    %24 = sbr.rel (0) target = $region9
  $region8: #{closed_call.36} parent=0 // pred_region
    _
  $region9: #{closed_call.36} parent=0 // pred_fallthru
    _
  // Predicated region
  $region10: #{closed_call.36} parent=0 // pred_check
    _
  $region11: #{closed_call.36} parent=0 // pred_check_branch
    %26 = sbr.rel (0) target = $region13
  $region12: #{closed_call.36} parent=0 // pred_region
    _
  $region13: #{closed_call.36} parent=0 // pred_fallthru
    _
  // Predicated region
  $region14: #{closed_call.36} parent=0 // pred_check
    _
  $region15: #{closed_call.36} parent=0 // pred_check_branch
    %28 = sbr.rel (0) target = $region17
  $region16: #{closed_call.36} parent=0 // pred_region
    %s29 = sadd.s32 0, 0
    %s30 = smul.u32 8, %s29
    %p31 = scmp.lt.s32.totalorder %s30, 7
    %s32 = scalar_select %p31, %s30, 7
    %s33 = smul.addr %s32, 8
    %s34 = scalar_lea.vmem %s3, %s33
    %s35 = sadd.s32 0, 0
    %s36 = smul.u32 8, %s35
  $region17: #{closed_call.36} parent=0 // pred_fallthru
    _
  // Predicated region
  $region18: #{closed_call.36} parent=0 // pred_check
    _
  $region19: #{closed_call.36} parent=0 // pred_check_branch
    %38 = sbr.rel (0) target = $region21
  $region20: #{closed_call.36} parent=0 // pred_region
    %s39 = sadd.s32 0, 0
    %s40 = smul.u32 8, %s39
    %p41 = scmp.lt.s32.totalorder %s40, 7
    %s42 = scalar_select %p41, %s40, 7
    %s43 = smul.addr %s42, 8
    %s44 = scalar_lea.vmem %s4, %s43
    %s45 = sadd.s32 0, 0
    %s46 = smul.u32 8, %s45
  $region21: #{closed_call.36} parent=0 // pred_fallthru
    _
  // Predicated region
  $region22: #{closed_call.36} parent=0 // pred_check
    _
  $region23: #{closed_call.36} parent=0 // pred_check_branch
    %48 = sbr.rel (0) target = $region25
  $region24: #{closed_call.36} parent=0 // pred_region
    %s49 = sadd.s32 0, 0
    %s50 = smul.u32 8, %s49
    %p51 = scmp.lt.s32.totalorder %s50, 7
    %s52 = scalar_select %p51, %s50, 7
    %s53 = smul.addr %s52, 8
    %s54 = scalar_lea.vmem %s5, %s53
    %s55 = sadd.s32 0, 0
    %s56 = smul.u32 8, %s55
  $region25: #{closed_call.36} parent=0 // pred_fallthru
    _
  %s57 = sadd.s32 0, 0
  %s58 = smul.u32 8, %s57
  %p59 = scmp.lt.s32.totalorder %s58, 7
  %s60 = scalar_select %p59, %s58, 7
  %s61 = smul.addr %s60, 4
  %s62 = scalar_lea.vmem %s0, %s61
  %s63 = sadd.s32 0, 0
  %s64 = smul.u32 8, %s63
  %p65 = scmp.lt.s32.totalorder %s64, 7
  %s66 = scalar_select %p65, %s64, 7
  %s67 = smul.addr %s66, 8
  %s68 = scalar_lea.vmem %s3, %s67
  %s69 = sadd.s32 0, 0
  %s70 = smul.u32 8, %s69
  %p71 = scmp.lt.s32.totalorder %s70, 7
  %s72 = scalar_select %p71, %s70, 7
  %s73 = smul.addr %s72, 8
  %s74 = scalar_lea.vmem %s4, %s73
  %s75 = sadd.s32 0, 0
  %s76 = smul.u32 8, %s75
  %p77 = scmp.lt.s32.totalorder %s76, 7
  %s78 = scalar_select %p77, %s76, 7
  %s79 = smul.addr %s78, 8
  %s80 = scalar_lea.vmem %s5, %s79
  %s81 = sadd.s32 0, 0
  %s82 = smul.u32 8, %s81
  %p83 = scmp.lt.s32.totalorder %s82, 7
  %s84 = scalar_select %p83, %s82, 7
  %s85 = smul.addr %s84, 4
  %s86 = scalar_lea.vmem %s0, %s85
  %s87 = sadd.s32 0, 0
  %s88 = smul.u32 8, %s87
  %s89 = sadd.s32 0, 0
  %s90 = smul.u32 8, %s89
  %p91 = scmp.lt.s32.totalorder %s90, 7
  %s92 = scalar_select %p91, %s90, 7
  %s93 = smul.addr %s92, 8
  %s94 = scalar_lea.vmem %s3, %s93
  %s95 = sadd.s32 0, 0
  %s96 = smul.u32 8, %s95
  %s97 = sadd.s32 0, 0
  %s98 = smul.u32 8, %s97
  %p99 = scmp.lt.s32.totalorder %s98, 7
  %s100 = scalar_select %p99, %s98, 7
  %s101 = smul.addr %s100, 8
  %s102 = scalar_lea.vmem %s4, %s101
  %s103 = sadd.s32 0, 0
  %s104 = smul.u32 8, %s103
  %s105 = sadd.s32 0, 0
  %s106 = smul.u32 8, %s105
  %p107 = scmp.lt.s32.totalorder %s106, 7
  %s108 = scalar_select %p107, %s106, 7
  %s109 = smul.addr %s108, 8
  %s110 = scalar_lea.vmem %s5, %s109
  %s111 = sadd.s32 0, 0
  %s112 = smul.u32 8, %s111
  %p114 = scmp.eq.s32.totalorder 0, 0
  // Predicated region
  $region26: #{closed_call.36} parent=0 // pred_check
    %p115 = pneg %p114
  $region27: #{closed_call.36} parent=0 // pred_check_branch
    %117 = sbr.rel (%p115) target = $region29
  $region28: #{closed_call.36} parent=0 // pred_region
    %118 = vst [vmem:[#allocation2] sm:$0xf] 0.0
    %119 = vst [vmem:[#allocation3] sm:$0x1] 0.0
  $region29: #{closed_call.36} parent=0 // pred_fallthru
    _
  %v120 = vld [vmem:[%s86] sm:$0xf]
  %v121 = vld [vmem:[%s86 + $0x4] sm:$0xf]
  %v122 = vld [vmem:[%s86 + $0x8] sm:$0xf]
  %v123 = vld [vmem:[%s86 + $0xc] sm:$0xf]
  %v124 = vld [vmem:[%s86 + $0x10] sm:$0xf]
  %v125 = vld [vmem:[%s86 + $0x14] sm:$0xf]
  %v126 = vld [vmem:[%s86 + $0x18] sm:$0xf]
  %v127 = vld [vmem:[%s86 + $0x1c] sm:$0xf]
  %v128 = vld [vmem:[%s1] sm:$0xf]
  %v129 = vld [vmem:[%s1 + $0x4] sm:$0xf]
  %v130 = vld [vmem:[%s2] sm:$0x1]
  %v132 = vlaneseq
  %v133 = vshrl.u32 %v132, 7
  %v134 = vsub.s32 0, %v133
  %v135 = vrot.slane %v130, %v134
  %v145 = vunpack.c.l.b16 %v120
  %v146 = vunpack.c.l.b16 %v121
  %v147 = vunpack.c.l.b16 %v122
  %v148 = vunpack.c.l.b16 %v123
  %v149 = vunpack.c.l.b16 %v124
  %v150 = vunpack.c.l.b16 %v125
  %v151 = vunpack.c.l.b16 %v126
  %v152 = vunpack.c.l.b16 %v127
  %v153 = vpack.c.b16 %v146, %v145
  %v154 = vpack.c.b16 %v148, %v147
  %v155 = vpack.c.b16 %v150, %v149
  %v156 = vpack.c.b16 %v152, %v151
  %v159 = vunpack.c.l.b16 %v128
  %v160 = vunpack.c.l.b16 %v129
  %v161 = vpack.c.b16 %v160, %v159
  %vm163 = vcmask 130048
  %v165 = vsel %vm163, %v153, 0
  %v168 = vsel %vm163, %v154, 0
  %v171 = vsel %vm163, %v155, 0
  %v174 = vsel %vm163, %v156, 0
  %176 = vmatprep.subr.bf16.mxu0 0
  %177 = vmatpush1.bf16.msra.mxu0 %v161
  %178 = vmatprep.subr.bf16.mxu0 0
  %179 = vmatpush1.bf16.msra.mxu0 0
  %180 = vmatprep.subr.bf16.mxu0 0
  %181 = vmatpush1.bf16.msra.mxu0 0
  %182 = vmatprep.subr.bf16.mxu0 0
  %183 = vmatpush1.bf16.msra.mxu0 0
  %184 = vmatprep.subr.bf16.mxu0 0
  %185 = vmatpush1.bf16.msra.mxu0 0
  %186 = vmatprep.subr.bf16.mxu0 0
  %187 = vmatpush1.bf16.msra.mxu0 0
  %188 = vmatprep.subr.bf16.mxu0 0
  %189 = vmatpush1.bf16.msra.mxu0 0
  %190 = vmatprep.subr.bf16.mxu0 0
  %191 = vmatpush1.bf16.msra.mxu0 0
  %192 = vmatprep.subr.bf16.mxu0 0
  %193 = vmatpush1.bf16.msra.mxu0 0
  %194 = vmatprep.subr.bf16.mxu0 0
  %195 = vmatpush1.bf16.msra.mxu0 0
  %196 = vmatprep.subr.bf16.mxu0 0
  %197 = vmatpush1.bf16.msra.mxu0 0
  %198 = vmatprep.subr.bf16.mxu0 0
  %199 = vmatpush1.bf16.msra.mxu0 0
  %200 = vmatprep.subr.bf16.mxu0 0
  %201 = vmatpush1.bf16.msra.mxu0 0
  %202 = vmatprep.subr.bf16.mxu0 0
  %203 = vmatpush1.bf16.msra.mxu0 0
  %204 = vmatprep.subr.bf16.mxu0 0
  %205 = vmatpush1.bf16.msra.mxu0 0
  %206 = vmatprep.subr.bf16.mxu0 0
  %207 = vmatpush1.bf16.msra.mxu0 0
  %208 = vmatprep.mubr.bf16.mxu0 0
  %209 = vmatmul.mubr.bf16.gmra.mrb[0].mxu0 %v165
  %v210 = vpop.f32.mrb[0].mxu0
  %v211 = vadd.f32 %v135, %v210
  %v212 = vpop.f32.mrb[0].mxu0
  %v213 = vpop.f32.mrb[0].mxu0
  %v214 = vadd.f32 %v135, %v213
  %v215 = vpop.f32.mrb[0].mxu0
  %216 = vmatprep.mubr.bf16.mxu0 0
  %217 = vmatmul.mubr.bf16.gmra.mrb[0].mxu0 %v168
  %v218 = vpop.f32.mrb[0].mxu0
  %v219 = vadd.f32 %v135, %v218
  %v220 = vpop.f32.mrb[0].mxu0
  %v221 = vpop.f32.mrb[0].mxu0
  %v222 = vadd.f32 %v135, %v221
  %v223 = vpop.f32.mrb[0].mxu0
  %224 = vmatprep.mubr.bf16.mxu0 0
  %225 = vmatmul.mubr.bf16.gmra.mrb[0].mxu0 %v171
  %v226 = vpop.f32.mrb[0].mxu0
  %v227 = vadd.f32 %v135, %v226
  %v228 = vpop.f32.mrb[0].mxu0
  %v229 = vpop.f32.mrb[0].mxu0
  %v230 = vadd.f32 %v135, %v229
  %v231 = vpop.f32.mrb[0].mxu0
  %232 = vmatprep.mubr.bf16.mxu0 0
  %233 = vmatmul.mubr.bf16.gmra.mrb[0].mxu0 %v174
  %v234 = vpop.f32.mrb[0].mxu0
  %v235 = vadd.f32 %v135, %v234
  %v236 = vpop.f32.mrb[0].mxu0
  %v237 = vpop.f32.mrb[0].mxu0
  %v238 = vadd.f32 %v135, %v237
  %v239 = vpop.f32.mrb[0].mxu0
  %240 = vdwg.mxu0
  %v241 = vmul.f32 %v211, 0.5
  %v242 = vmul.f32 %v214, 0.5
  %v243 = vmul.f32 %v219, 0.5
  %v244 = vmul.f32 %v222, 0.5
  %v245 = vmul.f32 %v227, 0.5
  %v246 = vmul.f32 %v230, 0.5
  %v247 = vmul.f32 %v235, 0.5
  %v248 = vmul.f32 %v238, 0.5
  %v249 = vtanh.pop %v241
  %v250 = vtanh.pop %v242
  %v251 = vtanh.pop %v243
  %v252 = vtanh.pop %v244
  %v253 = vtanh.pop %v245
  %v254 = vtanh.pop %v246
  %v255 = vtanh.pop %v247
  %v256 = vtanh.pop %v248
  %v257 = vadd.f32 %v249, 1.0
  %v258 = vadd.f32 %v250, 1.0
  %v259 = vadd.f32 %v251, 1.0
  %v260 = vadd.f32 %v252, 1.0
  %v261 = vadd.f32 %v253, 1.0
  %v262 = vadd.f32 %v254, 1.0
  %v263 = vadd.f32 %v255, 1.0
  %v264 = vadd.f32 %v256, 1.0
  %v265 = vmul.f32 %v257, 0.5
  %v266 = vmul.f32 %v258, 0.5
  %v267 = vmul.f32 %v259, 0.5
  %v268 = vmul.f32 %v260, 0.5
  %v269 = vmul.f32 %v261, 0.5
  %v270 = vmul.f32 %v262, 0.5
  %v271 = vmul.f32 %v263, 0.5
  %v272 = vmul.f32 %v264, 0.5
  %v273 = vld [vmem:[%s110] sm:$0xff]
  %v274 = vld [vmem:[%s110 + $0x8] sm:$0xff]
  %v275 = vld [vmem:[%s110 + $0x10] sm:$0xff]
  %v276 = vld [vmem:[%s110 + $0x18] sm:$0xff]
  %v277 = vld [vmem:[%s110 + $0x20] sm:$0xff]
  %v278 = vld [vmem:[%s110 + $0x28] sm:$0xff]
  %v279 = vld [vmem:[%s110 + $0x30] sm:$0xff]
  %v280 = vld [vmem:[%s110 + $0x38] sm:$0xff]
  %v281 = vld [vmem:[%s94] sm:$0xff]
  %v282 = vld [vmem:[%s94 + $0x8] sm:$0xff]
  %v283 = vld [vmem:[%s94 + $0x10] sm:$0xff]
  %v284 = vld [vmem:[%s94 + $0x18] sm:$0xff]
  %v285 = vld [vmem:[%s94 + $0x20] sm:$0xff]
  %v286 = vld [vmem:[%s94 + $0x28] sm:$0xff]
  %v287 = vld [vmem:[%s94 + $0x30] sm:$0xff]
  %v288 = vld [vmem:[%s94 + $0x38] sm:$0xff]
  %v289 = vld [vmem:[%s102] sm:$0xff]
  %v290 = vld [vmem:[%s102 + $0x8] sm:$0xff]
  %v291 = vld [vmem:[%s102 + $0x10] sm:$0xff]
  %v292 = vld [vmem:[%s102 + $0x18] sm:$0xff]
  %v293 = vld [vmem:[%s102 + $0x20] sm:$0xff]
  %v294 = vld [vmem:[%s102 + $0x28] sm:$0xff]
  %v295 = vld [vmem:[%s102 + $0x30] sm:$0xff]
  %v296 = vld [vmem:[%s102 + $0x38] sm:$0xff]
  %v297 = vsub.f32 %v281, %v289
  %v298 = vsub.f32 %v282, %v290
  %v299 = vsub.f32 %v283, %v291
  %v300 = vsub.f32 %v284, %v292
  %v301 = vsub.f32 %v285, %v293
  %v302 = vsub.f32 %v286, %v294
  %v303 = vsub.f32 %v287, %v295
  %v304 = vsub.f32 %v288, %v296
  %306 = vset.pattern.permute.xlu0 0
  %307 = vperm.xlu0 %306, %v273
  %v308 = vpop.permute.xlu0 %307
  %311 = vset.pattern.permute.xlu0 0
  %312 = vperm.xlu0 %311, %v274
  %v313 = vpop.permute.xlu0 %312
  %316 = vset.pattern.permute.xlu0 0
  %317 = vperm.xlu0 %316, %v275
  %v318 = vpop.permute.xlu0 %317
  %321 = vset.pattern.permute.xlu0 0
  %322 = vperm.xlu0 %321, %v276
  %v323 = vpop.permute.xlu0 %322
  %326 = vset.pattern.permute.xlu0 0
  %327 = vperm.xlu0 %326, %v277
  %v328 = vpop.permute.xlu0 %327
  %331 = vset.pattern.permute.xlu0 0
  %332 = vperm.xlu0 %331, %v278
  %v333 = vpop.permute.xlu0 %332
  %336 = vset.pattern.permute.xlu0 0
  %337 = vperm.xlu0 %336, %v279
  %v338 = vpop.permute.xlu0 %337
  %341 = vset.pattern.permute.xlu0 0
  %342 = vperm.xlu0 %341, %v280
  %v343 = vpop.permute.xlu0 %342
  %v345 = vmul.f32 %v308, %v297
  %v346 = vmul.f32 %v313, %v298
  %v347 = vmul.f32 %v318, %v299
  %v348 = vmul.f32 %v323, %v300
  %v349 = vmul.f32 %v328, %v301
  %v350 = vmul.f32 %v333, %v302
  %v351 = vmul.f32 %v338, %v303
  %v352 = vmul.f32 %v343, %v304
  %v353 = vld [vmem:[#allocation2] sm:$0xf]
  %354 = vxpose.xlu0.b32.start [1/16] %v345, 128
  %355 = vxpose.xlu0.b32.cont [2/16] %v346, 128
  %356 = vxpose.xlu0.b32.cont [3/16] %v347, 128
  %357 = vxpose.xlu0.b32.cont [4/16] %v348, 128
  %358 = vxpose.xlu0.b32.cont [5/16] %v349, 128
  %359 = vxpose.xlu0.b32.cont [6/16] %v350, 128
  %360 = vxpose.xlu0.b32.cont [7/16] %v351, 128
  %361 = vxpose.xlu0.b32.cont [8/16] %v352, 128
  %362 = vxpose.xlu0.b32.cont [9/16] 0.0, 128
  %363 = vxpose.xlu0.b32.cont [10/16] 0.0, 128
  %364 = vxpose.xlu0.b32.cont [11/16] 0.0, 128
  %365 = vxpose.xlu0.b32.cont [12/16] 0.0, 128
  %366 = vxpose.xlu0.b32.cont [13/16] 0.0, 128
  %367 = vxpose.xlu0.b32.cont [14/16] 0.0, 128
  %368 = vxpose.xlu0.b32.cont [15/16] 0.0, 128
  %369 = vxpose.xlu0.b32.end [16/16] 0.0, 128
  %v370 = vpop.trf.xlu0
  %v371 = vpop.trf.xlu0
  %v372 = vpop.trf.xlu0
  %v373 = vpop.trf.xlu0
  %v374 = vpop.trf.xlu0
  %v375 = vpop.trf.xlu0
  %v376 = vpop.trf.xlu0
  %v377 = vpop.trf.xlu0
  %v378 = vpop.trf.xlu0
  %v379 = vpop.trf.xlu0
  %v380 = vpop.trf.xlu0
  %v381 = vpop.trf.xlu0
  %v382 = vpop.trf.xlu0
  %v383 = vpop.trf.xlu0
  %v384 = vpop.trf.xlu0
  %v385 = vpop.trf.xlu0
  %vm386 = vcmask 523264
  %v388 = vsel %vm386, %v370, 0
  %390 = vmatprep.subr.mxu0 0.0
  %391 = vmatpush1.msra.mxu0 %v265
  %392 = vmatprep.subr.mxu0 0.0
  %393 = vmatpush1.msra.mxu0 %v266
  %394 = vmatprep.subr.mxu0 0.0
  %395 = vmatpush1.msra.mxu0 %v267
  %396 = vmatprep.subr.mxu0 0.0
  %397 = vmatpush1.msra.mxu0 %v268
  %398 = vmatprep.subr.mxu0 0.0
  %399 = vmatpush1.msra.mxu0 %v269
  %400 = vmatprep.subr.mxu0 0.0
  %401 = vmatpush1.msra.mxu0 %v270
  %402 = vmatprep.subr.mxu0 0.0
  %403 = vmatpush1.msra.mxu0 %v271
  %404 = vmatprep.subr.mxu0 0.0
  %405 = vmatpush1.msra.mxu0 %v272
  %406 = vmatprep.subr.mxu0 0.0
  %407 = vmatpush1.msra.mxu0 0.0
  %408 = vmatprep.subr.mxu0 0.0
  %409 = vmatpush1.msra.mxu0 0.0
  %410 = vmatprep.subr.mxu0 0.0
  %411 = vmatpush1.msra.mxu0 0.0
  %412 = vmatprep.subr.mxu0 0.0
  %413 = vmatpush1.msra.mxu0 0.0
  %414 = vmatprep.subr.mxu0 0.0
  %415 = vmatpush1.msra.mxu0 0.0
  %416 = vmatprep.subr.mxu0 0.0
  %417 = vmatpush1.msra.mxu0 0.0
  %418 = vmatprep.subr.mxu0 0.0
  %419 = vmatpush1.msra.mxu0 0.0
  %420 = vmatprep.subr.mxu0 0.0
  %421 = vmatpush1.msra.mxu0 0.0
  %422 = vmatprep.subr.mxu0 0.0
  %423 = vmatpush1.msra.mxu0 0.0
  %424 = vmatprep.subr.mxu0 0.0
  %425 = vmatpush1.msra.mxu0 0.0
  %426 = vmatprep.subr.mxu0 0.0
  %427 = vmatpush1.msra.mxu0 0.0
  %428 = vmatprep.subr.mxu0 0.0
  %429 = vmatpush1.msra.mxu0 0.0
  %430 = vmatprep.subr.mxu0 0.0
  %431 = vmatpush1.msra.mxu0 0.0
  %432 = vmatprep.subr.mxu0 0.0
  %433 = vmatpush1.msra.mxu0 0.0
  %434 = vmatprep.subr.mxu0 0.0
  %435 = vmatpush1.msra.mxu0 0.0
  %436 = vmatprep.subr.mxu0 0.0
  %437 = vmatpush1.msra.mxu0 0.0
  %438 = vmatprep.subr.mxu0 0.0
  %439 = vmatpush1.msra.mxu0 0.0
  %440 = vmatprep.subr.mxu0 0.0
  %441 = vmatpush1.msra.mxu0 0.0
  %442 = vmatprep.subr.mxu0 0.0
  %443 = vmatpush1.msra.mxu0 0.0
  %444 = vmatprep.subr.mxu0 0.0
  %445 = vmatpush1.msra.mxu0 0.0
  %446 = vmatprep.subr.mxu0 0.0
  %447 = vmatpush1.msra.mxu0 0.0
  %448 = vmatprep.subr.mxu0 0.0
  %449 = vmatpush1.msra.mxu0 0.0
  %450 = vmatprep.subr.mxu0 0.0
  %451 = vmatpush1.msra.mxu0 0.0
  %452 = vmatprep.subr.mxu0 0.0
  %453 = vmatpush1.msra.mxu0 0.0
  %454 = vmatprep.mubr.f32.mxu0 0.0
  %455 = vmatmul.mubr.f32.gmra.mrb[0].mxu0 %v388
  %v456 = vpop.f32.mrb[0].mxu0
  %v457 = vadd.f32 0.0, %v456
  %v458 = vpop.f32.mrb[0].mxu0
  %459 = vdwg.mxu0
  %v460 = vadd.f32 %v353, %v457
  %461 = vst [vmem:[#allocation2] sm:$0xf] %v460
  %v462 = vld [vmem:[#allocation3] sm:$0x1]
  %v463 = vmul.f32 %v308, %v265
  %v464 = vmul.f32 %v313, %v266
  %v465 = vmul.f32 %v318, %v267
  %v466 = vmul.f32 %v323, %v268
  %v467 = vmul.f32 %v328, %v269
  %v468 = vmul.f32 %v333, %v270
  %v469 = vmul.f32 %v338, %v271
  %v470 = vmul.f32 %v343, %v272
  %v471 = vmul.f32 %v463, %v265
  %v472 = vmul.f32 %v464, %v266
  %v473 = vmul.f32 %v465, %v267
  %v474 = vmul.f32 %v466, %v268
  %v475 = vmul.f32 %v467, %v269
  %v476 = vmul.f32 %v468, %v270
  %v477 = vmul.f32 %v469, %v271
  %v478 = vmul.f32 %v470, %v272
  %v479 = vadd.f32 %v471, %v472
  %v480 = vadd.f32 %v479, %v473
  %v481 = vadd.f32 %v480, %v474
  %v482 = vadd.f32 %v481, %v475
  %v483 = vadd.f32 %v482, %v476
  %v484 = vadd.f32 %v483, %v477
  %v485 = vadd.f32 %v484, %v478
  %v486 = vrot.slane %v485, 4
  %v487 = vadd.f32 %v485, %v486
  %v488 = vrot.slane %v487, 2
  %v489 = vadd.f32 %v487, %v488
  %v490 = vrot.slane %v489, 1
  %v491 = vadd.f32 %v489, %v490
  %v492 = vadd.f32 %v462, %v491
  %493 = vst [vmem:[#allocation3] sm:$0x1] %v492
  // Predicated region
  $region30: #{closed_call.36} parent=0 // pred_check
    %p494 = pneg %p114
  $region31: #{closed_call.36} parent=0 // pred_check_branch
    %496 = sbr.rel (%p494) target = $region33
  $region32: #{closed_call.36} parent=0 // pred_region
    %v497 = vld [vmem:[#allocation2] sm:$0xf]
    %498 = vst [vmem:[%s6] sm:$0xf] %v497
    %v499 = vld [vmem:[#allocation3] sm:$0x1]
    %500 = vst [vmem:[%s7] sm:$0x1] %v499
  $region33: #{closed_call.36} parent=0 // pred_fallthru
    _
  // Predicated region
  $region34: #{closed_call.36} parent=0 // pred_check
    _
  $region35: #{closed_call.36} parent=0 // pred_check_branch
    %502 = sbr.rel (0) target = $region37
  $region36: #{closed_call.36} parent=0 // pred_region
    _
  $region37: #{closed_call.36} parent=0 // pred_fallthru
    _
  // Predicated region
  $region38: #{closed_call.36} parent=0 // pred_check
    _
  $region39: #{closed_call.36} parent=0 // pred_check_branch
    %504 = sbr.rel (0) target = $region41
  $region40: #{closed_call.36} parent=0 // pred_region
    _
  $region41: #{closed_call.36} parent=0 // pred_fallthru
    _
  // Predicated region
  $region42: #{closed_call.36} parent=0 // pred_check
    _
  $region43: #{closed_call.36} parent=0 // pred_check_branch
    %506 = sbr.rel (0) target = $region45
  $region44: #{closed_call.36} parent=0 // pred_region
    _
  $region45: #{closed_call.36} parent=0 // pred_fallthru
    _
  // Predicated region
  $region46: #{closed_call.36} parent=0 // pred_check
    _
  $region47: #{closed_call.36} parent=0 // pred_check_branch
    %508 = sbr.rel (0) target = $region49
  $region48: #{closed_call.36} parent=0 // pred_region
    _
  $region49: #{closed_call.36} parent=0 // pred_fallthru
    _

// kernel: custom-call.23
$region0: #{custom-call.23}
  %s0 = inlined_call_operand.vmem [shape: f32[1,3,3], index: 0, kind: input, shape index: {}]
  %s1 = inlined_call_operand.vmem [shape: f32[1,3,3], index: 1, kind: output, shape index: {}]
  $region1: #{custom-call.23} parent=0
    #allocation0 [shape = 'u8[4096]{0}', space=vmem, size = 0x1000, scoped, tag = 'operand span for operand 0']
    #allocation1 [shape = 'u8[2048]{0}', space=vmem, size = 0x800, scoped, tag = 'packed  for operand 0']
    #allocation2 [shape = 'u8[4096]{0}', space=vmem, size = 0x1000, scoped, tag = 'operand span for operand 1']
    #allocation3 [shape = 'u8[2048]{0}', space=vmem, size = 0x800, scoped, tag = 'packed  for operand 1']
    #allocation4 [shape = 'f32[3,3]{1,0}', space=vmem, size = 0x1000, scoped, tag = 'rescaled input a']
    // Predicated region
    $region2: #{custom-call.23} parent=1 // pred_check
      _
    $region3: #{custom-call.23} parent=1 // pred_check_branch
      %3 = sbr.rel (0) target = $region5
    $region4: #{custom-call.23} parent=1 // pred_region
      // Predicated region
      $region6: #{custom-call.23} parent=4 // pred_check
        _
      $region7: #{custom-call.23} parent=4 // pred_check_branch
        %5 = sbr.rel target = $region9
      $region8: #{custom-call.23} parent=4 // pred_region
        // Predicated region
        $region21: #{custom-call.23} parent=8 // pred_check
          _
        $region22: #{custom-call.23} parent=8 // pred_check_branch
          %20 = sbr.rel (0) target = $region24
        $region23: #{custom-call.23} parent=8 // pred_region
          loop: start=0, step=1, limit=1
          $region25: #{custom-call.23} parent=23 // loop_pre_header
            _
          $region26: #{custom-call.23} parent=23 // loop_header
            %s23 = sphi 0, %s27
            %p24 = scmp.ge.s32.totalorder %s23, 1
            %s28 = sphi %s0, %s0
            %s29 = sphi [#allocation1], [#allocation1]
          $region27: #{custom-call.23} parent=23 // loop_header_branch
            %26 = sbr.rel (%p24) target = $region31
          $region28: #{custom-call.23} parent=23 // loop_body
            %v30 = vld [vmem:[%s28] sm:$0xf]
            %31 = vst [vmem:[%s29] sm:$0xf] %v30
          $region29: #{custom-call.23} parent=23 // loop_footer
            %s27 = sadd.s32 1, %s23
          $region30: #{custom-call.23} parent=23 // loop_footer_branch
            %22 = sbr.rel target = $region26
          $region31: #{custom-call.23} parent=23 // loop_exit
            _
        $region24: #{custom-call.23} parent=8 // pred_fallthru
          _
      $region9: #{custom-call.23} parent=4 // pred_fallthru
        _
      // Predicated region
      $region10: #{custom-call.23} parent=4 // pred_check
        _
      $region11: #{custom-call.23} parent=4 // pred_check_branch
        %7 = sbr.rel (0) target = $region13
      $region12: #{custom-call.23} parent=4 // pred_region
        loop: start=0, step=1, limit=1
        $region14: #{custom-call.23} parent=12 // loop_pre_header
          _
        $region15: #{custom-call.23} parent=12 // loop_header
          %s10 = sphi 0, %s14
          %p11 = scmp.ge.s32.totalorder %s10, 1
          %s15 = sphi %s0, %s0
          %s16 = sphi [#allocation1], [#allocation1]
        $region16: #{custom-call.23} parent=12 // loop_header_branch
          %13 = sbr.rel (%p11) target = $region20
        $region17: #{custom-call.23} parent=12 // loop_body
          %v17 = vld [vmem:[%s15] sm:$0xf]
          %18 = vst [vmem:[%s16] sm:$0xf] %v17
        $region18: #{custom-call.23} parent=12 // loop_footer
          %s14 = sadd.s32 1, %s10
        $region19: #{custom-call.23} parent=12 // loop_footer_branch
          %9 = sbr.rel target = $region15
        $region20: #{custom-call.23} parent=12 // loop_exit
          _
      $region13: #{custom-call.23} parent=4 // pred_fallthru
        _
    $region5: #{custom-call.23} parent=1 // pred_fallthru
      _
    %32 = vnop
    %s34 = sshllo.u32 0, 4
    %v35 = vld [vmem:[#allocation1] sm:%s34]
    %36 = vst [vmem:[#allocation0] sm:%s34] %v35
    %v37 = vlaneseq
    %v38 = vand.u32 %v37, 127
    %vm39 = vcmp.lt.s32.totalorder %v38, 3
    %v40 = vlaneseq
    %v41 = vshrl.u32 %v40, 7
    %vm43 = vcmp.eq.s32.totalorder %v41, %v38
    %v44 = vld [vmem:[#allocation0] sm:$0xff]
    %v45 = vsel %vm43, %v44, 0.0
    %46 = vadd.xlane.f32.xlu0 %v45
    %v47 = vpop.xlane.xlu0 %46
    %vm48 = vcmp.le.s32.totalorder %v41, %v38
    %vm49 = vmand %vm48, %vm39
    %v50 = vsel %vm49, %v44, 0.0
    %v51 = vrcp.pop %v47
    %v52 = vmul.f32 %v50, %v51
    %53 = vst [vmem:[#allocation4] sm:$0xff] %v52
    %v54 = vlaneseq
    %v55 = vand.u32 %v54, 127
    %v56 = vlaneseq
    %v57 = vshrl.u32 %v56, 7
    %vm59 = vcmp.eq.s32.totalorder %v55, %v57
    %v60 = vlaneseq
    %v61 = vand.u32 %v60, 127
    %vm62 = vcmp.eq.s32.totalorder %v61, 2
    %v63 = vsel %vm62, 1.0, -1.0
    %v64 = vsel %vm59, %v63, 0.0
    %s65 = scalar_lea.vmem [#allocation4], 1
    %v66 = vld [vmem:[%s65] ss:$0 sm:$0xff]
    %v67 = vxor.u32 %v66, 2147483648
    %v68 = vlaneseq
    %v69 = vand.u32 %v68, 127
    %vm70 = vcmp.eq.s32.totalorder %v69, 1
    %v71 = vmul.f32 %v67, %v64
    %72 = vadd.xlane.f32.xlu0 %v71
    %v73 = vpop.xlane.xlu0 %72
    %v74 = vsel %vm70, %v73, %v64
    %v75 = vld [vmem:[#allocation4] ss:$0 sm:$0xff]
    %v76 = vxor.u32 %v75, 2147483648
    %v77 = vlaneseq
    %v78 = vand.u32 %v77, 127
    %vm79 = vcmp.eq.s32.totalorder %v78, 0
    %v80 = vmul.f32 %v76, %v74
    %81 = vadd.xlane.f32.xlu0 %v80
    %v82 = vpop.xlane.xlu0 %81
    %v83 = vsel %vm79, %v82, %v74
    %v84 = vrcp.pop %v47
    %v85 = vmul.f32 %v83, %v84
    %vm86 = vweird.f32 %v47
    %v87 = vsel %vm86, %v83, %v85
    %88 = vst [vmem:[#allocation2] sm:$0xff] %v87
    %s90 = sshllo.u32 0, 4
    %v92 = vld [vmem:[#allocation2] sm:%s90]
    %s93 = sshllo.u32 0, 4
    %94 = vst [vmem:[#allocation3] sm:%s93] %v92
    // Predicated region
    $region32: #{custom-call.23} parent=1 // pred_check
      _
    $region33: #{custom-call.23} parent=1 // pred_check_branch
      %96 = sbr.rel (0) target = $region35
    $region34: #{custom-call.23} parent=1 // pred_region
      // Predicated region
      $region36: #{custom-call.23} parent=34 // pred_check
        _
      $region37: #{custom-call.23} parent=34 // pred_check_branch
        %98 = sbr.rel target = $region39
      $region38: #{custom-call.23} parent=34 // pred_region
        // Predicated region
        $region51: #{custom-call.23} parent=38 // pred_check
          _
        $region52: #{custom-call.23} parent=38 // pred_check_branch
          %113 = sbr.rel (0) target = $region54
        $region53: #{custom-call.23} parent=38 // pred_region
          loop: start=0, step=1, limit=1
          $region55: #{custom-call.23} parent=53 // loop_pre_header
            _
          $region56: #{custom-call.23} parent=53 // loop_header
            %s116 = sphi 0, %s120
            %p117 = scmp.ge.s32.totalorder %s116, 1
            %s121 = sphi [#allocation3], [#allocation3]
            %s122 = sphi %s1, %s1
          $region57: #{custom-call.23} parent=53 // loop_header_branch
            %119 = sbr.rel (%p117) target = $region61
          $region58: #{custom-call.23} parent=53 // loop_body
            %v123 = vld [vmem:[%s121] sm:$0xf]
            %124 = vst [vmem:[%s122] sm:$0xf] %v123
          $region59: #{custom-call.23} parent=53 // loop_footer
            %s120 = sadd.s32 1, %s116
          $region60: #{custom-call.23} parent=53 // loop_footer_branch
            %115 = sbr.rel target = $region56
          $region61: #{custom-call.23} parent=53 // loop_exit
            _
        $region54: #{custom-call.23} parent=38 // pred_fallthru
          _
      $region39: #{custom-call.23} parent=34 // pred_fallthru
        _
      // Predicated region
      $region40: #{custom-call.23} parent=34 // pred_check
        _
      $region41: #{custom-call.23} parent=34 // pred_check_branch
        %100 = sbr.rel (0) target = $region43
      $region42: #{custom-call.23} parent=34 // pred_region
        loop: start=0, step=1, limit=1
        $region44: #{custom-call.23} parent=42 // loop_pre_header
          _
        $region45: #{custom-call.23} parent=42 // loop_header
          %s103 = sphi 0, %s107
          %p104 = scmp.ge.s32.totalorder %s103, 1
          %s108 = sphi [#allocation3], [#allocation3]
          %s109 = sphi %s1, %s1
        $region46: #{custom-call.23} parent=42 // loop_header_branch
          %106 = sbr.rel (%p104) target = $region50
        $region47: #{custom-call.23} parent=42 // loop_body
          %v110 = vld [vmem:[%s108] sm:$0xf]
          %111 = vst [vmem:[%s109] sm:$0xf] %v110
        $region48: #{custom-call.23} parent=42 // loop_footer
          %s107 = sadd.s32 1, %s103
        $region49: #{custom-call.23} parent=42 // loop_footer_branch
          %102 = sbr.rel target = $region45
        $region50: #{custom-call.23} parent=42 // loop_exit
          _
      $region43: #{custom-call.23} parent=34 // pred_fallthru
        _
    $region35: #{custom-call.23} parent=1 // pred_fallthru
      _
    %125 = vnop

// kernel: branch_0_fun.1
$region0: #{branch_0_fun.1}
  #allocation0 [shape = 'u32[]', space=smem, size = 0x4, offset = 0x4, fixed_abs, tag = 'smem constant byte address 0x4 - core index']
  #allocation1 [shape = 'u32[144,128]{1,0:T(1,128)}', space=vmem, size = 0x12000, scoped, tag = 'internal scratch']
  %s0 = inlined_call_operand.hbm [shape: f32[64,2], index: 0, kind: input, shape index: {}]
  %s1 = inlined_call_operand.vmem [shape: f32[2,4], index: 1, kind: input, shape index: {}]
  %s2 = inlined_call_operand.hbm [shape: f32[64,4], index: 2, kind: output, shape index: {}]
  %s3 = sld [smem:[#allocation0]]
  $region22: #{branch_0_fun.1} parent=0
    _
  %s5 = ssub.s32 1, %s3
  %s6 = scalar_select 0, %s5, %s3
  $region1: #{branch_0_fun.1} parent=0
    #allocation2 [shape = 'u8[32768]{0}', space=vmem, size = 0x8000, scoped, tag = 'input window, operand 0, single buffered']
    #allocation3 [shape = 's32[1]{0}', space=sflag, size = 0x4, scoped, tag = 'scoped memory for branch_0_fun.1']
    #allocation4 [shape = 's32[1]{0}', space=sflag, size = 0x4, scoped, tag = 'scoped memory for branch_0_fun.1']
    #allocation5 [shape = 'u8[32768]{0}', space=vmem, size = 0x8000, scoped, tag = 'output window, operand 0, single buffered']
    %7 = vsyncpa [#allocation3], 0
    %8 = vsyncpa [#allocation4], 0
    // Predicated region
    $region2: #{branch_0_fun.1} parent=1 // pred_check
      _
    $region3: #{branch_0_fun.1} parent=1 // pred_check_branch
      %10 = sbr.rel (0) target = $region5
    $region4: #{branch_0_fun.1} parent=1 // pred_region
      %s12 = ssub.s32 1024, 1024
      %13 = vsyncadd [#allocation3], %s12
      %s14 = sshll.u32 [#allocation2], 4
      %s15 = int_to_ptr.vmem [resolvable:$true] %s14
      %20 = dma.hbm_to_vmem [thread:$0]  %s0, 1024, %s15, [#allocation3], 128, 128, 8
    $region5: #{branch_0_fun.1} parent=1 // pred_fallthru
      _
    // Predicated region
    $region6: #{branch_0_fun.1} parent=1 // pred_check
      _
    $region7: #{branch_0_fun.1} parent=1 // pred_check_branch
      %22 = sbr.rel (0) target = $region9
    $region8: #{branch_0_fun.1} parent=1 // pred_region
      _
    $region9: #{branch_0_fun.1} parent=1 // pred_fallthru
      _
    // Predicated region
    $region10: #{branch_0_fun.1} parent=1 // pred_check
      _
    $region11: #{branch_0_fun.1} parent=1 // pred_check_branch
      %24 = sbr.rel (0) target = $region13
    $region12: #{branch_0_fun.1} parent=1 // pred_region
      %25 = dma.done [#allocation3], 1024
    $region13: #{branch_0_fun.1} parent=1 // pred_fallthru
      _
    %v26 = vld [vmem:[#allocation2] sm:$0xff]
    %v27 = vld [vmem:[#allocation2 + $0x8] sm:$0xff]
    %v28 = vld [vmem:[#allocation2 + $0x10] sm:$0xff]
    %v29 = vld [vmem:[#allocation2 + $0x18] sm:$0xff]
    %v30 = vld [vmem:[#allocation2 + $0x20] sm:$0xff]
    %v31 = vld [vmem:[#allocation2 + $0x28] sm:$0xff]
    %v32 = vld [vmem:[#allocation2 + $0x30] sm:$0xff]
    %v33 = vld [vmem:[#allocation2 + $0x38] sm:$0xff]
    %v34 = vld [vmem:[%s1] sm:$0x3]
    %vm35 = vcmask 15360
    %v37 = vsel %vm35, %v26, 0
    %v40 = vsel %vm35, %v27, 0
    %v43 = vsel %vm35, %v28, 0
    %v46 = vsel %vm35, %v29, 0
    %v49 = vsel %vm35, %v30, 0
    %v52 = vsel %vm35, %v31, 0
    %v55 = vsel %vm35, %v32, 0
    %v58 = vsel %vm35, %v33, 0
    %vm60 = vcmask 1041408
    %v62 = vsel %vm60, %v34, 0
    %64 = vmatprep.subr.mxu0 0.0
    %65 = vmatpush1.msra.mxu0 %v62
    %66 = vmatprep.subr.mxu0 0.0
    %67 = vmatpush1.msra.mxu0 0.0
    %68 = vmatprep.subr.mxu0 0.0
    %69 = vmatpush1.msra.mxu0 0.0
    %70 = vmatprep.subr.mxu0 0.0
    %71 = vmatpush1.msra.mxu0 0.0
    %72 = vmatprep.subr.mxu0 0.0
    %73 = vmatpush1.msra.mxu0 0.0
    %74 = vmatprep.subr.mxu0 0.0
    %75 = vmatpush1.msra.mxu0 0.0
    %76 = vmatprep.subr.mxu0 0.0
    %77 = vmatpush1.msra.mxu0 0.0
    %78 = vmatprep.subr.mxu0 0.0
    %79 = vmatpush1.msra.mxu0 0.0
    %80 = vmatprep.subr.mxu0 0.0
    %81 = vmatpush1.msra.mxu0 0.0
    %82 = vmatprep.subr.mxu0 0.0
    %83 = vmatpush1.msra.mxu0 0.0
    %84 = vmatprep.subr.mxu0 0.0
    %85 = vmatpush1.msra.mxu0 0.0
    %86 = vmatprep.subr.mxu0 0.0
    %87 = vmatpush1.msra.mxu0 0.0
    %88 = vmatprep.subr.mxu0 0.0
    %89 = vmatpush1.msra.mxu0 0.0
    %90 = vmatprep.subr.mxu0 0.0
    %91 = vmatpush1.msra.mxu0 0.0
    %92 = vmatprep.subr.mxu0 0.0
    %93 = vmatpush1.msra.mxu0 0.0
    %94 = vmatprep.subr.mxu0 0.0
    %95 = vmatpush1.msra.mxu0 0.0
    %96 = vmatprep.subr.mxu0 0.0
    %97 = vmatpush1.msra.mxu0 0.0
    %98 = vmatprep.subr.mxu0 0.0
    %99 = vmatpush1.msra.mxu0 0.0
    %100 = vmatprep.subr.mxu0 0.0
    %101 = vmatpush1.msra.mxu0 0.0
    %102 = vmatprep.subr.mxu0 0.0
    %103 = vmatpush1.msra.mxu0 0.0
    %104 = vmatprep.subr.mxu0 0.0
    %105 = vmatpush1.msra.mxu0 0.0
    %106 = vmatprep.subr.mxu0 0.0
    %107 = vmatpush1.msra.mxu0 0.0
    %108 = vmatprep.subr.mxu0 0.0
    %109 = vmatpush1.msra.mxu0 0.0
    %110 = vmatprep.subr.mxu0 0.0
    %111 = vmatpush1.msra.mxu0 0.0
    %112 = vmatprep.subr.mxu0 0.0
    %113 = vmatpush1.msra.mxu0 0.0
    %114 = vmatprep.subr.mxu0 0.0
    %115 = vmatpush1.msra.mxu0 0.0
    %116 = vmatprep.subr.mxu0 0.0
    %117 = vmatpush1.msra.mxu0 0.0
    %118 = vmatprep.subr.mxu0 0.0
    %119 = vmatpush1.msra.mxu0 0.0
    %120 = vmatprep.subr.mxu0 0.0
    %121 = vmatpush1.msra.mxu0 0.0
    %122 = vmatprep.subr.mxu0 0.0
    %123 = vmatpush1.msra.mxu0 0.0
    %124 = vmatprep.subr.mxu0 0.0
    %125 = vmatpush1.msra.mxu0 0.0
    %126 = vmatprep.subr.mxu0 0.0
    %127 = vmatpush1.msra.mxu0 0.0
    %128 = vmatprep.mubr.f32.mxu0 0.0
    %129 = vmatmul.mubr.f32.gmra.mrb[0].mxu0 %v37
    %v130 = vpop.f32.mrb[0].mxu0
    %v131 = vadd.f32 0.0, %v130
    %v132 = vpop.f32.mrb[0].mxu0
    %133 = vmatprep.mubr.f32.mxu0 0.0
    %134 = vmatmul.mubr.f32.gmra.mrb[0].mxu0 %v40
    %v135 = vpop.f32.mrb[0].mxu0
    %v136 = vadd.f32 0.0, %v135
    %v137 = vpop.f32.mrb[0].mxu0
    %138 = vmatprep.mubr.f32.mxu0 0.0
    %139 = vmatmul.mubr.f32.gmra.mrb[0].mxu0 %v43
    %v140 = vpop.f32.mrb[0].mxu0
    %v141 = vadd.f32 0.0, %v140
    %v142 = vpop.f32.mrb[0].mxu0
    %143 = vmatprep.mubr.f32.mxu0 0.0
    %144 = vmatmul.mubr.f32.gmra.mrb[0].mxu0 %v46
    %v145 = vpop.f32.mrb[0].mxu0
    %v146 = vadd.f32 0.0, %v145
    %v147 = vpop.f32.mrb[0].mxu0
    %148 = vmatprep.mubr.f32.mxu0 0.0
    %149 = vmatmul.mubr.f32.gmra.mrb[0].mxu0 %v49
    %v150 = vpop.f32.mrb[0].mxu0
    %v151 = vadd.f32 0.0, %v150
    %v152 = vpop.f32.mrb[0].mxu0
    %153 = vmatprep.mubr.f32.mxu0 0.0
    %154 = vmatmul.mubr.f32.gmra.mrb[0].mxu0 %v52
    %v155 = vpop.f32.mrb[0].mxu0
    %v156 = vadd.f32 0.0, %v155
    %v157 = vpop.f32.mrb[0].mxu0
    %158 = vmatprep.mubr.f32.mxu0 0.0
    %159 = vmatmul.mubr.f32.gmra.mrb[0].mxu0 %v55
    %v160 = vpop.f32.mrb[0].mxu0
    %v161 = vadd.f32 0.0, %v160
    %v162 = vpop.f32.mrb[0].mxu0
    %163 = vmatprep.mubr.f32.mxu0 0.0
    %164 = vmatmul.mubr.f32.gmra.mrb[0].mxu0 %v58
    %v165 = vpop.f32.mrb[0].mxu0
    %v166 = vadd.f32 0.0, %v165
    %v167 = vpop.f32.mrb[0].mxu0
    %168 = vdwg.mxu0
    %vm169 = vcmask 31744
    %170 = vst.msk [vmem:[#allocation5] sm:$0xff] %vm169, %v131
    %171 = vst.msk [vmem:[#allocation5 + $0x8] sm:$0xff] %vm169, %v136
    %172 = vst.msk [vmem:[#allocation5 + $0x10] sm:$0xff] %vm169, %v141
    %173 = vst.msk [vmem:[#allocation5 + $0x18] sm:$0xff] %vm169, %v146
    %174 = vst.msk [vmem:[#allocation5 + $0x20] sm:$0xff] %vm169, %v151
    %175 = vst.msk [vmem:[#allocation5 + $0x28] sm:$0xff] %vm169, %v156
    %176 = vst.msk [vmem:[#allocation5 + $0x30] sm:$0xff] %vm169, %v161
    %177 = vst.msk [vmem:[#allocation5 + $0x38] sm:$0xff] %vm169, %v166
    // Predicated region
    $region14: #{branch_0_fun.1} parent=1 // pred_check
      _
    $region15: #{branch_0_fun.1} parent=1 // pred_check_branch
      %179 = sbr.rel (0) target = $region17
    $region16: #{branch_0_fun.1} parent=1 // pred_region
      %s181 = ssub.s32 1024, 1024
      %182 = vsyncadd [#allocation4], %s181
      %s183 = sshll.u32 [#allocation5], 4
      %s184 = int_to_ptr.vmem [resolvable:$true] %s183
      %189 = dma.vmem_to_hbm [thread:$0]  %s184, 1024, %s2, [#allocation4], 128, 128, 8
    $region17: #{branch_0_fun.1} parent=1 // pred_fallthru
      _
    // Predicated region
    $region18: #{branch_0_fun.1} parent=1 // pred_check
      _
    $region19: #{branch_0_fun.1} parent=1 // pred_check_branch
      %191 = sbr.rel (0) target = $region21
    $region20: #{branch_0_fun.1} parent=1 // pred_region
      %192 = dma.done [#allocation4], 1024
    $region21: #{branch_0_fun.1} parent=1 // pred_fallthru
      _
    %193 = vsyncpa [#allocation3], 1
    %194 = vsyncpa [#allocation4], 1

// kernel: branch_1_fun.1
$region0: #{branch_1_fun.1}
  #allocation0 [shape = 'u32[]', space=smem, size = 0x4, offset = 0x4, fixed_abs, tag = 'smem constant byte address 0x4 - core index']
  #allocation1 [shape = 'u32[144,128]{1,0:T(1,128)}', space=vmem, size = 0x12000, scoped, tag = 'internal scratch']
  %s0 = inlined_call_operand.hbm [shape: f32[64,3], index: 0, kind: input, shape index: {}]
  %s1 = inlined_call_operand.vmem [shape: f32[3,4], index: 1, kind: input, shape index: {}]
  %s2 = inlined_call_operand.hbm [shape: f32[64,4], index: 2, kind: output, shape index: {}]
  %s3 = sld [smem:[#allocation0]]
  $region22: #{branch_1_fun.1} parent=0
    _
  %s5 = ssub.s32 1, %s3
  %s6 = scalar_select 0, %s5, %s3
  $region1: #{branch_1_fun.1} parent=0
    #allocation2 [shape = 'u8[32768]{0}', space=vmem, size = 0x8000, scoped, tag = 'input window, operand 0, single buffered']
    #allocation3 [shape = 's32[1]{0}', space=sflag, size = 0x4, scoped, tag = 'scoped memory for branch_1_fun.1']
    #allocation4 [shape = 's32[1]{0}', space=sflag, size = 0x4, scoped, tag = 'scoped memory for branch_1_fun.1']
    #allocation5 [shape = 'u8[32768]{0}', space=vmem, size = 0x8000, scoped, tag = 'output window, operand 0, single buffered']
    %7 = vsyncpa [#allocation3], 0
    %8 = vsyncpa [#allocation4], 0
    // Predicated region
    $region2: #{branch_1_fun.1} parent=1 // pred_check
      _
    $region3: #{branch_1_fun.1} parent=1 // pred_check_branch
      %10 = sbr.rel (0) target = $region5
    $region4: #{branch_1_fun.1} parent=1 // pred_region
      %s12 = ssub.s32 1024, 1024
      %13 = vsyncadd [#allocation3], %s12
      %s14 = sshll.u32 [#allocation2], 4
      %s15 = int_to_ptr.vmem [resolvable:$true] %s14
      %20 = dma.hbm_to_vmem [thread:$0]  %s0, 1024, %s15, [#allocation3], 128, 128, 8
    $region5: #{branch_1_fun.1} parent=1 // pred_fallthru
      _
    // Predicated region
    $region6: #{branch_1_fun.1} parent=1 // pred_check
      _
    $region7: #{branch_1_fun.1} parent=1 // pred_check_branch
      %22 = sbr.rel (0) target = $region9
    $region8: #{branch_1_fun.1} parent=1 // pred_region
      _
    $region9: #{branch_1_fun.1} parent=1 // pred_fallthru
      _
    // Predicated region
    $region10: #{branch_1_fun.1} parent=1 // pred_check
      _
    $region11: #{branch_1_fun.1} parent=1 // pred_check_branch
      %24 = sbr.rel (0) target = $region13
    $region12: #{branch_1_fun.1} parent=1 // pred_region
      %25 = dma.done [#allocation3], 1024
    $region13: #{branch_1_fun.1} parent=1 // pred_fallthru
      _
    %v26 = vld [vmem:[#allocation2] sm:$0xff]
    %v27 = vld [vmem:[#allocation2 + $0x8] sm:$0xff]
    %v28 = vld [vmem:[#allocation2 + $0x10] sm:$0xff]
    %v29 = vld [vmem:[#allocation2 + $0x18] sm:$0xff]
    %v30 = vld [vmem:[#allocation2 + $0x20] sm:$0xff]
    %v31 = vld [vmem:[#allocation2 + $0x28] sm:$0xff]
    %v32 = vld [vmem:[#allocation2 + $0x30] sm:$0xff]
    %v33 = vld [vmem:[#allocation2 + $0x38] sm:$0xff]
    %v34 = vld [vmem:[%s1] sm:$0x7]
    %vm35 = vcmask 23552
    %v37 = vsel %vm35, %v26, 0
    %v40 = vsel %vm35, %v27, 0
    %v43 = vsel %vm35, %v28, 0
    %v46 = vsel %vm35, %v29, 0
    %v49 = vsel %vm35, %v30, 0
    %v52 = vsel %vm35, %v31, 0
    %v55 = vsel %vm35, %v32, 0
    %v58 = vsel %vm35, %v33, 0
    %vm60 = vcmask 1042432
    %v62 = vsel %vm60, %v34, 0
    %64 = vmatprep.subr.mxu0 0.0
    %65 = vmatpush1.msra.mxu0 %v62
    %66 = vmatprep.subr.mxu0 0.0
    %67 = vmatpush1.msra.mxu0 0.0
    %68 = vmatprep.subr.mxu0 0.0
    %69 = vmatpush1.msra.mxu0 0.0
    %70 = vmatprep.subr.mxu0 0.0
    %71 = vmatpush1.msra.mxu0 0.0
    %72 = vmatprep.subr.mxu0 0.0
    %73 = vmatpush1.msra.mxu0 0.0
    %74 = vmatprep.subr.mxu0 0.0
    %75 = vmatpush1.msra.mxu0 0.0
    %76 = vmatprep.subr.mxu0 0.0
    %77 = vmatpush1.msra.mxu0 0.0
    %78 = vmatprep.subr.mxu0 0.0
    %79 = vmatpush1.msra.mxu0 0.0
    %80 = vmatprep.subr.mxu0 0.0
    %81 = vmatpush1.msra.mxu0 0.0
    %82 = vmatprep.subr.mxu0 0.0
    %83 = vmatpush1.msra.mxu0 0.0
    %84 = vmatprep.subr.mxu0 0.0
    %85 = vmatpush1.msra.mxu0 0.0
    %86 = vmatprep.subr.mxu0 0.0
    %87 = vmatpush1.msra.mxu0 0.0
    %88 = vmatprep.subr.mxu0 0.0
    %89 = vmatpush1.msra.mxu0 0.0
    %90 = vmatprep.subr.mxu0 0.0
    %91 = vmatpush1.msra.mxu0 0.0
    %92 = vmatprep.subr.mxu0 0.0
    %93 = vmatpush1.msra.mxu0 0.0
    %94 = vmatprep.subr.mxu0 0.0
    %95 = vmatpush1.msra.mxu0 0.0
    %96 = vmatprep.subr.mxu0 0.0
    %97 = vmatpush1.msra.mxu0 0.0
    %98 = vmatprep.subr.mxu0 0.0
    %99 = vmatpush1.msra.mxu0 0.0
    %100 = vmatprep.subr.mxu0 0.0
    %101 = vmatpush1.msra.mxu0 0.0
    %102 = vmatprep.subr.mxu0 0.0
    %103 = vmatpush1.msra.mxu0 0.0
    %104 = vmatprep.subr.mxu0 0.0
    %105 = vmatpush1.msra.mxu0 0.0
    %106 = vmatprep.subr.mxu0 0.0
    %107 = vmatpush1.msra.mxu0 0.0
    %108 = vmatprep.subr.mxu0 0.0
    %109 = vmatpush1.msra.mxu0 0.0
    %110 = vmatprep.subr.mxu0 0.0
    %111 = vmatpush1.msra.mxu0 0.0
    %112 = vmatprep.subr.mxu0 0.0
    %113 = vmatpush1.msra.mxu0 0.0
    %114 = vmatprep.subr.mxu0 0.0
    %115 = vmatpush1.msra.mxu0 0.0
    %116 = vmatprep.subr.mxu0 0.0
    %117 = vmatpush1.msra.mxu0 0.0
    %118 = vmatprep.subr.mxu0 0.0
    %119 = vmatpush1.msra.mxu0 0.0
    %120 = vmatprep.subr.mxu0 0.0
    %121 = vmatpush1.msra.mxu0 0.0
    %122 = vmatprep.subr.mxu0 0.0
    %123 = vmatpush1.msra.mxu0 0.0
    %124 = vmatprep.subr.mxu0 0.0
    %125 = vmatpush1.msra.mxu0 0.0
    %126 = vmatprep.subr.mxu0 0.0
    %127 = vmatpush1.msra.mxu0 0.0
    %128 = vmatprep.mubr.f32.mxu0 0.0
    %129 = vmatmul.mubr.f32.gmra.mrb[0].mxu0 %v37
    %v130 = vpop.f32.mrb[0].mxu0
    %v131 = vadd.f32 0.0, %v130
    %v132 = vpop.f32.mrb[0].mxu0
    %133 = vmatprep.mubr.f32.mxu0 0.0
    %134 = vmatmul.mubr.f32.gmra.mrb[0].mxu0 %v40
    %v135 = vpop.f32.mrb[0].mxu0
    %v136 = vadd.f32 0.0, %v135
    %v137 = vpop.f32.mrb[0].mxu0
    %138 = vmatprep.mubr.f32.mxu0 0.0
    %139 = vmatmul.mubr.f32.gmra.mrb[0].mxu0 %v43
    %v140 = vpop.f32.mrb[0].mxu0
    %v141 = vadd.f32 0.0, %v140
    %v142 = vpop.f32.mrb[0].mxu0
    %143 = vmatprep.mubr.f32.mxu0 0.0
    %144 = vmatmul.mubr.f32.gmra.mrb[0].mxu0 %v46
    %v145 = vpop.f32.mrb[0].mxu0
    %v146 = vadd.f32 0.0, %v145
    %v147 = vpop.f32.mrb[0].mxu0
    %148 = vmatprep.mubr.f32.mxu0 0.0
    %149 = vmatmul.mubr.f32.gmra.mrb[0].mxu0 %v49
    %v150 = vpop.f32.mrb[0].mxu0
    %v151 = vadd.f32 0.0, %v150
    %v152 = vpop.f32.mrb[0].mxu0
    %153 = vmatprep.mubr.f32.mxu0 0.0
    %154 = vmatmul.mubr.f32.gmra.mrb[0].mxu0 %v52
    %v155 = vpop.f32.mrb[0].mxu0
    %v156 = vadd.f32 0.0, %v155
    %v157 = vpop.f32.mrb[0].mxu0
    %158 = vmatprep.mubr.f32.mxu0 0.0
    %159 = vmatmul.mubr.f32.gmra.mrb[0].mxu0 %v55
    %v160 = vpop.f32.mrb[0].mxu0
    %v161 = vadd.f32 0.0, %v160
    %v162 = vpop.f32.mrb[0].mxu0
    %163 = vmatprep.mubr.f32.mxu0 0.0
    %164 = vmatmul.mubr.f32.gmra.mrb[0].mxu0 %v58
    %v165 = vpop.f32.mrb[0].mxu0
    %v166 = vadd.f32 0.0, %v165
    %v167 = vpop.f32.mrb[0].mxu0
    %168 = vdwg.mxu0
    %vm169 = vcmask 31744
    %170 = vst.msk [vmem:[#allocation5] sm:$0xff] %vm169, %v131
    %171 = vst.msk [vmem:[#allocation5 + $0x8] sm:$0xff] %vm169, %v136
    %172 = vst.msk [vmem:[#allocation5 + $0x10] sm:$0xff] %vm169, %v141
    %173 = vst.msk [vmem:[#allocation5 + $0x18] sm:$0xff] %vm169, %v146
    %174 = vst.msk [vmem:[#allocation5 + $0x20] sm:$0xff] %vm169, %v151
    %175 = vst.msk [vmem:[#allocation5 + $0x28] sm:$0xff] %vm169, %v156
    %176 = vst.msk [vmem:[#allocation5 + $0x30] sm:$0xff] %vm169, %v161
    %177 = vst.msk [vmem:[#allocation5 + $0x38] sm:$0xff] %vm169, %v166
    // Predicated region
    $region14: #{branch_1_fun.1} parent=1 // pred_check
      _
    $region15: #{branch_1_fun.1} parent=1 // pred_check_branch
      %179 = sbr.rel (0) target = $region17
    $region16: #{branch_1_fun.1} parent=1 // pred_region
      %s181 = ssub.s32 1024, 1024
      %182 = vsyncadd [#allocation4], %s181
      %s183 = sshll.u32 [#allocation5], 4
      %s184 = int_to_ptr.vmem [resolvable:$true] %s183
      %189 = dma.vmem_to_hbm [thread:$0]  %s184, 1024, %s2, [#allocation4], 128, 128, 8
    $region17: #{branch_1_fun.1} parent=1 // pred_fallthru
      _
    // Predicated region
    $region18: #{branch_1_fun.1} parent=1 // pred_check
      _
    $region19: #{branch_1_fun.1} parent=1 // pred_check_branch
      %191 = sbr.rel (0) target = $region21
    $region20: #{branch_1_fun.1} parent=1 // pred_region
      %192 = dma.done [#allocation4], 1024
    $region21: #{branch_1_fun.1} parent=1 // pred_fallthru
      _
    %193 = vsyncpa [#allocation3], 1
    %194 = vsyncpa [#allocation4], 1

// kernel: custom-call.25
$region0: #{custom-call.25}
  %s0 = inlined_call_operand.vmem [shape: f32[1,6,6], index: 0, kind: input, shape index: {}]
  %s1 = inlined_call_operand.vmem [shape: f32[1,6,6], index: 1, kind: output, shape index: {}]
  $region1: #{custom-call.25} parent=0
    #allocation0 [shape = 'u8[4096]{0}', space=vmem, size = 0x1000, scoped, tag = 'operand span for operand 0']
    #allocation1 [shape = 'u8[4096]{0}', space=vmem, size = 0x1000, scoped, tag = 'operand span for operand 1']
    #allocation2 [shape = 'f32[6,6]{1,0}', space=vmem, size = 0x1000, scoped, tag = 'rescaled input a']
    // Predicated region
    $region2: #{custom-call.25} parent=1 // pred_check
      _
    $region3: #{custom-call.25} parent=1 // pred_check_branch
      %3 = sbr.rel (0) target = $region5
    $region4: #{custom-call.25} parent=1 // pred_region
      // Predicated region
      $region6: #{custom-call.25} parent=4 // pred_check
        _
      $region7: #{custom-call.25} parent=4 // pred_check_branch
        %5 = sbr.rel (0) target = $region9
      $region8: #{custom-call.25} parent=4 // pred_region
        // Predicated region
        $region21: #{custom-call.25} parent=8 // pred_check
          _
        $region22: #{custom-call.25} parent=8 // pred_check_branch
          %20 = sbr.rel (0) target = $region24
        $region23: #{custom-call.25} parent=8 // pred_region
          loop: start=0, step=1, limit=1
          $region25: #{custom-call.25} parent=23 // loop_pre_header
            _
          $region26: #{custom-call.25} parent=23 // loop_header
            %s22 = sphi 0, %s26
            %p23 = scmp.ge.s32.totalorder %s22, 1
            %s27 = sphi %s0, %s0
            %s28 = sphi [#allocation0], [#allocation0]
          $region27: #{custom-call.25} parent=23 // loop_header_branch
            %25 = sbr.rel (%p23) target = $region31
          $region28: #{custom-call.25} parent=23 // loop_body
            %v29 = vld [vmem:[%s27] sm:$0xff]
            %30 = vst [vmem:[%s28] sm:$0xff] %v29
          $region29: #{custom-call.25} parent=23 // loop_footer
            %s26 = sadd.s32 1, %s22
          $region30: #{custom-call.25} parent=23 // loop_footer_branch
            %21 = sbr.rel target = $region26
          $region31: #{custom-call.25} parent=23 // loop_exit
            _
        $region24: #{custom-call.25} parent=8 // pred_fallthru
          _
        // Predicated region
        $region32: #{custom-call.25} parent=8 // pred_check
          _
        $region33: #{custom-call.25} parent=8 // pred_check_branch
          %32 = sbr.rel target = $region35
        $region34: #{custom-call.25} parent=8 // pred_region
          _
        $region35: #{custom-call.25} parent=8 // pred_fallthru
          _
      $region9: #{custom-call.25} parent=4 // pred_fallthru
        _
      // Predicated region
      $region10: #{custom-call.25} parent=4 // pred_check
        _
      $region11: #{custom-call.25} parent=4 // pred_check_branch
        %7 = sbr.rel target = $region13
      $region12: #{custom-call.25} parent=4 // pred_region
        loop: start=0, step=1, limit=1
        $region14: #{custom-call.25} parent=12 // loop_pre_header
          _
        $region15: #{custom-call.25} parent=12 // loop_header
          %s10 = sphi 0, %s14
          %p11 = scmp.ge.s32.totalorder %s10, 1
          %s15 = sphi %s0, %s0
          %s16 = sphi [#allocation0], [#allocation0]
        $region16: #{custom-call.25} parent=12 // loop_header_branch
          %13 = sbr.rel (%p11) target = $region20
        $region17: #{custom-call.25} parent=12 // loop_body
          %v17 = vld [vmem:[%s15] sm:$0xff]
          %18 = vst [vmem:[%s16] sm:$0xff] %v17
        $region18: #{custom-call.25} parent=12 // loop_footer
          %s14 = sadd.s32 1, %s10
        $region19: #{custom-call.25} parent=12 // loop_footer_branch
          %9 = sbr.rel target = $region15
        $region20: #{custom-call.25} parent=12 // loop_exit
          _
      $region13: #{custom-call.25} parent=4 // pred_fallthru
        _
    $region5: #{custom-call.25} parent=1 // pred_fallthru
      _
    %33 = vnop
    %v34 = vlaneseq
    %v35 = vand.u32 %v34, 127
    %vm36 = vcmp.lt.s32.totalorder %v35, 6
    %v37 = vlaneseq
    %v38 = vshrl.u32 %v37, 7
    %vm40 = vcmp.eq.s32.totalorder %v38, %v35
    %v41 = vld [vmem:[#allocation0] sm:$0xff]
    %v42 = vsel %vm40, %v41, 0.0
    %43 = vadd.xlane.f32.xlu0 %v42
    %v44 = vpop.xlane.xlu0 %43
    %vm45 = vcmp.le.s32.totalorder %v38, %v35
    %vm46 = vmand %vm45, %vm36
    %v47 = vsel %vm46, %v41, 0.0
    %v48 = vrcp.pop %v44
    %v49 = vmul.f32 %v47, %v48
    %50 = vst [vmem:[#allocation2] sm:$0xff] %v49
    %v51 = vlaneseq
    %v52 = vand.u32 %v51, 127
    %v53 = vlaneseq
    %v54 = vshrl.u32 %v53, 7
    %vm56 = vcmp.eq.s32.totalorder %v52, %v54
    %v57 = vlaneseq
    %v58 = vand.u32 %v57, 127
    %vm59 = vcmp.eq.s32.totalorder %v58, 5
    %v60 = vsel %vm59, 1.0, -1.0
    %v61 = vsel %vm56, %v60, 0.0
    %s62 = scalar_lea.vmem [#allocation2], 4
    %v63 = vld [vmem:[%s62] ss:$0 sm:$0xff]
    %v64 = vxor.u32 %v63, 2147483648
    %v65 = vlaneseq
    %v66 = vand.u32 %v65, 127
    %vm67 = vcmp.eq.s32.totalorder %v66, 4
    %v68 = vmul.f32 %v64, %v61
    %69 = vadd.xlane.f32.xlu0 %v68
    %v70 = vpop.xlane.xlu0 %69
    %v71 = vsel %vm67, %v70, %v61
    %s72 = scalar_lea.vmem [#allocation2], 3
    %v73 = vld [vmem:[%s72] ss:$0 sm:$0xff]
    %v74 = vxor.u32 %v73, 2147483648
    %v75 = vlaneseq
    %v76 = vand.u32 %v75, 127
    %vm77 = vcmp.eq.s32.totalorder %v76, 3
    %v78 = vmul.f32 %v74, %v71
    %79 = vadd.xlane.f32.xlu0 %v78
    %v80 = vpop.xlane.xlu0 %79
    %v81 = vsel %vm77, %v80, %v71
    %s82 = scalar_lea.vmem [#allocation2], 2
    %v83 = vld [vmem:[%s82] ss:$0 sm:$0xff]
    %v84 = vxor.u32 %v83, 2147483648
    %v85 = vlaneseq
    %v86 = vand.u32 %v85, 127
    %vm87 = vcmp.eq.s32.totalorder %v86, 2
    %v88 = vmul.f32 %v84, %v81
    %89 = vadd.xlane.f32.xlu0 %v88
    %v90 = vpop.xlane.xlu0 %89
    %v91 = vsel %vm87, %v90, %v81
    %s92 = scalar_lea.vmem [#allocation2], 1
    %v93 = vld [vmem:[%s92] ss:$0 sm:$0xff]
    %v94 = vxor.u32 %v93, 2147483648
    %v95 = vlaneseq
    %v96 = vand.u32 %v95, 127
    %vm97 = vcmp.eq.s32.totalorder %v96, 1
    %v98 = vmul.f32 %v94, %v91
    %99 = vadd.xlane.f32.xlu0 %v98
    %v100 = vpop.xlane.xlu0 %99
    %v101 = vsel %vm97, %v100, %v91
    %v102 = vld [vmem:[#allocation2] ss:$0 sm:$0xff]
    %v103 = vxor.u32 %v102, 2147483648
    %v104 = vlaneseq
    %v105 = vand.u32 %v104, 127
    %vm106 = vcmp.eq.s32.totalorder %v105, 0
    %v107 = vmul.f32 %v103, %v101
    %108 = vadd.xlane.f32.xlu0 %v107
    %v109 = vpop.xlane.xlu0 %108
    %v110 = vsel %vm106, %v109, %v101
    %v111 = vrcp.pop %v44
    %v112 = vmul.f32 %v110, %v111
    %vm113 = vweird.f32 %v44
    %v114 = vsel %vm113, %v110, %v112
    %115 = vst [vmem:[#allocation1] sm:$0xff] %v114
    // Predicated region
    $region36: #{custom-call.25} parent=1 // pred_check
      _
    $region37: #{custom-call.25} parent=1 // pred_check_branch
      %117 = sbr.rel (0) target = $region39
    $region38: #{custom-call.25} parent=1 // pred_region
      // Predicated region
      $region40: #{custom-call.25} parent=38 // pred_check
        _
      $region41: #{custom-call.25} parent=38 // pred_check_branch
        %119 = sbr.rel (0) target = $region43
      $region42: #{custom-call.25} parent=38 // pred_region
        // Predicated region
        $region55: #{custom-call.25} parent=42 // pred_check
          _
        $region56: #{custom-call.25} parent=42 // pred_check_branch
          %134 = sbr.rel (0) target = $region58
        $region57: #{custom-call.25} parent=42 // pred_region
          loop: start=0, step=1, limit=1
          $region59: #{custom-call.25} parent=57 // loop_pre_header
            _
          $region60: #{custom-call.25} parent=57 // loop_header
            %s136 = sphi 0, %s140
            %p137 = scmp.ge.s32.totalorder %s136, 1
            %s141 = sphi [#allocation1], [#allocation1]
            %s142 = sphi %s1, %s1
          $region61: #{custom-call.25} parent=57 // loop_header_branch
            %139 = sbr.rel (%p137) target = $region65
          $region62: #{custom-call.25} parent=57 // loop_body
            %v143 = vld [vmem:[%s141] sm:$0xff]
            %144 = vst [vmem:[%s142] sm:$0xff] %v143
          $region63: #{custom-call.25} parent=57 // loop_footer
            %s140 = sadd.s32 1, %s136
          $region64: #{custom-call.25} parent=57 // loop_footer_branch
            %135 = sbr.rel target = $region60
          $region65: #{custom-call.25} parent=57 // loop_exit
            _
        $region58: #{custom-call.25} parent=42 // pred_fallthru
          _
        // Predicated region
        $region66: #{custom-call.25} parent=42 // pred_check
          _
        $region67: #{custom-call.25} parent=42 // pred_check_branch
          %146 = sbr.rel target = $region69
        $region68: #{custom-call.25} parent=42 // pred_region
          _
        $region69: #{custom-call.25} parent=42 // pred_fallthru
          _
      $region43: #{custom-call.25} parent=38 // pred_fallthru
        _
      // Predicated region
      $region44: #{custom-call.25} parent=38 // pred_check
        _
      $region45: #{custom-call.25} parent=38 // pred_check_branch
        %121 = sbr.rel target = $region47
      $region46: #{custom-call.25} parent=38 // pred_region
        loop: start=0, step=1, limit=1
        $region48: #{custom-call.25} parent=46 // loop_pre_header
          _
        $region49: #{custom-call.25} parent=46 // loop_header
          %s124 = sphi 0, %s128
          %p125 = scmp.ge.s32.totalorder %s124, 1
          %s129 = sphi [#allocation1], [#allocation1]
          %s130 = sphi %s1, %s1
        $region50: #{custom-call.25} parent=46 // loop_header_branch
          %127 = sbr.rel (%p125) target = $region54
        $region51: #{custom-call.25} parent=46 // loop_body
          %v131 = vld [vmem:[%s129] sm:$0xff]
          %132 = vst [vmem:[%s130] sm:$0xff] %v131
        $region52: #{custom-call.25} parent=46 // loop_footer
          %s128 = sadd.s32 1, %s124
        $region53: #{custom-call.25} parent=46 // loop_footer_branch
          %123 = sbr.rel target = $region49
        $region54: #{custom-call.25} parent=46 // loop_exit
          _
      $region47: #{custom-call.25} parent=38 // pred_fallthru
        _
    $region39: #{custom-call.25} parent=1 // pred_fallthru
      _
    %147 = vnop

</llo_original>
